<compile_context>
chip_gen: v7x
topology: tpu7x:2x2x1
jax: 0.10.0
libtpu: 0.0.40
codegen_flags: <defaults>
</compile_context>

<pallas_src>
import jax
import jax.numpy as jnp
from jax import lax
from jax.experimental import pallas as pl
from jax.experimental.pallas import tpu as pltpu


# ----------------------------- Pallas kernels ------------------------------ #

def _matmul_bn_stats_kernel(p_ref, w_ref, o_ref, sum_ref, sq_ref):
    """(tm,K)bf16 @ (K,C)bf16 -> f32 tile; per-column sum / sum-of-squares are
    fused into the epilogue and accumulated across the (sequential) row grid."""
    acc = jnp.dot(p_ref[...], w_ref[...], preferred_element_type=jnp.float32)
    o_ref[...] = acc

    @pl.when(pl.program_id(0) == 0)
    def _():
        sum_ref[...] = jnp.zeros_like(sum_ref)
        sq_ref[...] = jnp.zeros_like(sq_ref)

    sum_ref[...] += jnp.sum(acc, axis=0, keepdims=True)
    sq_ref[...] += jnp.sum(acc * acc, axis=0, keepdims=True)


def _matmul_tanh_kernel(p_ref, w_ref, o_ref):
    """Last layer: tanh fused into the matmul epilogue (no extra HBM pass)."""
    o_ref[...] = jnp.tanh(
        jnp.dot(p_ref[...], w_ref[...], preferred_element_type=jnp.float32))


def _scale_shift_relu_kernel(x_ref, scale_ref, shift_ref, o_ref):
    """Lane-dense y = max(x*scale + shift, 0); scale/shift are (1, lanes)."""
    o_ref[...] = jnp.maximum(x_ref[...] * scale_ref[...] + shift_ref[...], 0.0)


# ------------------------------ Pallas wrappers ----------------------------- #

_MM_ROW_TILE = 512     # matmul row tile
_EW_ROW_TILE = 1024    # elementwise row tile (mem-bound, lane-dense layout)


def _round_up(x, m):
    return ((x + m - 1) // m) * m


def _row_tiling(m, cap):
    """Pad rows to a sublane multiple and pick a tile that divides padded M."""
    m8 = _round_up(max(m, 1), 8)
    tm = min(cap, m8)
    pm = _round_up(m8, tm)
    return pm, tm


def _pad_rows(x, pm):
    m = x.shape[0]
    if pm != m:
        x = jnp.pad(x, ((0, pm - m), (0, 0)))
    return x


def pallas_matmul_bn_stats(patches, w_mat):
    m, k = patches.shape
    _, c = w_mat.shape
    pm, tm = _row_tiling(m, _MM_ROW_TILE)
    p_bf = _pad_rows(patches, pm).astype(jnp.bfloat16)   # bf16 MXU operands,
    w_bf = w_mat.astype(jnp.bfloat16)                    # f32 accumulate
    out, s, sq = pl.pallas_call(
        _matmul_bn_stats_kernel,
        out_shape=(jax.ShapeDtypeStruct((pm, c), jnp.float32),
                   jax.ShapeDtypeStruct((1, c), jnp.float32),
                   jax.ShapeDtypeStruct((1, c), jnp.float32)),
        grid=(pm // tm,),
        in_specs=[pl.BlockSpec((tm, k), lambda i: (i, 0)),
                  pl.BlockSpec((k, c), lambda i: (0, 0))],
        out_specs=(pl.BlockSpec((tm, c), lambda i: (i, 0)),
                   pl.BlockSpec((1, c), lambda i: (0, 0)),
                   pl.BlockSpec((1, c), lambda i: (0, 0))),
        compiler_params=pltpu.CompilerParams(
            dimension_semantics=("arbitrary",)),   # sequential: stats accumulator
    )(p_bf, w_bf)
    return out[:m], s, sq


def pallas_matmul_tanh(patches, w_mat):
    m, k = patches.shape
    _, c = w_mat.shape
    pm, tm = _row_tiling(m, _MM_ROW_TILE)
    p_bf = _pad_rows(patches, pm).astype(jnp.bfloat16)
    w_bf = w_mat.astype(jnp.bfloat16)
    out = pl.pallas_call(
        _matmul_tanh_kernel,
        out_shape=jax.ShapeDtypeStruct((pm, c), jnp.float32),
        grid=(pm // tm,),
        in_specs=[pl.BlockSpec((tm, k), lambda i: (i, 0)),
                  pl.BlockSpec((k, c), lambda i: (0, 0))],
        out_specs=pl.BlockSpec((tm, c), lambda i: (i, 0)),
        compiler_params=pltpu.CompilerParams(
            dimension_semantics=("parallel",)),
    )(p_bf, w_bf)
    return out[:m]


def pallas_scale_shift_relu(x2d, scale_row, shift_row):
    m, c = x2d.shape
    pm, tm = _row_tiling(m, _EW_ROW_TILE)
    xp = _pad_rows(x2d, pm)
    out = pl.pallas_call(
        _scale_shift_relu_kernel,
        out_shape=jax.ShapeDtypeStruct((pm, c), jnp.float32),
        grid=(pm // tm,),
        in_specs=[pl.BlockSpec((tm, c), lambda i: (i, 0)),
                  pl.BlockSpec((1, c), lambda i: (0, 0)),
                  pl.BlockSpec((1, c), lambda i: (0, 0))],
        out_specs=pl.BlockSpec((tm, c), lambda i: (i, 0)),
        compiler_params=pltpu.CompilerParams(
            dimension_semantics=("parallel",)),
    )(xp, scale_row, shift_row)
    return out[:m]


# -------------------------- ConvTranspose2d layers -------------------------- #

def conv_transpose_1x1_input(x_nhwc, w_pt):
    """ConvTranspose2d(k=4, stride=1, pad=0, bias=False) on a 1x1 spatial input
    (DCGAN layer 1): exactly x @ W with W reshaped to (Cin, KH*KW*Cout)."""
    n, h, w_, cin = x_nhwc.shape
    assert h == 1 and w_ == 1
    _, cout, kh, kw = w_pt.shape
    patches = x_nhwc.reshape(n, cin)
    w_mat = jnp.transpose(w_pt, (0, 2, 3, 1)).reshape(cin, kh * kw * cout)
    out_flat, s, sq = pallas_matmul_bn_stats(patches, w_mat)
    ch_sum = s.reshape(kh * kw, cout).sum(axis=0)
    ch_sq = sq.reshape(kh * kw, cout).sum(axis=0)
    count = n * kh * kw
    return out_flat.reshape(n, kh, kw, cout), (ch_sum, ch_sq, count)


# output parity -> ((3x3-window offset, kernel tap index), ...) for
# ConvTranspose2d(kernel=4, stride=2, padding=1); derived from
# oy = 2*iy - 1 + ky:  even oy uses ky in {3,1}, odd oy uses ky in {2,0}.
_S2_TAPS = {0: ((0, 3), (1, 1)), 1: ((1, 2), (2, 0))}


def conv_transpose_s2(x_nhwc, w_pt, fuse_tanh=False):
    """ConvTranspose2d(k=4, stride=2, pad=1, bias=False) as a sub-pixel conv:
    a single 3x3 stride-1 conv over the real input producing 4*Cout parity
    channels, then depth-to-space.  No dilation zeros are materialized."""
    n, h, w_, cin = x_nhwc.shape
    _, cout, kh, kw = w_pt.shape

    # im2col over the zero-padded input with a 3x3 window; K = 9*Cin
    xp = jnp.pad(x_nhwc, ((0, 0), (1, 1), (1, 1), (0, 0)))
    cols = [xp[:, dy:dy + h, dx:dx + w_, :] for dy in range(3) for dx in range(3)]
    patches = jnp.stack(cols, axis=3).reshape(n * h * w_, 9 * cin)

    # combined weight: rows ordered (dy, dx, cin), cols ordered (qy, qx, cout);
    # each parity only uses its 2x2 taps, the rest are structural zeros.
    w_blk = jnp.zeros((3, 3, cin, 2, 2, cout), jnp.float32)
    for qy in range(2):
        for (dy, ky) in _S2_TAPS[qy]:
            for qx in range(2):
                for (dx, kx) in _S2_TAPS[qx]:
                    w_blk = w_blk.at[dy, dx, :, qy, qx, :].set(w_pt[:, :, ky, kx])
    w_mat = w_blk.reshape(9 * cin, 4 * cout)

    if fuse_tanh:
        out_flat = pallas_matmul_tanh(patches, w_mat)          # (M, 4*Cout)
        stats = None
    else:
        out_flat, s, sq = pallas_matmul_bn_stats(patches, w_mat)
        ch_sum = s.reshape(4, cout).sum(axis=0)
        ch_sq = sq.reshape(4, cout).sum(axis=0)
        stats = (ch_sum, ch_sq, n * h * w_ * 4)

    # depth-to-space: (N*H*W, 2, 2, Cout) -> (N, 2H, 2W, Cout)
    out = out_flat.reshape(n, h, w_, 2, 2, cout)
    out = jnp.transpose(out, (0, 1, 3, 2, 4, 5)).reshape(n, 2 * h, 2 * w_, cout)
    return out, stats


def batchnorm_relu_lane_dense(x_nhwc, stats, gamma, beta, eps=1e-5):
    """Training-mode BN (biased batch variance) + ReLU using fused stats, run
    lane-dense on a (N*OH, OW*C) view with per-OW-tiled scale/shift."""
    ch_sum, ch_sq, count = stats
    n, oh, ow, c = x_nhwc.shape
    mean = ch_sum / count
    var = ch_sq / count - mean * mean            # biased batch variance
    scale = gamma / jnp.sqrt(var + eps)
    shift = beta - mean * scale
    x2 = x_nhwc.reshape(n * oh, ow * c)
    scale_row = jnp.tile(scale, ow)[None, :]
    shift_row = jnp.tile(shift, ow)[None, :]
    y = pallas_scale_shift_relu(x2, scale_row, shift_row)
    return y.reshape(n, oh, ow, c)


# ------------------------------ Generator model ----------------------------- #

def init_generator_params(key, z_dim, image_size, channel):
    dims = [(z_dim, image_size * 4),
            (image_size * 4, image_size * 2),
            (image_size * 2, image_size),
            (image_size, image_size // 2),
            (image_size // 2, channel)]
    params = []
    for idx, (cin, cout) in enumerate(dims):
        key, k1, k2, k3 = jax.random.split(key, 4)
        w = 0.05 * jax.random.normal(k1, (cin, cout, 4, 4), jnp.float32)
        if idx < 4:   # layers 1-4 have BatchNorm
            gamma = 1.0 + 0.1 * jax.random.normal(k2, (cout,), jnp.float32)
            beta = 0.1 * jax.random.normal(k3, (cout,), jnp.float32)
        else:
            gamma = beta = None
        params.append((w, gamma, beta))
    return params


_STRIDES = (1, 2, 2, 2, 2)
_PADS = (0, 1, 1, 1, 1)


def generator_forward(z_nchw, params):
    # z: (N, z_dim, 1, 1) NCHW (PyTorch); returns (N, channel, 64, 64) NCHW.
    x = jnp.transpose(z_nchw, (0, 2, 3, 1)).astype(jnp.float32)   # -> NHWC
    for i, (w, gamma, beta) in enumerate(params):
        if _STRIDES[i] == 1:
            x, stats = conv_transpose_1x1_input(x, w)
            x = batchnorm_relu_lane_dense(x, stats, gamma, beta)
        elif gamma is not None:
            x, stats = conv_transpose_s2(x, w, fuse_tanh=False)
            x = batchnorm_relu_lane_dense(x, stats, gamma, beta)
        else:
            x, _ = conv_transpose_s2(x, w, fuse_tanh=True)        # tanh fused
    return jnp.transpose(x, (0, 3, 1, 2))                          # -> NCHW


# ------------------------------ pure-JAX reference --------------------------- #

def reference_forward(z_nchw, params):
    x = jnp.transpose(z_nchw, (0, 2, 3, 1)).astype(jnp.float32)
    for i, (w, gamma, beta) in enumerate(params):
        kern = jnp.flip(w, axis=(2, 3)).transpose(2, 3, 0, 1)      # HWIO
        p = 4 - 1 - _PADS[i]
        x = lax.conv_general_dilated(
            x, kern, window_strides=(1, 1), padding=[(p, p), (p, p)],
            lhs_dilation=(_STRIDES[i], _STRIDES[i]),
            dimension_numbers=("NHWC", "HWIO", "NHWC"),
            precision=lax.Precision.HIGHEST)
        if gamma is not None:
            mean = jnp.mean(x, axis=(0, 1, 2))
            var = jnp.mean((x - mean) ** 2, axis=(0, 1, 2))
            x = (x - mean) / jnp.sqrt(var + 1e-5) * gamma + beta
            x = jnp.maximum(x, 0.0)
        else:
            x = jnp.tanh(x)
    return jnp.transpose(x, (0, 3, 1, 2))


# ------------------------------------ main ----------------------------------- #

if __name__ == "__main__":
    B, Z_DIM, IMAGE_SIZE, CHANNEL = 2, 16, 16, 4   # small shapes for the demo
    key = jax.random.PRNGKey(0)
    kz, kp = jax.random.split(key)
    z = jax.random.normal(kz, (B, Z_DIM, 1, 1), jnp.float32)
    params = init_generator_params(kp, Z_DIM, IMAGE_SIZE, CHANNEL)

    fwd = jax.jit(generator_forward)
    out = jax.block_until_ready(fwd(z, params))
    assert out.shape == (B, CHANNEL, 64, 64), out.shape
    assert bool(jnp.all(jnp.isfinite(out)))

    ref = jax.block_until_ready(reference_forward(z, params))
    err = float(jnp.max(jnp.abs(out - ref)))
    assert err < 0.1, err   # loose: bf16 MXU operands with f32 accumulation

    print("KERNEL_OK")
</pallas_src>

<mosaic_0001>
module attributes {stable_mosaic.version = 11 : i64} {
  func.func @_matmul_bn_stats_kernel(%arg0: i32, %arg1: memref<8x16xbf16, #tpu.memory_space<vmem>>, %arg2: memref<16x1024xbf16, #tpu.memory_space<vmem>>, %arg3: memref<8x1024xf32, #tpu.memory_space<vmem>>, %arg4: memref<1x1024xf32, #tpu.memory_space<vmem>>, %arg5: memref<1x1024xf32, #tpu.memory_space<vmem>>) attributes {dimension_semantics = [#tpu.dimension_semantics<arbitrary>], iteration_bounds = array<i64: 1>, scalar_prefetch = 0 : i64, scratch_operands = 0 : i64, tpu.core_type = #tpu.core_type<tc>, window_params = [{transform_indices = @transform_0, window_bounds = array<i64: 8, 16>}, {pipeline_mode = #tpu.pipeline_mode<synchronous>, transform_indices = @transform_1, window_bounds = array<i64: 16, 1024>}, {transform_indices = @transform_2, window_bounds = array<i64: 8, 1024>}, {pipeline_mode = #tpu.pipeline_mode<synchronous>, transform_indices = @transform_3, window_bounds = array<i64: 1, 1024>}, {pipeline_mode = #tpu.pipeline_mode<synchronous>, transform_indices = @transform_4, window_bounds = array<i64: 1, 1024>}]} {
    %c0 = arith.constant 0 : index
    %c0_0 = arith.constant 0 : index
    %0 = vector.load %arg1[%c0, %c0_0] : memref<8x16xbf16, #tpu.memory_space<vmem>>, vector<8x16xbf16>
    %c0_1 = arith.constant 0 : index
    %c0_2 = arith.constant 0 : index
    %1 = vector.load %arg2[%c0_1, %c0_2] : memref<16x1024xbf16, #tpu.memory_space<vmem>>, vector<16x1024xbf16>
    %cst = arith.constant dense<0.000000e+00> : vector<8x1024xf32>
    %2 = tpu.matmul %0, %1, %cst {dimension_numbers = #tpu.dot_dimension_numbers<[1], [0], [0], [1], [0, 0, 1, 1], [], []>} : vector<8x16xbf16>, vector<16x1024xbf16>, vector<8x1024xf32> -> vector<8x1024xf32>
    %c0_3 = arith.constant 0 : index
    %c0_4 = arith.constant 0 : index
    %3 = vector.load %arg3[%c0_3, %c0_4] : memref<8x1024xf32, #tpu.memory_space<vmem>>, vector<8x1024xf32>
    tpu.vector_store %arg3[%c0_3, %c0_4], %2 {strides = array<i32>} : memref<8x1024xf32, #tpu.memory_space<vmem>>, vector<8x1024xf32>,
    %c0_i32 = arith.constant 0 : i32
    %4 = arith.cmpi eq, %arg0, %c0_i32 : i32
    %5 = arith.extui %4 : i1 to i32
    %c0_i32_5 = arith.constant 0 : i32
    %6 = arith.cmpi ne, %5, %c0_i32_5 : i32
    scf.if %6 {
      %cst_16 = arith.constant 0.000000e+00 : f32
      %18 = vector.broadcast %cst_16 : f32 to vector<1x1024xf32>
      %c0_17 = arith.constant 0 : index
      %c0_18 = arith.constant 0 : index
      %19 = vector.load %arg4[%c0_17, %c0_18] : memref<1x1024xf32, #tpu.memory_space<vmem>>, vector<1x1024xf32>
      tpu.vector_store %arg4[%c0_17, %c0_18], %18 {strides = array<i32>} : memref<1x1024xf32, #tpu.memory_space<vmem>>, vector<1x1024xf32>,
      %cst_19 = arith.constant 0.000000e+00 : f32
      %20 = vector.broadcast %cst_19 : f32 to vector<1x1024xf32>
      %c0_20 = arith.constant 0 : index
      %c0_21 = arith.constant 0 : index
      %21 = vector.load %arg5[%c0_20, %c0_21] : memref<1x1024xf32, #tpu.memory_space<vmem>>, vector<1x1024xf32>
      tpu.vector_store %arg5[%c0_20, %c0_21], %20 {strides = array<i32>} : memref<1x1024xf32, #tpu.memory_space<vmem>>, vector<1x1024xf32>,
    } else {
    }
    %c0_6 = arith.constant 0 : index
    %c0_7 = arith.constant 0 : index
    %7 = vector.load %arg4[%c0_6, %c0_7] : memref<1x1024xf32, #tpu.memory_space<vmem>>, vector<1x1024xf32>
    %cst_8 = arith.constant dense<0.000000e+00> : vector<1024xf32>
    %8 = vector.multi_reduction <add>, %2, %cst_8 [0] : vector<8x1024xf32> to vector<1024xf32>
    %9 = vector.shape_cast %8 : vector<1024xf32> to vector<1x1024xf32>
    %10 = arith.addf %7, %9 : vector<1x1024xf32>
    %c0_9 = arith.constant 0 : index
    %c0_10 = arith.constant 0 : index
    %11 = vector.load %arg4[%c0_9, %c0_10] : memref<1x1024xf32, #tpu.memory_space<vmem>>, vector<1x1024xf32>
    tpu.vector_store %arg4[%c0_9, %c0_10], %10 {strides = array<i32>} : memref<1x1024xf32, #tpu.memory_space<vmem>>, vector<1x1024xf32>,
    %c0_11 = arith.constant 0 : index
    %c0_12 = arith.constant 0 : index
    %12 = vector.load %arg5[%c0_11, %c0_12] : memref<1x1024xf32, #tpu.memory_space<vmem>>, vector<1x1024xf32>
    %13 = arith.mulf %2, %2 : vector<8x1024xf32>
    %cst_13 = arith.constant dense<0.000000e+00> : vector<1024xf32>
    %14 = vector.multi_reduction <add>, %13, %cst_13 [0] : vector<8x1024xf32> to vector<1024xf32>
    %15 = vector.shape_cast %14 : vector<1024xf32> to vector<1x1024xf32>
    %16 = arith.addf %12, %15 : vector<1x1024xf32>
    %c0_14 = arith.constant 0 : index
    %c0_15 = arith.constant 0 : index
    %17 = vector.load %arg5[%c0_14, %c0_15] : memref<1x1024xf32, #tpu.memory_space<vmem>>, vector<1x1024xf32>
    tpu.vector_store %arg5[%c0_14, %c0_15], %16 {strides = array<i32>} : memref<1x1024xf32, #tpu.memory_space<vmem>>, vector<1x1024xf32>,
    return
  }
  func.func @transform_0(%arg0: i32) -> (i32, i32) {
    %c0_i32 = arith.constant 0 : i32
    %c0_i32_0 = arith.constant 0 : i32
    return %arg0, %c0_i32 : i32, i32
  }
  func.func @transform_1(%arg0: i32) -> (i32, i32) {
    %c0_i32 = arith.constant 0 : i32
    %c0_i32_0 = arith.constant 0 : i32
    %c0_i32_1 = arith.constant 0 : i32
    return %c0_i32, %c0_i32_0 : i32, i32
  }
  func.func @transform_2(%arg0: i32) -> (i32, i32) {
    %c0_i32 = arith.constant 0 : i32
    %c0_i32_0 = arith.constant 0 : i32
    return %arg0, %c0_i32 : i32, i32
  }
  func.func @transform_3(%arg0: i32) -> (i32, i32) {
    %c0_i32 = arith.constant 0 : i32
    %c0_i32_0 = arith.constant 0 : i32
    %c0_i32_1 = arith.constant 0 : i32
    return %c0_i32, %c0_i32_0 : i32, i32
  }
  func.func @transform_4(%arg0: i32) -> (i32, i32) {
    %c0_i32 = arith.constant 0 : i32
    %c0_i32_0 = arith.constant 0 : i32
    %c0_i32_1 = arith.constant 0 : i32
    return %c0_i32, %c0_i32_0 : i32, i32
  }
}

module attributes {stable_mosaic.version = 11 : i64} {
  func.func @_scale_shift_relu_kernel(%arg0: i32, %arg1: memref<8x256xf32, #tpu.memory_space<vmem>>, %arg2: memref<1x256xf32, #tpu.memory_space<vmem>>, %arg3: memref<1x256xf32, #tpu.memory_space<vmem>>, %arg4: memref<8x256xf32, #tpu.memory_space<vmem>>) attributes {dimension_semantics = [#tpu.dimension_semantics<parallel>], iteration_bounds = array<i64: 1>, scalar_prefetch = 0 : i64, scratch_operands = 0 : i64, tpu.core_type = #tpu.core_type<tc>, window_params = [{transform_indices = @transform_0, window_bounds = array<i64: 8, 256>}, {pipeline_mode = #tpu.pipeline_mode<synchronous>, transform_indices = @transform_1, window_bounds = array<i64: 1, 256>}, {pipeline_mode = #tpu.pipeline_mode<synchronous>, transform_indices = @transform_2, window_bounds = array<i64: 1, 256>}, {transform_indices = @transform_3, window_bounds = array<i64: 8, 256>}]} {
    %c0 = arith.constant 0 : index
    %c0_0 = arith.constant 0 : index
    %0 = vector.load %arg1[%c0, %c0_0] : memref<8x256xf32, #tpu.memory_space<vmem>>, vector<8x256xf32>
    %c0_1 = arith.constant 0 : index
    %c0_2 = arith.constant 0 : index
    %1 = vector.load %arg2[%c0_1, %c0_2] : memref<1x256xf32, #tpu.memory_space<vmem>>, vector<1x256xf32>
    %2 = vector.broadcast %1 : vector<1x256xf32> to vector<8x256xf32>
    %3 = arith.mulf %0, %2 : vector<8x256xf32>
    %c0_3 = arith.constant 0 : index
    %c0_4 = arith.constant 0 : index
    %4 = vector.load %arg3[%c0_3, %c0_4] : memref<1x256xf32, #tpu.memory_space<vmem>>, vector<1x256xf32>
    %5 = vector.broadcast %4 : vector<1x256xf32> to vector<8x256xf32>
    %6 = arith.addf %3, %5 : vector<8x256xf32>
    %cst = arith.constant 0.000000e+00 : f32
    %7 = vector.broadcast %cst : f32 to vector<8x256xf32>
    %8 = arith.maximumf %6, %7 : vector<8x256xf32>
    %c0_5 = arith.constant 0 : index
    %c0_6 = arith.constant 0 : index
    %9 = vector.load %arg4[%c0_5, %c0_6] : memref<8x256xf32, #tpu.memory_space<vmem>>, vector<8x256xf32>
    tpu.vector_store %arg4[%c0_5, %c0_6], %8 {strides = array<i32>} : memref<8x256xf32, #tpu.memory_space<vmem>>, vector<8x256xf32>,
    return
  }
  func.func @transform_0(%arg0: i32) -> (i32, i32) {
    %c0_i32 = arith.constant 0 : i32
    %c0_i32_0 = arith.constant 0 : i32
    return %arg0, %c0_i32 : i32, i32
  }
  func.func @transform_1(%arg0: i32) -> (i32, i32) {
    %c0_i32 = arith.constant 0 : i32
    %c0_i32_0 = arith.constant 0 : i32
    %c0_i32_1 = arith.constant 0 : i32
    return %c0_i32, %c0_i32_0 : i32, i32
  }
  func.func @transform_2(%arg0: i32) -> (i32, i32) {
    %c0_i32 = arith.constant 0 : i32
    %c0_i32_0 = arith.constant 0 : i32
    %c0_i32_1 = arith.constant 0 : i32
    return %c0_i32, %c0_i32_0 : i32, i32
  }
  func.func @transform_3(%arg0: i32) -> (i32, i32) {
    %c0_i32 = arith.constant 0 : i32
    %c0_i32_0 = arith.constant 0 : i32
    return %arg0, %c0_i32 : i32, i32
  }
}

module attributes {stable_mosaic.version = 11 : i64} {
  func.func @_matmul_bn_stats_kernel(%arg0: i32, %arg1: memref<32x576xbf16, #tpu.memory_space<vmem>>, %arg2: memref<576x128xbf16, #tpu.memory_space<vmem>>, %arg3: memref<32x128xf32, #tpu.memory_space<vmem>>, %arg4: memref<1x128xf32, #tpu.memory_space<vmem>>, %arg5: memref<1x128xf32, #tpu.memory_space<vmem>>) attributes {dimension_semantics = [#tpu.dimension_semantics<arbitrary>], iteration_bounds = array<i64: 1>, scalar_prefetch = 0 : i64, scratch_operands = 0 : i64, tpu.core_type = #tpu.core_type<tc>, window_params = [{transform_indices = @transform_0, window_bounds = array<i64: 32, 576>}, {pipeline_mode = #tpu.pipeline_mode<synchronous>, transform_indices = @transform_1, window_bounds = array<i64: 576, 128>}, {transform_indices = @transform_2, window_bounds = array<i64: 32, 128>}, {pipeline_mode = #tpu.pipeline_mode<synchronous>, transform_indices = @transform_3, window_bounds = array<i64: 1, 128>}, {pipeline_mode = #tpu.pipeline_mode<synchronous>, transform_indices = @transform_4, window_bounds = array<i64: 1, 128>}]} {
    %c0 = arith.constant 0 : index
    %c0_0 = arith.constant 0 : index
    %0 = vector.load %arg1[%c0, %c0_0] : memref<32x576xbf16, #tpu.memory_space<vmem>>, vector<32x576xbf16>
    %c0_1 = arith.constant 0 : index
    %c0_2 = arith.constant 0 : index
    %1 = vector.load %arg2[%c0_1, %c0_2] : memref<576x128xbf16, #tpu.memory_space<vmem>>, vector<576x128xbf16>
    %cst = arith.constant dense<0.000000e+00> : vector<32x128xf32>
    %2 = tpu.matmul %0, %1, %cst {dimension_numbers = #tpu.dot_dimension_numbers<[1], [0], [0], [1], [0, 0, 1, 1], [], []>} : vector<32x576xbf16>, vector<576x128xbf16>, vector<32x128xf32> -> vector<32x128xf32>
    %c0_3 = arith.constant 0 : index
    %c0_4 = arith.constant 0 : index
    %3 = vector.load %arg3[%c0_3, %c0_4] : memref<32x128xf32, #tpu.memory_space<vmem>>, vector<32x128xf32>
    tpu.vector_store %arg3[%c0_3, %c0_4], %2 {strides = array<i32>} : memref<32x128xf32, #tpu.memory_space<vmem>>, vector<32x128xf32>,
    %c0_i32 = arith.constant 0 : i32
    %4 = arith.cmpi eq, %arg0, %c0_i32 : i32
    %5 = arith.extui %4 : i1 to i32
    %c0_i32_5 = arith.constant 0 : i32
    %6 = arith.cmpi ne, %5, %c0_i32_5 : i32
    scf.if %6 {
      %cst_16 = arith.constant 0.000000e+00 : f32
      %18 = vector.broadcast %cst_16 : f32 to vector<1x128xf32>
      %c0_17 = arith.constant 0 : index
      %c0_18 = arith.constant 0 : index
      %19 = vector.load %arg4[%c0_17, %c0_18] : memref<1x128xf32, #tpu.memory_space<vmem>>, vector<1x128xf32>
      tpu.vector_store %arg4[%c0_17, %c0_18], %18 {strides = array<i32>} : memref<1x128xf32, #tpu.memory_space<vmem>>, vector<1x128xf32>,
      %cst_19 = arith.constant 0.000000e+00 : f32
      %20 = vector.broadcast %cst_19 : f32 to vector<1x128xf32>
      %c0_20 = arith.constant 0 : index
      %c0_21 = arith.constant 0 : index
      %21 = vector.load %arg5[%c0_20, %c0_21] : memref<1x128xf32, #tpu.memory_space<vmem>>, vector<1x128xf32>
      tpu.vector_store %arg5[%c0_20, %c0_21], %20 {strides = array<i32>} : memref<1x128xf32, #tpu.memory_space<vmem>>, vector<1x128xf32>,
    } else {
    }
    %c0_6 = arith.constant 0 : index
    %c0_7 = arith.constant 0 : index
    %7 = vector.load %arg4[%c0_6, %c0_7] : memref<1x128xf32, #tpu.memory_space<vmem>>, vector<1x128xf32>
    %cst_8 = arith.constant dense<0.000000e+00> : vector<128xf32>
    %8 = vector.multi_reduction <add>, %2, %cst_8 [0] : vector<32x128xf32> to vector<128xf32>
    %9 = vector.shape_cast %8 : vector<128xf32> to vector<1x128xf32>
    %10 = arith.addf %7, %9 : vector<1x128xf32>
    %c0_9 = arith.constant 0 : index
    %c0_10 = arith.constant 0 : index
    %11 = vector.load %arg4[%c0_9, %c0_10] : memref<1x128xf32, #tpu.memory_space<vmem>>, vector<1x128xf32>
    tpu.vector_store %arg4[%c0_9, %c0_10], %10 {strides = array<i32>} : memref<1x128xf32, #tpu.memory_space<vmem>>, vector<1x128xf32>,
    %c0_11 = arith.constant 0 : index
    %c0_12 = arith.constant 0 : index
    %12 = vector.load %arg5[%c0_11, %c0_12] : memref<1x128xf32, #tpu.memory_space<vmem>>, vector<1x128xf32>
    %13 = arith.mulf %2, %2 : vector<32x128xf32>
    %cst_13 = arith.constant dense<0.000000e+00> : vector<128xf32>
    %14 = vector.multi_reduction <add>, %13, %cst_13 [0] : vector<32x128xf32> to vector<128xf32>
    %15 = vector.shape_cast %14 : vector<128xf32> to vector<1x128xf32>
    %16 = arith.addf %12, %15 : vector<1x128xf32>
    %c0_14 = arith.constant 0 : index
    %c0_15 = arith.constant 0 : index
    %17 = vector.load %arg5[%c0_14, %c0_15] : memref<1x128xf32, #tpu.memory_space<vmem>>, vector<1x128xf32>
    tpu.vector_store %arg5[%c0_14, %c0_15], %16 {strides = array<i32>} : memref<1x128xf32, #tpu.memory_space<vmem>>, vector<1x128xf32>,
    return
  }
  func.func @transform_0(%arg0: i32) -> (i32, i32) {
    %c0_i32 = arith.constant 0 : i32
    %c0_i32_0 = arith.constant 0 : i32
    return %arg0, %c0_i32 : i32, i32
  }
  func.func @transform_1(%arg0: i32) -> (i32, i32) {
    %c0_i32 = arith.constant 0 : i32
    %c0_i32_0 = arith.constant 0 : i32
    %c0_i32_1 = arith.constant 0 : i32
    return %c0_i32, %c0_i32_0 : i32, i32
  }
  func.func @transform_2(%arg0: i32) -> (i32, i32) {
    %c0_i32 = arith.constant 0 : i32
    %c0_i32_0 = arith.constant 0 : i32
    return %arg0, %c0_i32 : i32, i32
  }
  func.func @transform_3(%arg0: i32) -> (i32, i32) {
    %c0_i32 = arith.constant 0 : i32
    %c0_i32_0 = arith.constant 0 : i32
    %c0_i32_1 = arith.constant 0 : i32
    return %c0_i32, %c0_i32_0 : i32, i32
  }
  func.func @transform_4(%arg0: i32) -> (i32, i32) {
    %c0_i32 = arith.constant 0 : i32
    %c0_i32_0 = arith.constant 0 : i32
    %c0_i32_1 = arith.constant 0 : i32
    return %c0_i32, %c0_i32_0 : i32, i32
  }
}

module attributes {stable_mosaic.version = 11 : i64} {
  func.func @_scale_shift_relu_kernel(%arg0: i32, %arg1: memref<16x256xf32, #tpu.memory_space<vmem>>, %arg2: memref<1x256xf32, #tpu.memory_space<vmem>>, %arg3: memref<1x256xf32, #tpu.memory_space<vmem>>, %arg4: memref<16x256xf32, #tpu.memory_space<vmem>>) attributes {dimension_semantics = [#tpu.dimension_semantics<parallel>], iteration_bounds = array<i64: 1>, scalar_prefetch = 0 : i64, scratch_operands = 0 : i64, tpu.core_type = #tpu.core_type<tc>, window_params = [{transform_indices = @transform_0, window_bounds = array<i64: 16, 256>}, {pipeline_mode = #tpu.pipeline_mode<synchronous>, transform_indices = @transform_1, window_bounds = array<i64: 1, 256>}, {pipeline_mode = #tpu.pipeline_mode<synchronous>, transform_indices = @transform_2, window_bounds = array<i64: 1, 256>}, {transform_indices = @transform_3, window_bounds = array<i64: 16, 256>}]} {
    %c0 = arith.constant 0 : index
    %c0_0 = arith.constant 0 : index
    %0 = vector.load %arg1[%c0, %c0_0] : memref<16x256xf32, #tpu.memory_space<vmem>>, vector<16x256xf32>
    %c0_1 = arith.constant 0 : index
    %c0_2 = arith.constant 0 : index
    %1 = vector.load %arg2[%c0_1, %c0_2] : memref<1x256xf32, #tpu.memory_space<vmem>>, vector<1x256xf32>
    %2 = vector.broadcast %1 : vector<1x256xf32> to vector<16x256xf32>
    %3 = arith.mulf %0, %2 : vector<16x256xf32>
    %c0_3 = arith.constant 0 : index
    %c0_4 = arith.constant 0 : index
    %4 = vector.load %arg3[%c0_3, %c0_4] : memref<1x256xf32, #tpu.memory_space<vmem>>, vector<1x256xf32>
    %5 = vector.broadcast %4 : vector<1x256xf32> to vector<16x256xf32>
    %6 = arith.addf %3, %5 : vector<16x256xf32>
    %cst = arith.constant 0.000000e+00 : f32
    %7 = vector.broadcast %cst : f32 to vector<16x256xf32>
    %8 = arith.maximumf %6, %7 : vector<16x256xf32>
    %c0_5 = arith.constant 0 : index
    %c0_6 = arith.constant 0 : index
    %9 = vector.load %arg4[%c0_5, %c0_6] : memref<16x256xf32, #tpu.memory_space<vmem>>, vector<16x256xf32>
    tpu.vector_store %arg4[%c0_5, %c0_6], %8 {strides = array<i32>} : memref<16x256xf32, #tpu.memory_space<vmem>>, vector<16x256xf32>,
    return
  }
  func.func @transform_0(%arg0: i32) -> (i32, i32) {
    %c0_i32 = arith.constant 0 : i32
    %c0_i32_0 = arith.constant 0 : i32
    return %arg0, %c0_i32 : i32, i32
  }
  func.func @transform_1(%arg0: i32) -> (i32, i32) {
    %c0_i32 = arith.constant 0 : i32
    %c0_i32_0 = arith.constant 0 : i32
    %c0_i32_1 = arith.constant 0 : i32
    return %c0_i32, %c0_i32_0 : i32, i32
  }
  func.func @transform_2(%arg0: i32) -> (i32, i32) {
    %c0_i32 = arith.constant 0 : i32
    %c0_i32_0 = arith.constant 0 : i32
    %c0_i32_1 = arith.constant 0 : i32
    return %c0_i32, %c0_i32_0 : i32, i32
  }
  func.func @transform_3(%arg0: i32) -> (i32, i32) {
    %c0_i32 = arith.constant 0 : i32
    %c0_i32_0 = arith.constant 0 : i32
    return %arg0, %c0_i32 : i32, i32
  }
}

module attributes {stable_mosaic.version = 11 : i64} {
  func.func @_matmul_bn_stats_kernel(%arg0: i32, %arg1: memref<128x288xbf16, #tpu.memory_space<vmem>>, %arg2: memref<288x64xbf16, #tpu.memory_space<vmem>>, %arg3: memref<128x64xf32, #tpu.memory_space<vmem>>, %arg4: memref<1x64xf32, #tpu.memory_space<vmem>>, %arg5: memref<1x64xf32, #tpu.memory_space<vmem>>) attributes {dimension_semantics = [#tpu.dimension_semantics<arbitrary>], iteration_bounds = array<i64: 1>, scalar_prefetch = 0 : i64, scratch_operands = 0 : i64, tpu.core_type = #tpu.core_type<tc>, window_params = [{transform_indices = @transform_0, window_bounds = array<i64: 128, 288>}, {pipeline_mode = #tpu.pipeline_mode<synchronous>, transform_indices = @transform_1, window_bounds = array<i64: 288, 64>}, {transform_indices = @transform_2, window_bounds = array<i64: 128, 64>}, {pipeline_mode = #tpu.pipeline_mode<synchronous>, transform_indices = @transform_3, window_bounds = array<i64: 1, 64>}, {pipeline_mode = #tpu.pipeline_mode<synchronous>, transform_indices = @transform_4, window_bounds = array<i64: 1, 64>}]} {
    %c0 = arith.constant 0 : index
    %c0_0 = arith.constant 0 : index
    %0 = vector.load %arg1[%c0, %c0_0] : memref<128x288xbf16, #tpu.memory_space<vmem>>, vector<128x288xbf16>
    %c0_1 = arith.constant 0 : index
    %c0_2 = arith.constant 0 : index
    %1 = vector.load %arg2[%c0_1, %c0_2] : memref<288x64xbf16, #tpu.memory_space<vmem>>, vector<288x64xbf16>
    %cst = arith.constant dense<0.000000e+00> : vector<128x64xf32>
    %2 = tpu.matmul %0, %1, %cst {dimension_numbers = #tpu.dot_dimension_numbers<[1], [0], [0], [1], [0, 0, 1, 1], [], []>} : vector<128x288xbf16>, vector<288x64xbf16>, vector<128x64xf32> -> vector<128x64xf32>
    %c0_3 = arith.constant 0 : index
    %c0_4 = arith.constant 0 : index
    %3 = vector.load %arg3[%c0_3, %c0_4] : memref<128x64xf32, #tpu.memory_space<vmem>>, vector<128x64xf32>
    tpu.vector_store %arg3[%c0_3, %c0_4], %2 {strides = array<i32>} : memref<128x64xf32, #tpu.memory_space<vmem>>, vector<128x64xf32>,
    %c0_i32 = arith.constant 0 : i32
    %4 = arith.cmpi eq, %arg0, %c0_i32 : i32
    %5 = arith.extui %4 : i1 to i32
    %c0_i32_5 = arith.constant 0 : i32
    %6 = arith.cmpi ne, %5, %c0_i32_5 : i32
    scf.if %6 {
      %cst_16 = arith.constant 0.000000e+00 : f32
      %18 = vector.broadcast %cst_16 : f32 to vector<1x64xf32>
      %c0_17 = arith.constant 0 : index
      %c0_18 = arith.constant 0 : index
      %19 = vector.load %arg4[%c0_17, %c0_18] : memref<1x64xf32, #tpu.memory_space<vmem>>, vector<1x64xf32>
      tpu.vector_store %arg4[%c0_17, %c0_18], %18 {strides = array<i32>} : memref<1x64xf32, #tpu.memory_space<vmem>>, vector<1x64xf32>,
      %cst_19 = arith.constant 0.000000e+00 : f32
      %20 = vector.broadcast %cst_19 : f32 to vector<1x64xf32>
      %c0_20 = arith.constant 0 : index
      %c0_21 = arith.constant 0 : index
      %21 = vector.load %arg5[%c0_20, %c0_21] : memref<1x64xf32, #tpu.memory_space<vmem>>, vector<1x64xf32>
      tpu.vector_store %arg5[%c0_20, %c0_21], %20 {strides = array<i32>} : memref<1x64xf32, #tpu.memory_space<vmem>>, vector<1x64xf32>,
    } else {
    }
    %c0_6 = arith.constant 0 : index
    %c0_7 = arith.constant 0 : index
    %7 = vector.load %arg4[%c0_6, %c0_7] : memref<1x64xf32, #tpu.memory_space<vmem>>, vector<1x64xf32>
    %cst_8 = arith.constant dense<0.000000e+00> : vector<64xf32>
    %8 = vector.multi_reduction <add>, %2, %cst_8 [0] : vector<128x64xf32> to vector<64xf32>
    %9 = vector.shape_cast %8 : vector<64xf32> to vector<1x64xf32>
    %10 = arith.addf %7, %9 : vector<1x64xf32>
    %c0_9 = arith.constant 0 : index
    %c0_10 = arith.constant 0 : index
    %11 = vector.load %arg4[%c0_9, %c0_10] : memref<1x64xf32, #tpu.memory_space<vmem>>, vector<1x64xf32>
    tpu.vector_store %arg4[%c0_9, %c0_10], %10 {strides = array<i32>} : memref<1x64xf32, #tpu.memory_space<vmem>>, vector<1x64xf32>,
    %c0_11 = arith.constant 0 : index
    %c0_12 = arith.constant 0 : index
    %12 = vector.load %arg5[%c0_11, %c0_12] : memref<1x64xf32, #tpu.memory_space<vmem>>, vector<1x64xf32>
    %13 = arith.mulf %2, %2 : vector<128x64xf32>
    %cst_13 = arith.constant dense<0.000000e+00> : vector<64xf32>
    %14 = vector.multi_reduction <add>, %13, %cst_13 [0] : vector<128x64xf32> to vector<64xf32>
    %15 = vector.shape_cast %14 : vector<64xf32> to vector<1x64xf32>
    %16 = arith.addf %12, %15 : vector<1x64xf32>
    %c0_14 = arith.constant 0 : index
    %c0_15 = arith.constant 0 : index
    %17 = vector.load %arg5[%c0_14, %c0_15] : memref<1x64xf32, #tpu.memory_space<vmem>>, vector<1x64xf32>
    tpu.vector_store %arg5[%c0_14, %c0_15], %16 {strides = array<i32>} : memref<1x64xf32, #tpu.memory_space<vmem>>, vector<1x64xf32>,
    return
  }
  func.func @transform_0(%arg0: i32) -> (i32, i32) {
    %c0_i32 = arith.constant 0 : i32
    %c0_i32_0 = arith.constant 0 : i32
    return %arg0, %c0_i32 : i32, i32
  }
  func.func @transform_1(%arg0: i32) -> (i32, i32) {
    %c0_i32 = arith.constant 0 : i32
    %c0_i32_0 = arith.constant 0 : i32
    %c0_i32_1 = arith.constant 0 : i32
    return %c0_i32, %c0_i32_0 : i32, i32
  }
  func.func @transform_2(%arg0: i32) -> (i32, i32) {
    %c0_i32 = arith.constant 0 : i32
    %c0_i32_0 = arith.constant 0 : i32
    return %arg0, %c0_i32 : i32, i32
  }
  func.func @transform_3(%arg0: i32) -> (i32, i32) {
    %c0_i32 = arith.constant 0 : i32
    %c0_i32_0 = arith.constant 0 : i32
    %c0_i32_1 = arith.constant 0 : i32
    return %c0_i32, %c0_i32_0 : i32, i32
  }
  func.func @transform_4(%arg0: i32) -> (i32, i32) {
    %c0_i32 = arith.constant 0 : i32
    %c0_i32_0 = arith.constant 0 : i32
    %c0_i32_1 = arith.constant 0 : i32
    return %c0_i32, %c0_i32_0 : i32, i32
  }
}

module attributes {stable_mosaic.version = 11 : i64} {
  func.func @_scale_shift_relu_kernel(%arg0: i32, %arg1: memref<32x256xf32, #tpu.memory_space<vmem>>, %arg2: memref<1x256xf32, #tpu.memory_space<vmem>>, %arg3: memref<1x256xf32, #tpu.memory_space<vmem>>, %arg4: memref<32x256xf32, #tpu.memory_space<vmem>>) attributes {dimension_semantics = [#tpu.dimension_semantics<parallel>], iteration_bounds = array<i64: 1>, scalar_prefetch = 0 : i64, scratch_operands = 0 : i64, tpu.core_type = #tpu.core_type<tc>, window_params = [{transform_indices = @transform_0, window_bounds = array<i64: 32, 256>}, {pipeline_mode = #tpu.pipeline_mode<synchronous>, transform_indices = @transform_1, window_bounds = array<i64: 1, 256>}, {pipeline_mode = #tpu.pipeline_mode<synchronous>, transform_indices = @transform_2, window_bounds = array<i64: 1, 256>}, {transform_indices = @transform_3, window_bounds = array<i64: 32, 256>}]} {
    %c0 = arith.constant 0 : index
    %c0_0 = arith.constant 0 : index
    %0 = vector.load %arg1[%c0, %c0_0] : memref<32x256xf32, #tpu.memory_space<vmem>>, vector<32x256xf32>
    %c0_1 = arith.constant 0 : index
    %c0_2 = arith.constant 0 : index
    %1 = vector.load %arg2[%c0_1, %c0_2] : memref<1x256xf32, #tpu.memory_space<vmem>>, vector<1x256xf32>
    %2 = vector.broadcast %1 : vector<1x256xf32> to vector<32x256xf32>
    %3 = arith.mulf %0, %2 : vector<32x256xf32>
    %c0_3 = arith.constant 0 : index
    %c0_4 = arith.constant 0 : index
    %4 = vector.load %arg3[%c0_3, %c0_4] : memref<1x256xf32, #tpu.memory_space<vmem>>, vector<1x256xf32>
    %5 = vector.broadcast %4 : vector<1x256xf32> to vector<32x256xf32>
    %6 = arith.addf %3, %5 : vector<32x256xf32>
    %cst = arith.constant 0.000000e+00 : f32
    %7 = vector.broadcast %cst : f32 to vector<32x256xf32>
    %8 = arith.maximumf %6, %7 : vector<32x256xf32>
    %c0_5 = arith.constant 0 : index
    %c0_6 = arith.constant 0 : index
    %9 = vector.load %arg4[%c0_5, %c0_6] : memref<32x256xf32, #tpu.memory_space<vmem>>, vector<32x256xf32>
    tpu.vector_store %arg4[%c0_5, %c0_6], %8 {strides = array<i32>} : memref<32x256xf32, #tpu.memory_space<vmem>>, vector<32x256xf32>,
    return
  }
  func.func @transform_0(%arg0: i32) -> (i32, i32) {
    %c0_i32 = arith.constant 0 : i32
    %c0_i32_0 = arith.constant 0 : i32
    return %arg0, %c0_i32 : i32, i32
  }
  func.func @transform_1(%arg0: i32) -> (i32, i32) {
    %c0_i32 = arith.constant 0 : i32
    %c0_i32_0 = arith.constant 0 : i32
    %c0_i32_1 = arith.constant 0 : i32
    return %c0_i32, %c0_i32_0 : i32, i32
  }
  func.func @transform_2(%arg0: i32) -> (i32, i32) {
    %c0_i32 = arith.constant 0 : i32
    %c0_i32_0 = arith.constant 0 : i32
    %c0_i32_1 = arith.constant 0 : i32
    return %c0_i32, %c0_i32_0 : i32, i32
  }
  func.func @transform_3(%arg0: i32) -> (i32, i32) {
    %c0_i32 = arith.constant 0 : i32
    %c0_i32_0 = arith.constant 0 : i32
    return %arg0, %c0_i32 : i32, i32
  }
}

module attributes {stable_mosaic.version = 11 : i64} {
  func.func @_matmul_bn_stats_kernel(%arg0: i32, %arg1: memref<512x144xbf16, #tpu.memory_space<vmem>>, %arg2: memref<144x32xbf16, #tpu.memory_space<vmem>>, %arg3: memref<512x32xf32, #tpu.memory_space<vmem>>, %arg4: memref<1x32xf32, #tpu.memory_space<vmem>>, %arg5: memref<1x32xf32, #tpu.memory_space<vmem>>) attributes {dimension_semantics = [#tpu.dimension_semantics<arbitrary>], iteration_bounds = array<i64: 1>, scalar_prefetch = 0 : i64, scratch_operands = 0 : i64, tpu.core_type = #tpu.core_type<tc>, window_params = [{transform_indices = @transform_0, window_bounds = array<i64: 512, 144>}, {pipeline_mode = #tpu.pipeline_mode<synchronous>, transform_indices = @transform_1, window_bounds = array<i64: 144, 32>}, {transform_indices = @transform_2, window_bounds = array<i64: 512, 32>}, {pipeline_mode = #tpu.pipeline_mode<synchronous>, transform_indices = @transform_3, window_bounds = array<i64: 1, 32>}, {pipeline_mode = #tpu.pipeline_mode<synchronous>, transform_indices = @transform_4, window_bounds = array<i64: 1, 32>}]} {
    %c0 = arith.constant 0 : index
    %c0_0 = arith.constant 0 : index
    %0 = vector.load %arg1[%c0, %c0_0] : memref<512x144xbf16, #tpu.memory_space<vmem>>, vector<512x144xbf16>
    %c0_1 = arith.constant 0 : index
    %c0_2 = arith.constant 0 : index
    %1 = vector.load %arg2[%c0_1, %c0_2] : memref<144x32xbf16, #tpu.memory_space<vmem>>, vector<144x32xbf16>
    %cst = arith.constant dense<0.000000e+00> : vector<512x32xf32>
    %2 = tpu.matmul %0, %1, %cst {dimension_numbers = #tpu.dot_dimension_numbers<[1], [0], [0], [1], [0, 0, 1, 1], [], []>} : vector<512x144xbf16>, vector<144x32xbf16>, vector<512x32xf32> -> vector<512x32xf32>
    %c0_3 = arith.constant 0 : index
    %c0_4 = arith.constant 0 : index
    %3 = vector.load %arg3[%c0_3, %c0_4] : memref<512x32xf32, #tpu.memory_space<vmem>>, vector<512x32xf32>
    tpu.vector_store %arg3[%c0_3, %c0_4], %2 {strides = array<i32>} : memref<512x32xf32, #tpu.memory_space<vmem>>, vector<512x32xf32>,
    %c0_i32 = arith.constant 0 : i32
    %4 = arith.cmpi eq, %arg0, %c0_i32 : i32
    %5 = arith.extui %4 : i1 to i32
    %c0_i32_5 = arith.constant 0 : i32
    %6 = arith.cmpi ne, %5, %c0_i32_5 : i32
    scf.if %6 {
      %cst_16 = arith.constant 0.000000e+00 : f32
      %18 = vector.broadcast %cst_16 : f32 to vector<1x32xf32>
      %c0_17 = arith.constant 0 : index
      %c0_18 = arith.constant 0 : index
      %19 = vector.load %arg4[%c0_17, %c0_18] : memref<1x32xf32, #tpu.memory_space<vmem>>, vector<1x32xf32>
      tpu.vector_store %arg4[%c0_17, %c0_18], %18 {strides = array<i32>} : memref<1x32xf32, #tpu.memory_space<vmem>>, vector<1x32xf32>,
      %cst_19 = arith.constant 0.000000e+00 : f32
      %20 = vector.broadcast %cst_19 : f32 to vector<1x32xf32>
      %c0_20 = arith.constant 0 : index
      %c0_21 = arith.constant 0 : index
      %21 = vector.load %arg5[%c0_20, %c0_21] : memref<1x32xf32, #tpu.memory_space<vmem>>, vector<1x32xf32>
      tpu.vector_store %arg5[%c0_20, %c0_21], %20 {strides = array<i32>} : memref<1x32xf32, #tpu.memory_space<vmem>>, vector<1x32xf32>,
    } else {
    }
    %c0_6 = arith.constant 0 : index
    %c0_7 = arith.constant 0 : index
    %7 = vector.load %arg4[%c0_6, %c0_7] : memref<1x32xf32, #tpu.memory_space<vmem>>, vector<1x32xf32>
    %cst_8 = arith.constant dense<0.000000e+00> : vector<32xf32>
    %8 = vector.multi_reduction <add>, %2, %cst_8 [0] : vector<512x32xf32> to vector<32xf32>
    %9 = vector.shape_cast %8 : vector<32xf32> to vector<1x32xf32>
    %10 = arith.addf %7, %9 : vector<1x32xf32>
    %c0_9 = arith.constant 0 : index
    %c0_10 = arith.constant 0 : index
    %11 = vector.load %arg4[%c0_9, %c0_10] : memref<1x32xf32, #tpu.memory_space<vmem>>, vector<1x32xf32>
    tpu.vector_store %arg4[%c0_9, %c0_10], %10 {strides = array<i32>} : memref<1x32xf32, #tpu.memory_space<vmem>>, vector<1x32xf32>,
    %c0_11 = arith.constant 0 : index
    %c0_12 = arith.constant 0 : index
    %12 = vector.load %arg5[%c0_11, %c0_12] : memref<1x32xf32, #tpu.memory_space<vmem>>, vector<1x32xf32>
    %13 = arith.mulf %2, %2 : vector<512x32xf32>
    %cst_13 = arith.constant dense<0.000000e+00> : vector<32xf32>
    %14 = vector.multi_reduction <add>, %13, %cst_13 [0] : vector<512x32xf32> to vector<32xf32>
    %15 = vector.shape_cast %14 : vector<32xf32> to vector<1x32xf32>
    %16 = arith.addf %12, %15 : vector<1x32xf32>
    %c0_14 = arith.constant 0 : index
    %c0_15 = arith.constant 0 : index
    %17 = vector.load %arg5[%c0_14, %c0_15] : memref<1x32xf32, #tpu.memory_space<vmem>>, vector<1x32xf32>
    tpu.vector_store %arg5[%c0_14, %c0_15], %16 {strides = array<i32>} : memref<1x32xf32, #tpu.memory_space<vmem>>, vector<1x32xf32>,
    return
  }
  func.func @transform_0(%arg0: i32) -> (i32, i32) {
    %c0_i32 = arith.constant 0 : i32
    %c0_i32_0 = arith.constant 0 : i32
    return %arg0, %c0_i32 : i32, i32
  }
  func.func @transform_1(%arg0: i32) -> (i32, i32) {
    %c0_i32 = arith.constant 0 : i32
    %c0_i32_0 = arith.constant 0 : i32
    %c0_i32_1 = arith.constant 0 : i32
    return %c0_i32, %c0_i32_0 : i32, i32
  }
  func.func @transform_2(%arg0: i32) -> (i32, i32) {
    %c0_i32 = arith.constant 0 : i32
    %c0_i32_0 = arith.constant 0 : i32
    return %arg0, %c0_i32 : i32, i32
  }
  func.func @transform_3(%arg0: i32) -> (i32, i32) {
    %c0_i32 = arith.constant 0 : i32
    %c0_i32_0 = arith.constant 0 : i32
    %c0_i32_1 = arith.constant 0 : i32
    return %c0_i32, %c0_i32_0 : i32, i32
  }
  func.func @transform_4(%arg0: i32) -> (i32, i32) {
    %c0_i32 = arith.constant 0 : i32
    %c0_i32_0 = arith.constant 0 : i32
    %c0_i32_1 = arith.constant 0 : i32
    return %c0_i32, %c0_i32_0 : i32, i32
  }
}

module attributes {stable_mosaic.version = 11 : i64} {
  func.func @_scale_shift_relu_kernel(%arg0: i32, %arg1: memref<64x256xf32, #tpu.memory_space<vmem>>, %arg2: memref<1x256xf32, #tpu.memory_space<vmem>>, %arg3: memref<1x256xf32, #tpu.memory_space<vmem>>, %arg4: memref<64x256xf32, #tpu.memory_space<vmem>>) attributes {dimension_semantics = [#tpu.dimension_semantics<parallel>], iteration_bounds = array<i64: 1>, scalar_prefetch = 0 : i64, scratch_operands = 0 : i64, tpu.core_type = #tpu.core_type<tc>, window_params = [{transform_indices = @transform_0, window_bounds = array<i64: 64, 256>}, {pipeline_mode = #tpu.pipeline_mode<synchronous>, transform_indices = @transform_1, window_bounds = array<i64: 1, 256>}, {pipeline_mode = #tpu.pipeline_mode<synchronous>, transform_indices = @transform_2, window_bounds = array<i64: 1, 256>}, {transform_indices = @transform_3, window_bounds = array<i64: 64, 256>}]} {
    %c0 = arith.constant 0 : index
    %c0_0 = arith.constant 0 : index
    %0 = vector.load %arg1[%c0, %c0_0] : memref<64x256xf32, #tpu.memory_space<vmem>>, vector<64x256xf32>
    %c0_1 = arith.constant 0 : index
    %c0_2 = arith.constant 0 : index
    %1 = vector.load %arg2[%c0_1, %c0_2] : memref<1x256xf32, #tpu.memory_space<vmem>>, vector<1x256xf32>
    %2 = vector.broadcast %1 : vector<1x256xf32> to vector<64x256xf32>
    %3 = arith.mulf %0, %2 : vector<64x256xf32>
    %c0_3 = arith.constant 0 : index
    %c0_4 = arith.constant 0 : index
    %4 = vector.load %arg3[%c0_3, %c0_4] : memref<1x256xf32, #tpu.memory_space<vmem>>, vector<1x256xf32>
    %5 = vector.broadcast %4 : vector<1x256xf32> to vector<64x256xf32>
    %6 = arith.addf %3, %5 : vector<64x256xf32>
    %cst = arith.constant 0.000000e+00 : f32
    %7 = vector.broadcast %cst : f32 to vector<64x256xf32>
    %8 = arith.maximumf %6, %7 : vector<64x256xf32>
    %c0_5 = arith.constant 0 : index
    %c0_6 = arith.constant 0 : index
    %9 = vector.load %arg4[%c0_5, %c0_6] : memref<64x256xf32, #tpu.memory_space<vmem>>, vector<64x256xf32>
    tpu.vector_store %arg4[%c0_5, %c0_6], %8 {strides = array<i32>} : memref<64x256xf32, #tpu.memory_space<vmem>>, vector<64x256xf32>,
    return
  }
  func.func @transform_0(%arg0: i32) -> (i32, i32) {
    %c0_i32 = arith.constant 0 : i32
    %c0_i32_0 = arith.constant 0 : i32
    return %arg0, %c0_i32 : i32, i32
  }
  func.func @transform_1(%arg0: i32) -> (i32, i32) {
    %c0_i32 = arith.constant 0 : i32
    %c0_i32_0 = arith.constant 0 : i32
    %c0_i32_1 = arith.constant 0 : i32
    return %c0_i32, %c0_i32_0 : i32, i32
  }
  func.func @transform_2(%arg0: i32) -> (i32, i32) {
    %c0_i32 = arith.constant 0 : i32
    %c0_i32_0 = arith.constant 0 : i32
    %c0_i32_1 = arith.constant 0 : i32
    return %c0_i32, %c0_i32_0 : i32, i32
  }
  func.func @transform_3(%arg0: i32) -> (i32, i32) {
    %c0_i32 = arith.constant 0 : i32
    %c0_i32_0 = arith.constant 0 : i32
    return %arg0, %c0_i32 : i32, i32
  }
}

module attributes {stable_mosaic.version = 11 : i64} {
  func.func @_matmul_tanh_kernel(%arg0: i32, %arg1: memref<512x72xbf16, #tpu.memory_space<vmem>>, %arg2: memref<72x16xbf16, #tpu.memory_space<vmem>>, %arg3: memref<512x16xf32, #tpu.memory_space<vmem>>) attributes {dimension_semantics = [#tpu.dimension_semantics<parallel>], iteration_bounds = array<i64: 4>, scalar_prefetch = 0 : i64, scratch_operands = 0 : i64, tpu.core_type = #tpu.core_type<tc>, window_params = [{transform_indices = @transform_0, window_bounds = array<i64: 512, 72>}, {pipeline_mode = #tpu.pipeline_mode<synchronous>, transform_indices = @transform_1, window_bounds = array<i64: 72, 16>}, {transform_indices = @transform_2, window_bounds = array<i64: 512, 16>}]} {
    %c0 = arith.constant 0 : index
    %c0_0 = arith.constant 0 : index
    %0 = vector.load %arg1[%c0, %c0_0] : memref<512x72xbf16, #tpu.memory_space<vmem>>, vector<512x72xbf16>
    %c0_1 = arith.constant 0 : index
    %c0_2 = arith.constant 0 : index
    %1 = vector.load %arg2[%c0_1, %c0_2] : memref<72x16xbf16, #tpu.memory_space<vmem>>, vector<72x16xbf16>
    %cst = arith.constant dense<0.000000e+00> : vector<512x16xf32>
    %2 = tpu.matmul %0, %1, %cst {dimension_numbers = #tpu.dot_dimension_numbers<[1], [0], [0], [1], [0, 0, 1, 1], [], []>} : vector<512x72xbf16>, vector<72x16xbf16>, vector<512x16xf32> -> vector<512x16xf32>
    %3 = math.tanh %2 : vector<512x16xf32>
    %c0_3 = arith.constant 0 : index
    %c0_4 = arith.constant 0 : index
    %4 = vector.load %arg3[%c0_3, %c0_4] : memref<512x16xf32, #tpu.memory_space<vmem>>, vector<512x16xf32>
    tpu.vector_store %arg3[%c0_3, %c0_4], %3 {strides = array<i32>} : memref<512x16xf32, #tpu.memory_space<vmem>>, vector<512x16xf32>,
    return
  }
  func.func @transform_0(%arg0: i32) -> (i32, i32) {
    %c0_i32 = arith.constant 0 : i32
    %c0_i32_0 = arith.constant 0 : i32
    return %arg0, %c0_i32 : i32, i32
  }
  func.func @transform_1(%arg0: i32) -> (i32, i32) {
    %c0_i32 = arith.constant 0 : i32
    %c0_i32_0 = arith.constant 0 : i32
    %c0_i32_1 = arith.constant 0 : i32
    return %c0_i32, %c0_i32_0 : i32, i32
  }
  func.func @transform_2(%arg0: i32) -> (i32, i32) {
    %c0_i32 = arith.constant 0 : i32
    %c0_i32_0 = arith.constant 0 : i32
    return %arg0, %c0_i32 : i32, i32
  }
}

</mosaic_0001>

<llo_original>
// kernel: tile.48
$region0: #{tile.48}
  #allocation0 [shape = 's32[1]{0}', space=sflag, size = 0x4, scoped, tag = 'scoped memory for tile.48']
  %s0 = inlined_call_operand.vmem [shape: f32[64], index: 0, kind: input, shape index: {}]
  %s1 = inlined_call_operand.vmem [shape: f32[4,64], index: 1, kind: output, shape index: {}]
  // Predicated region
  $region2: #{tile.48} parent=0 // pred_check
    _
  $region3: #{tile.48} parent=0 // pred_check_branch
    %3 = sbr.rel (0) target = $region5
  $region4: #{tile.48} parent=0 // pred_region
    _
  $region5: #{tile.48} parent=0 // pred_fallthru
    _
  %v4 = vld [vmem:[%s0] ss:$0 sm:$0xff]
  %5 = vst [vmem:[%s1] sm:$0xf] %v4

// kernel: tile.49
$region0: #{tile.49}
  %s0 = inlined_call_operand.vmem [shape: f32[4,64], index: 0, kind: input, shape index: {}]
  %s1 = inlined_call_operand.vmem [shape: f32[1,256], index: 1, kind: output, shape index: {}]
  $region1: #{tile.49} parent=0
    #allocation0 [shape = 'u8[8192]{0}', space=vmem, size = 0x2000, scoped, tag = 'scoped mem for output reshape']
    #allocation1 [shape = 'u8[4096]{0}', space=vmem, size = 0x1000, scoped, tag = 'scoped mem for input reshape']
    %s3 = sshllo.u32 0, 4
    %v4 = vld [vmem:[%s0] sm:%s3]
    %5 = vst [vmem:[#allocation1] sm:%s3] %v4
    %s6 = smov 3
    %v7 = vld [vmem:[#allocation1] ss:$2 sm:%s6]
    %vm8 = vcmask 523264
    %9 = vst.msk [vmem:[#allocation0] ss:$8 sm:$0x3] %vm8, %v7
    %s10 = scalar_lea.vmem [#allocation1], 1
    %s11 = smov 3
    %v12 = vld [vmem:[%s10] ss:$2 sm:%s11]
    %13 = vrot.lane.b32.xlu0 %v12, 64
    %v14 = vpop.permute.xlu0 %13
    %vm15 = vcmask 1048064
    %16 = vst.msk [vmem:[#allocation0] ss:$8 sm:$0x3] %vm15, %v14
    %s18 = sshllo.u32 0, 1
    %v20 = vld [vmem:[#allocation0] sm:%s18]
    %s21 = sshllo.u32 0, 1
    %22 = vst [vmem:[%s1] sm:%s21] %v20
    %s23 = scalar_lea.vmem [#allocation0], 8
    %v24 = vld [vmem:[%s23] sm:%s18]
    %s25 = sshllo.u32 0, 1
    %s26 = scalar_lea.vmem %s1, 1
    %27 = vst [vmem:[%s26] sm:%s25] %v24

// kernel: generator_forward.9
$region0: #{generator_forward.9}
  #allocation0 [shape = 'u32[]', space=smem, size = 0x4, offset = 0x4, fixed_abs, tag = 'smem constant byte address 0x4 - core index']
  #allocation1 [shape = 'u32[144,128]{1,0:T(1,128)}', space=vmem, size = 0x12000, scoped, tag = 'internal scratch']
  %s0 = inlined_call_operand.vmem [shape: bf16[8,16], index: 0, kind: input, shape index: {}]
  %s1 = inlined_call_operand.vmem [shape: bf16[16,1024], index: 1, kind: input, shape index: {}]
  %s2 = inlined_call_operand.vmem [shape: f32[8,1024], index: 2, kind: output, shape index: {0}]
  %s3 = inlined_call_operand.vmem [shape: f32[1,1024], index: 3, kind: output, shape index: {1}]
  %s4 = inlined_call_operand.vmem [shape: f32[1,1024], index: 4, kind: output, shape index: {2}]
  %5 = xla_tuple %s2, %s3, %s4
  %s6 = sld [smem:[#allocation0]]
  $region38: #{generator_forward.9} parent=0
    _
  %s8 = ssub.s32 1, %s6
  %s9 = scalar_select 0, %s8, %s6
  // Predicated region
  $region2: #{generator_forward.9} parent=0 // pred_check
    _
  $region3: #{generator_forward.9} parent=0 // pred_check_branch
    %11 = sbr.rel (0) target = $region5
  $region4: #{generator_forward.9} parent=0 // pred_region
    _
  $region5: #{generator_forward.9} parent=0 // pred_fallthru
    _
  // Predicated region
  $region6: #{generator_forward.9} parent=0 // pred_check
    _
  $region7: #{generator_forward.9} parent=0 // pred_check_branch
    %13 = sbr.rel (0) target = $region9
  $region8: #{generator_forward.9} parent=0 // pred_region
    _
  $region9: #{generator_forward.9} parent=0 // pred_fallthru
    _
  %v15 = vld [vmem:[%s0] sm:$0xf]
  %v16 = vld [vmem:[%s1] sm:$0xff]
  %v17 = vld [vmem:[%s1 + $0x8] sm:$0xff]
  %v18 = vld [vmem:[%s1 + $0x10] sm:$0xff]
  %v19 = vld [vmem:[%s1 + $0x18] sm:$0xff]
  %v20 = vld [vmem:[%s1 + $0x20] sm:$0xff]
  %v21 = vld [vmem:[%s1 + $0x28] sm:$0xff]
  %v22 = vld [vmem:[%s1 + $0x30] sm:$0xff]
  %v23 = vld [vmem:[%s1 + $0x38] sm:$0xff]
  %v32 = vunpack.c.l.b16 %v16
  %v33 = vunpack.c.h.b16 %v16
  %v34 = vunpack.c.l.b16 %v17
  %v35 = vunpack.c.h.b16 %v17
  %v36 = vunpack.c.l.b16 %v18
  %v37 = vunpack.c.h.b16 %v18
  %v38 = vunpack.c.l.b16 %v19
  %v39 = vunpack.c.h.b16 %v19
  %v40 = vunpack.c.l.b16 %v20
  %v41 = vunpack.c.h.b16 %v20
  %v42 = vunpack.c.l.b16 %v21
  %v43 = vunpack.c.h.b16 %v21
  %v44 = vunpack.c.l.b16 %v22
  %v45 = vunpack.c.h.b16 %v22
  %v46 = vunpack.c.l.b16 %v23
  %v47 = vunpack.c.h.b16 %v23
  %v48 = vpack.c.b16 %v40, %v32
  %v49 = vpack.c.b16 %v41, %v33
  %v50 = vpack.c.b16 %v42, %v34
  %v51 = vpack.c.b16 %v43, %v35
  %v52 = vpack.c.b16 %v44, %v36
  %v53 = vpack.c.b16 %v45, %v37
  %v54 = vpack.c.b16 %v46, %v38
  %v55 = vpack.c.b16 %v47, %v39
  %vm64 = vcmask 130048
  %v66 = vsel %vm64, %v15, 0
  %68 = vmatprep.subr.bf16.mxu0 %v49
  %69 = vmatpush1.bf16.msra.mxu0 %v48
  %70 = vmatprep.subr.bf16.mxu0 0
  %71 = vmatpush1.bf16.msra.mxu0 0
  %72 = vmatprep.subr.bf16.mxu0 0
  %73 = vmatpush1.bf16.msra.mxu0 0
  %74 = vmatprep.subr.bf16.mxu0 0
  %75 = vmatpush1.bf16.msra.mxu0 0
  %76 = vmatprep.subr.bf16.mxu0 0
  %77 = vmatpush1.bf16.msra.mxu0 0
  %78 = vmatprep.subr.bf16.mxu0 0
  %79 = vmatpush1.bf16.msra.mxu0 0
  %80 = vmatprep.subr.bf16.mxu0 0
  %81 = vmatpush1.bf16.msra.mxu0 0
  %82 = vmatprep.subr.bf16.mxu0 0
  %83 = vmatpush1.bf16.msra.mxu0 0
  %84 = vmatprep.subr.bf16.mxu0 0
  %85 = vmatpush1.bf16.msra.mxu0 0
  %86 = vmatprep.subr.bf16.mxu0 0
  %87 = vmatpush1.bf16.msra.mxu0 0
  %88 = vmatprep.subr.bf16.mxu0 0
  %89 = vmatpush1.bf16.msra.mxu0 0
  %90 = vmatprep.subr.bf16.mxu0 0
  %91 = vmatpush1.bf16.msra.mxu0 0
  %92 = vmatprep.subr.bf16.mxu0 0
  %93 = vmatpush1.bf16.msra.mxu0 0
  %94 = vmatprep.subr.bf16.mxu0 0
  %95 = vmatpush1.bf16.msra.mxu0 0
  %96 = vmatprep.subr.bf16.mxu0 0
  %97 = vmatpush1.bf16.msra.mxu0 0
  %98 = vmatprep.subr.bf16.mxu0 0
  %99 = vmatpush1.bf16.msra.mxu0 0
  %100 = vmatprep.mubr.bf16.mxu0 0
  %101 = vmatmul.mubr.bf16.gmra.mrb[0].mxu0 %v66
  %v102 = vpop.f32.mrb[0].mxu0
  %v103 = vadd.f32 0.0, %v102
  %v104 = vpop.f32.mrb[0].mxu0
  %v105 = vadd.f32 0.0, %v104
  %v106 = vpop.f32.mrb[0].mxu0
  %v107 = vpop.f32.mrb[0].mxu0
  %108 = vdwg.mxu0
  %109 = vmatprep.subr.bf16.mxu0 %v51
  %110 = vmatpush1.bf16.msra.mxu0 %v50
  %111 = vmatprep.subr.bf16.mxu0 0
  %112 = vmatpush1.bf16.msra.mxu0 0
  %113 = vmatprep.subr.bf16.mxu0 0
  %114 = vmatpush1.bf16.msra.mxu0 0
  %115 = vmatprep.subr.bf16.mxu0 0
  %116 = vmatpush1.bf16.msra.mxu0 0
  %117 = vmatprep.subr.bf16.mxu0 0
  %118 = vmatpush1.bf16.msra.mxu0 0
  %119 = vmatprep.subr.bf16.mxu0 0
  %120 = vmatpush1.bf16.msra.mxu0 0
  %121 = vmatprep.subr.bf16.mxu0 0
  %122 = vmatpush1.bf16.msra.mxu0 0
  %123 = vmatprep.subr.bf16.mxu0 0
  %124 = vmatpush1.bf16.msra.mxu0 0
  %125 = vmatprep.subr.bf16.mxu0 0
  %126 = vmatpush1.bf16.msra.mxu0 0
  %127 = vmatprep.subr.bf16.mxu0 0
  %128 = vmatpush1.bf16.msra.mxu0 0
  %129 = vmatprep.subr.bf16.mxu0 0
  %130 = vmatpush1.bf16.msra.mxu0 0
  %131 = vmatprep.subr.bf16.mxu0 0
  %132 = vmatpush1.bf16.msra.mxu0 0
  %133 = vmatprep.subr.bf16.mxu0 0
  %134 = vmatpush1.bf16.msra.mxu0 0
  %135 = vmatprep.subr.bf16.mxu0 0
  %136 = vmatpush1.bf16.msra.mxu0 0
  %137 = vmatprep.subr.bf16.mxu0 0
  %138 = vmatpush1.bf16.msra.mxu0 0
  %139 = vmatprep.subr.bf16.mxu0 0
  %140 = vmatpush1.bf16.msra.mxu0 0
  %141 = vmatprep.mubr.bf16.mxu0 0
  %142 = vmatmul.mubr.bf16.gmra.mrb[0].mxu0 %v66
  %v143 = vpop.f32.mrb[0].mxu0
  %v144 = vadd.f32 0.0, %v143
  %v145 = vpop.f32.mrb[0].mxu0
  %v146 = vadd.f32 0.0, %v145
  %v147 = vpop.f32.mrb[0].mxu0
  %v148 = vpop.f32.mrb[0].mxu0
  %149 = vdwg.mxu0
  %150 = vmatprep.subr.bf16.mxu0 %v53
  %151 = vmatpush1.bf16.msra.mxu0 %v52
  %152 = vmatprep.subr.bf16.mxu0 0
  %153 = vmatpush1.bf16.msra.mxu0 0
  %154 = vmatprep.subr.bf16.mxu0 0
  %155 = vmatpush1.bf16.msra.mxu0 0
  %156 = vmatprep.subr.bf16.mxu0 0
  %157 = vmatpush1.bf16.msra.mxu0 0
  %158 = vmatprep.subr.bf16.mxu0 0
  %159 = vmatpush1.bf16.msra.mxu0 0
  %160 = vmatprep.subr.bf16.mxu0 0
  %161 = vmatpush1.bf16.msra.mxu0 0
  %162 = vmatprep.subr.bf16.mxu0 0
  %163 = vmatpush1.bf16.msra.mxu0 0
  %164 = vmatprep.subr.bf16.mxu0 0
  %165 = vmatpush1.bf16.msra.mxu0 0
  %166 = vmatprep.subr.bf16.mxu0 0
  %167 = vmatpush1.bf16.msra.mxu0 0
  %168 = vmatprep.subr.bf16.mxu0 0
  %169 = vmatpush1.bf16.msra.mxu0 0
  %170 = vmatprep.subr.bf16.mxu0 0
  %171 = vmatpush1.bf16.msra.mxu0 0
  %172 = vmatprep.subr.bf16.mxu0 0
  %173 = vmatpush1.bf16.msra.mxu0 0
  %174 = vmatprep.subr.bf16.mxu0 0
  %175 = vmatpush1.bf16.msra.mxu0 0
  %176 = vmatprep.subr.bf16.mxu0 0
  %177 = vmatpush1.bf16.msra.mxu0 0
  %178 = vmatprep.subr.bf16.mxu0 0
  %179 = vmatpush1.bf16.msra.mxu0 0
  %180 = vmatprep.subr.bf16.mxu0 0
  %181 = vmatpush1.bf16.msra.mxu0 0
  %182 = vmatprep.mubr.bf16.mxu0 0
  %183 = vmatmul.mubr.bf16.gmra.mrb[0].mxu0 %v66
  %v184 = vpop.f32.mrb[0].mxu0
  %v185 = vadd.f32 0.0, %v184
  %v186 = vpop.f32.mrb[0].mxu0
  %v187 = vadd.f32 0.0, %v186
  %v188 = vpop.f32.mrb[0].mxu0
  %v189 = vpop.f32.mrb[0].mxu0
  %190 = vdwg.mxu0
  %191 = vmatprep.subr.bf16.mxu0 %v55
  %192 = vmatpush1.bf16.msra.mxu0 %v54
  %193 = vmatprep.subr.bf16.mxu0 0
  %194 = vmatpush1.bf16.msra.mxu0 0
  %195 = vmatprep.subr.bf16.mxu0 0
  %196 = vmatpush1.bf16.msra.mxu0 0
  %197 = vmatprep.subr.bf16.mxu0 0
  %198 = vmatpush1.bf16.msra.mxu0 0
  %199 = vmatprep.subr.bf16.mxu0 0
  %200 = vmatpush1.bf16.msra.mxu0 0
  %201 = vmatprep.subr.bf16.mxu0 0
  %202 = vmatpush1.bf16.msra.mxu0 0
  %203 = vmatprep.subr.bf16.mxu0 0
  %204 = vmatpush1.bf16.msra.mxu0 0
  %205 = vmatprep.subr.bf16.mxu0 0
  %206 = vmatpush1.bf16.msra.mxu0 0
  %207 = vmatprep.subr.bf16.mxu0 0
  %208 = vmatpush1.bf16.msra.mxu0 0
  %209 = vmatprep.subr.bf16.mxu0 0
  %210 = vmatpush1.bf16.msra.mxu0 0
  %211 = vmatprep.subr.bf16.mxu0 0
  %212 = vmatpush1.bf16.msra.mxu0 0
  %213 = vmatprep.subr.bf16.mxu0 0
  %214 = vmatpush1.bf16.msra.mxu0 0
  %215 = vmatprep.subr.bf16.mxu0 0
  %216 = vmatpush1.bf16.msra.mxu0 0
  %217 = vmatprep.subr.bf16.mxu0 0
  %218 = vmatpush1.bf16.msra.mxu0 0
  %219 = vmatprep.subr.bf16.mxu0 0
  %220 = vmatpush1.bf16.msra.mxu0 0
  %221 = vmatprep.subr.bf16.mxu0 0
  %222 = vmatpush1.bf16.msra.mxu0 0
  %223 = vmatprep.mubr.bf16.mxu0 0
  %224 = vmatmul.mubr.bf16.gmra.mrb[0].mxu0 %v66
  %v225 = vpop.f32.mrb[0].mxu0
  %v226 = vadd.f32 0.0, %v225
  %v227 = vpop.f32.mrb[0].mxu0
  %v228 = vadd.f32 0.0, %v227
  %v229 = vpop.f32.mrb[0].mxu0
  %v230 = vpop.f32.mrb[0].mxu0
  %231 = vdwg.mxu0
  %232 = vst [vmem:[%s2] sm:$0xff] %v103
  %233 = vst [vmem:[%s2 + $0x8] sm:$0xff] %v105
  %234 = vst [vmem:[%s2 + $0x10] sm:$0xff] %v144
  %235 = vst [vmem:[%s2 + $0x18] sm:$0xff] %v146
  %236 = vst [vmem:[%s2 + $0x20] sm:$0xff] %v185
  %237 = vst [vmem:[%s2 + $0x28] sm:$0xff] %v187
  %238 = vst [vmem:[%s2 + $0x30] sm:$0xff] %v226
  %239 = vst [vmem:[%s2 + $0x38] sm:$0xff] %v228
  %p240 = scmp.eq.s32.totalorder 0, 0
  // Predicated region
  $region10: #{generator_forward.9} parent=0 // pred_check
    %p241 = pneg %p240
  $region11: #{generator_forward.9} parent=0 // pred_check_branch
    %243 = sbr.rel (%p241) target = $region13
  $region12: #{generator_forward.9} parent=0 // pred_region
    %244 = vst [vmem:[%s3] sm:$0xff] 0.0
    %245 = vst [vmem:[%s4] sm:$0xff] 0.0
  $region13: #{generator_forward.9} parent=0 // pred_fallthru
    _
  %v246 = vld [vmem:[%s3] sm:$0xff]
  %v247 = vrot.slane %v103, 4
  %v248 = vadd.f32 %v103, %v247
  %v249 = vrot.slane %v248, 2
  %v250 = vadd.f32 %v248, %v249
  %v251 = vrot.slane %v250, 1
  %v252 = vadd.f32 %v250, %v251
  %v253 = vrot.slane %v105, 4
  %v254 = vadd.f32 %v105, %v253
  %v255 = vrot.slane %v254, 2
  %v256 = vadd.f32 %v254, %v255
  %v257 = vrot.slane %v256, 1
  %v258 = vadd.f32 %v256, %v257
  %v259 = vrot.slane %v144, 4
  %v260 = vadd.f32 %v144, %v259
  %v261 = vrot.slane %v260, 2
  %v262 = vadd.f32 %v260, %v261
  %v263 = vrot.slane %v262, 1
  %v264 = vadd.f32 %v262, %v263
  %v265 = vrot.slane %v146, 4
  %v266 = vadd.f32 %v146, %v265
  %v267 = vrot.slane %v266, 2
  %v268 = vadd.f32 %v266, %v267
  %v269 = vrot.slane %v268, 1
  %v270 = vadd.f32 %v268, %v269
  %v271 = vrot.slane %v185, 4
  %v272 = vadd.f32 %v185, %v271
  %v273 = vrot.slane %v272, 2
  %v274 = vadd.f32 %v272, %v273
  %v275 = vrot.slane %v274, 1
  %v276 = vadd.f32 %v274, %v275
  %v277 = vrot.slane %v187, 4
  %v278 = vadd.f32 %v187, %v277
  %v279 = vrot.slane %v278, 2
  %v280 = vadd.f32 %v278, %v279
  %v281 = vrot.slane %v280, 1
  %v282 = vadd.f32 %v280, %v281
  %v283 = vrot.slane %v226, 4
  %v284 = vadd.f32 %v226, %v283
  %v285 = vrot.slane %v284, 2
  %v286 = vadd.f32 %v284, %v285
  %v287 = vrot.slane %v286, 1
  %v288 = vadd.f32 %v286, %v287
  %v289 = vrot.slane %v228, 4
  %v290 = vadd.f32 %v228, %v289
  %v291 = vrot.slane %v290, 2
  %v292 = vadd.f32 %v290, %v291
  %v293 = vrot.slane %v292, 1
  %v294 = vadd.f32 %v292, %v293
  %v303 = vcombine.low %v252, %v258
  %v304 = vcombine.low %v264, %v270
  %v305 = vcombine.low %v276, %v282
  %v306 = vcombine.low %v288, %v294
  %v308 = vunpack.c.l.s4 1966171168
  %v309 = vunpack.c.0.s8 %v308
  %v310 = vlaneseq
  %v311 = vshrl.u32 %v310, 7
  %v312 = vsub.s32 %v309, %v311
  %v313 = vrot.slane %v303, %v312
  %v315 = vunpack.c.l.s4 1966171168
  %v316 = vunpack.c.0.s8 %v315
  %v317 = vlaneseq
  %v318 = vshrl.u32 %v317, 7
  %v319 = vsub.s32 %v316, %v318
  %v320 = vrot.slane %v304, %v319
  %v322 = vunpack.c.l.s4 1966171168
  %v323 = vunpack.c.0.s8 %v322
  %v324 = vlaneseq
  %v325 = vshrl.u32 %v324, 7
  %v326 = vsub.s32 %v323, %v325
  %v327 = vrot.slane %v305, %v326
  %v329 = vunpack.c.l.s4 1966171168
  %v330 = vunpack.c.0.s8 %v329
  %v331 = vlaneseq
  %v332 = vshrl.u32 %v331, 7
  %v333 = vsub.s32 %v330, %v332
  %v334 = vrot.slane %v306, %v333
  %v335 = vcombine.low %v313, %v320
  %v336 = vcombine.low %v327, %v334
  %v338 = vunpack.c.l.s4 1966171168
  %v339 = vunpack.c.0.s8 %v338
  %v340 = vlaneseq
  %v341 = vshrl.u32 %v340, 7
  %v342 = vsub.s32 %v339, %v341
  %v343 = vrot.slane %v335, %v342
  %v345 = vunpack.c.l.s4 1966171168
  %v346 = vunpack.c.0.s8 %v345
  %v347 = vlaneseq
  %v348 = vshrl.u32 %v347, 7
  %v349 = vsub.s32 %v346, %v348
  %v350 = vrot.slane %v336, %v349
  %v351 = vcombine.low %v343, %v350
  %v353 = vadd.f32 %v246, %v351
  %354 = vst [vmem:[%s3] sm:$0xff] %v353
  %v355 = vld [vmem:[%s4] sm:$0xff]
  %v356 = vmul.f32 %v103, %v103
  %v357 = vmul.f32 %v105, %v105
  %v358 = vmul.f32 %v144, %v144
  %v359 = vmul.f32 %v146, %v146
  %v360 = vmul.f32 %v185, %v185
  %v361 = vmul.f32 %v187, %v187
  %v362 = vmul.f32 %v226, %v226
  %v363 = vmul.f32 %v228, %v228
  %v364 = vrot.slane %v356, 4
  %v365 = vadd.f32 %v356, %v364
  %v366 = vrot.slane %v365, 2
  %v367 = vadd.f32 %v365, %v366
  %v368 = vrot.slane %v367, 1
  %v369 = vadd.f32 %v367, %v368
  %v370 = vrot.slane %v357, 4
  %v371 = vadd.f32 %v357, %v370
  %v372 = vrot.slane %v371, 2
  %v373 = vadd.f32 %v371, %v372
  %v374 = vrot.slane %v373, 1
  %v375 = vadd.f32 %v373, %v374
  %v376 = vrot.slane %v358, 4
  %v377 = vadd.f32 %v358, %v376
  %v378 = vrot.slane %v377, 2
  %v379 = vadd.f32 %v377, %v378
  %v380 = vrot.slane %v379, 1
  %v381 = vadd.f32 %v379, %v380
  %v382 = vrot.slane %v359, 4
  %v383 = vadd.f32 %v359, %v382
  %v384 = vrot.slane %v383, 2
  %v385 = vadd.f32 %v383, %v384
  %v386 = vrot.slane %v385, 1
  %v387 = vadd.f32 %v385, %v386
  %v388 = vrot.slane %v360, 4
  %v389 = vadd.f32 %v360, %v388
  %v390 = vrot.slane %v389, 2
  %v391 = vadd.f32 %v389, %v390
  %v392 = vrot.slane %v391, 1
  %v393 = vadd.f32 %v391, %v392
  %v394 = vrot.slane %v361, 4
  %v395 = vadd.f32 %v361, %v394
  %v396 = vrot.slane %v395, 2
  %v397 = vadd.f32 %v395, %v396
  %v398 = vrot.slane %v397, 1
  %v399 = vadd.f32 %v397, %v398
  %v400 = vrot.slane %v362, 4
  %v401 = vadd.f32 %v362, %v400
  %v402 = vrot.slane %v401, 2
  %v403 = vadd.f32 %v401, %v402
  %v404 = vrot.slane %v403, 1
  %v405 = vadd.f32 %v403, %v404
  %v406 = vrot.slane %v363, 4
  %v407 = vadd.f32 %v363, %v406
  %v408 = vrot.slane %v407, 2
  %v409 = vadd.f32 %v407, %v408
  %v410 = vrot.slane %v409, 1
  %v411 = vadd.f32 %v409, %v410
  %v420 = vcombine.low %v369, %v375
  %v421 = vcombine.low %v381, %v387
  %v422 = vcombine.low %v393, %v399
  %v423 = vcombine.low %v405, %v411
  %v425 = vunpack.c.l.s4 1966171168
  %v426 = vunpack.c.0.s8 %v425
  %v427 = vlaneseq
  %v428 = vshrl.u32 %v427, 7
  %v429 = vsub.s32 %v426, %v428
  %v430 = vrot.slane %v420, %v429
  %v432 = vunpack.c.l.s4 1966171168
  %v433 = vunpack.c.0.s8 %v432
  %v434 = vlaneseq
  %v435 = vshrl.u32 %v434, 7
  %v436 = vsub.s32 %v433, %v435
  %v437 = vrot.slane %v421, %v436
  %v439 = vunpack.c.l.s4 1966171168
  %v440 = vunpack.c.0.s8 %v439
  %v441 = vlaneseq
  %v442 = vshrl.u32 %v441, 7
  %v443 = vsub.s32 %v440, %v442
  %v444 = vrot.slane %v422, %v443
  %v446 = vunpack.c.l.s4 1966171168
  %v447 = vunpack.c.0.s8 %v446
  %v448 = vlaneseq
  %v449 = vshrl.u32 %v448, 7
  %v450 = vsub.s32 %v447, %v449
  %v451 = vrot.slane %v423, %v450
  %v452 = vcombine.low %v430, %v437
  %v453 = vcombine.low %v444, %v451
  %v455 = vunpack.c.l.s4 1966171168
  %v456 = vunpack.c.0.s8 %v455
  %v457 = vlaneseq
  %v458 = vshrl.u32 %v457, 7
  %v459 = vsub.s32 %v456, %v458
  %v460 = vrot.slane %v452, %v459
  %v462 = vunpack.c.l.s4 1966171168
  %v463 = vunpack.c.0.s8 %v462
  %v464 = vlaneseq
  %v465 = vshrl.u32 %v464, 7
  %v466 = vsub.s32 %v463, %v465
  %v467 = vrot.slane %v453, %v466
  %v468 = vcombine.low %v460, %v467
  %v470 = vadd.f32 %v355, %v468
  %471 = vst [vmem:[%s4] sm:$0xff] %v470
  // Predicated region
  $region14: #{generator_forward.9} parent=0 // pred_check
    _
  $region15: #{generator_forward.9} parent=0 // pred_check_branch
    %473 = sbr.rel (0) target = $region17
  $region16: #{generator_forward.9} parent=0 // pred_region
    _
  $region17: #{generator_forward.9} parent=0 // pred_fallthru
    _
  // Predicated region
  $region18: #{generator_forward.9} parent=0 // pred_check
    _
  $region19: #{generator_forward.9} parent=0 // pred_check_branch
    %475 = sbr.rel (0) target = $region21
  $region20: #{generator_forward.9} parent=0 // pred_region
    _
  $region21: #{generator_forward.9} parent=0 // pred_fallthru
    _
  // Predicated region
  $region22: #{generator_forward.9} parent=0 // pred_check
    _
  $region23: #{generator_forward.9} parent=0 // pred_check_branch
    %477 = sbr.rel (0) target = $region25
  $region24: #{generator_forward.9} parent=0 // pred_region
    _
  $region25: #{generator_forward.9} parent=0 // pred_fallthru
    _
  // Predicated region
  $region26: #{generator_forward.9} parent=0 // pred_check
    _
  $region27: #{generator_forward.9} parent=0 // pred_check_branch
    %479 = sbr.rel (0) target = $region29
  $region28: #{generator_forward.9} parent=0 // pred_region
    _
  $region29: #{generator_forward.9} parent=0 // pred_fallthru
    _
  // Predicated region
  $region30: #{generator_forward.9} parent=0 // pred_check
    _
  $region31: #{generator_forward.9} parent=0 // pred_check_branch
    %481 = sbr.rel (0) target = $region33
  $region32: #{generator_forward.9} parent=0 // pred_region
    _
  $region33: #{generator_forward.9} parent=0 // pred_fallthru
    _
  // Predicated region
  $region34: #{generator_forward.9} parent=0 // pred_check
    _
  $region35: #{generator_forward.9} parent=0 // pred_check_branch
    %483 = sbr.rel (0) target = $region37
  $region36: #{generator_forward.9} parent=0 // pred_region
    _
  $region37: #{generator_forward.9} parent=0 // pred_fallthru
    _

// kernel: generator_forward.10
$region0: #{generator_forward.10}
  #allocation0 [shape = 'u32[]', space=smem, size = 0x4, offset = 0x4, fixed_abs, tag = 'smem constant byte address 0x4 - core index']
  #allocation1 [shape = 'u32[144,128]{1,0:T(1,128)}', space=vmem, size = 0x12000, scoped, tag = 'internal scratch']
  %s0 = inlined_call_operand.vmem [shape: f32[8,256], index: 0, kind: input, shape index: {}]
  %s1 = inlined_call_operand.vmem [shape: f32[1,256], index: 1, kind: input, shape index: {}]
  %s2 = inlined_call_operand.vmem [shape: f32[1,256], index: 2, kind: input, shape index: {}]
  %s3 = inlined_call_operand.vmem [shape: f32[8,256], index: 3, kind: output, shape index: {}]
  %s4 = sld [smem:[#allocation0]]
  $region22: #{generator_forward.10} parent=0
    _
  %s6 = ssub.s32 1, %s4
  %s7 = scalar_select 0, %s6, %s4
  // Predicated region
  $region2: #{generator_forward.10} parent=0 // pred_check
    _
  $region3: #{generator_forward.10} parent=0 // pred_check_branch
    %9 = sbr.rel (0) target = $region5
  $region4: #{generator_forward.10} parent=0 // pred_region
    _
  $region5: #{generator_forward.10} parent=0 // pred_fallthru
    _
  // Predicated region
  $region6: #{generator_forward.10} parent=0 // pred_check
    _
  $region7: #{generator_forward.10} parent=0 // pred_check_branch
    %11 = sbr.rel (0) target = $region9
  $region8: #{generator_forward.10} parent=0 // pred_region
    _
  $region9: #{generator_forward.10} parent=0 // pred_fallthru
    _
  // Predicated region
  $region10: #{generator_forward.10} parent=0 // pred_check
    _
  $region11: #{generator_forward.10} parent=0 // pred_check_branch
    %13 = sbr.rel (0) target = $region13
  $region12: #{generator_forward.10} parent=0 // pred_region
    _
  $region13: #{generator_forward.10} parent=0 // pred_fallthru
    _
  %v14 = vld [vmem:[%s0] sm:$0xff]
  %v15 = vld [vmem:[%s0 + $0x8] sm:$0xff]
  %v16 = vld [vmem:[%s1] sm:$0x3]
  %v18 = vlaneseq
  %v19 = vshrl.u32 %v18, 7
  %v20 = vsub.s32 0, %v19
  %v21 = vrot.slane %v16, %v20
  %v22 = vlaneseq
  %v23 = vshrl.u32 %v22, 7
  %v24 = vsub.s32 1, %v23
  %v25 = vrot.slane %v16, %v24
  %v28 = vmul.f32 %v14, %v21
  %v29 = vmul.f32 %v15, %v25
  %v30 = vld [vmem:[%s2] sm:$0x3]
  %v32 = vlaneseq
  %v33 = vshrl.u32 %v32, 7
  %v34 = vsub.s32 0, %v33
  %v35 = vrot.slane %v30, %v34
  %v36 = vlaneseq
  %v37 = vshrl.u32 %v36, 7
  %v38 = vsub.s32 1, %v37
  %v39 = vrot.slane %v30, %v38
  %v42 = vadd.f32 %v28, %v35
  %v43 = vadd.f32 %v29, %v39
  %v44 = vmax.f32 %v42, 0.0
  %v45 = vmax.f32 %v43, 0.0
  %46 = vst [vmem:[%s3] sm:$0xff] %v44
  %47 = vst [vmem:[%s3 + $0x8] sm:$0xff] %v45
  // Predicated region
  $region14: #{generator_forward.10} parent=0 // pred_check
    _
  $region15: #{generator_forward.10} parent=0 // pred_check_branch
    %49 = sbr.rel (0) target = $region17
  $region16: #{generator_forward.10} parent=0 // pred_region
    _
  $region17: #{generator_forward.10} parent=0 // pred_fallthru
    _
  // Predicated region
  $region18: #{generator_forward.10} parent=0 // pred_check
    _
  $region19: #{generator_forward.10} parent=0 // pred_check_branch
    %51 = sbr.rel (0) target = $region21
  $region20: #{generator_forward.10} parent=0 // pred_region
    _
  $region21: #{generator_forward.10} parent=0 // pred_fallthru
    _

// kernel: generator_forward.11
$region0: #{generator_forward.11}
  #allocation0 [shape = 'u32[]', space=smem, size = 0x4, offset = 0x4, fixed_abs, tag = 'smem constant byte address 0x4 - core index']
  #allocation1 [shape = 'u32[144,128]{1,0:T(1,128)}', space=vmem, size = 0x12000, scoped, tag = 'internal scratch']
  %s0 = inlined_call_operand.vmem [shape: bf16[32,576], index: 0, kind: input, shape index: {}]
  %s1 = inlined_call_operand.vmem [shape: bf16[576,128], index: 1, kind: input, shape index: {}]
  %s2 = inlined_call_operand.vmem [shape: f32[32,128], index: 2, kind: output, shape index: {0}]
  %s3 = inlined_call_operand.vmem [shape: f32[1,128], index: 3, kind: output, shape index: {1}]
  %s4 = inlined_call_operand.vmem [shape: f32[1,128], index: 4, kind: output, shape index: {2}]
  %5 = xla_tuple %s2, %s3, %s4
  %s6 = sld [smem:[#allocation0]]
  $region38: #{generator_forward.11} parent=0
    _
  %s8 = ssub.s32 1, %s6
  %s9 = scalar_select 0, %s8, %s6
  // Predicated region
  $region2: #{generator_forward.11} parent=0 // pred_check
    _
  $region3: #{generator_forward.11} parent=0 // pred_check_branch
    %11 = sbr.rel (0) target = $region5
  $region4: #{generator_forward.11} parent=0 // pred_region
    _
  $region5: #{generator_forward.11} parent=0 // pred_fallthru
    _
  // Predicated region
  $region6: #{generator_forward.11} parent=0 // pred_check
    _
  $region7: #{generator_forward.11} parent=0 // pred_check_branch
    %13 = sbr.rel (0) target = $region9
  $region8: #{generator_forward.11} parent=0 // pred_region
    _
  $region9: #{generator_forward.11} parent=0 // pred_fallthru
    _
  %v15 = vld [vmem:[%s0] sm:$0xff]
  %v16 = vld [vmem:[%s0 + $0x8] sm:$0xff]
  %v17 = vld [vmem:[%s0 + $0x10] sm:$0xf]
  %v18 = vld [vmem:[%s0 + $0x14] sm:$0xff]
  %v19 = vld [vmem:[%s0 + $0x1c] sm:$0xff]
  %v20 = vld [vmem:[%s0 + $0x24] sm:$0xf]
  %v21 = vld [vmem:[%s0 + $0x28] sm:$0xff]
  %v22 = vld [vmem:[%s0 + $0x30] sm:$0xff]
  %v23 = vld [vmem:[%s0 + $0x38] sm:$0xf]
  %v24 = vld [vmem:[%s0 + $0x3c] sm:$0xff]
  %v25 = vld [vmem:[%s0 + $0x44] sm:$0xff]
  %v26 = vld [vmem:[%s0 + $0x4c] sm:$0xf]
  %v27 = vld [vmem:[%s1] sm:$0xf]
  %v28 = vld [vmem:[%s1 + $0x4] sm:$0xf]
  %v29 = vld [vmem:[%s1 + $0x8] sm:$0xf]
  %v30 = vld [vmem:[%s1 + $0xc] sm:$0xf]
  %v31 = vld [vmem:[%s1 + $0x10] sm:$0xf]
  %v32 = vld [vmem:[%s1 + $0x14] sm:$0xf]
  %v33 = vld [vmem:[%s1 + $0x18] sm:$0xf]
  %v34 = vld [vmem:[%s1 + $0x1c] sm:$0xf]
  %v35 = vld [vmem:[%s1 + $0x20] sm:$0xf]
  %v36 = vld [vmem:[%s1 + $0x24] sm:$0xf]
  %v37 = vld [vmem:[%s1 + $0x28] sm:$0xf]
  %v38 = vld [vmem:[%s1 + $0x2c] sm:$0xf]
  %v39 = vld [vmem:[%s1 + $0x30] sm:$0xf]
  %v40 = vld [vmem:[%s1 + $0x34] sm:$0xf]
  %v41 = vld [vmem:[%s1 + $0x38] sm:$0xf]
  %v42 = vld [vmem:[%s1 + $0x3c] sm:$0xf]
  %v43 = vld [vmem:[%s1 + $0x40] sm:$0xf]
  %v44 = vld [vmem:[%s1 + $0x44] sm:$0xf]
  %v45 = vld [vmem:[%s1 + $0x48] sm:$0xf]
  %v46 = vld [vmem:[%s1 + $0x4c] sm:$0xf]
  %v47 = vld [vmem:[%s1 + $0x50] sm:$0xf]
  %v48 = vld [vmem:[%s1 + $0x54] sm:$0xf]
  %v49 = vld [vmem:[%s1 + $0x58] sm:$0xf]
  %v50 = vld [vmem:[%s1 + $0x5c] sm:$0xf]
  %v51 = vld [vmem:[%s1 + $0x60] sm:$0xf]
  %v52 = vld [vmem:[%s1 + $0x64] sm:$0xf]
  %v53 = vld [vmem:[%s1 + $0x68] sm:$0xf]
  %v54 = vld [vmem:[%s1 + $0x6c] sm:$0xf]
  %v55 = vld [vmem:[%s1 + $0x70] sm:$0xf]
  %v56 = vld [vmem:[%s1 + $0x74] sm:$0xf]
  %v57 = vld [vmem:[%s1 + $0x78] sm:$0xf]
  %v58 = vld [vmem:[%s1 + $0x7c] sm:$0xf]
  %v59 = vld [vmem:[%s1 + $0x80] sm:$0xf]
  %v60 = vld [vmem:[%s1 + $0x84] sm:$0xf]
  %v61 = vld [vmem:[%s1 + $0x88] sm:$0xf]
  %v62 = vld [vmem:[%s1 + $0x8c] sm:$0xf]
  %v63 = vld [vmem:[%s1 + $0x90] sm:$0xf]
  %v64 = vld [vmem:[%s1 + $0x94] sm:$0xf]
  %v65 = vld [vmem:[%s1 + $0x98] sm:$0xf]
  %v66 = vld [vmem:[%s1 + $0x9c] sm:$0xf]
  %v67 = vld [vmem:[%s1 + $0xa0] sm:$0xf]
  %v68 = vld [vmem:[%s1 + $0xa4] sm:$0xf]
  %v69 = vld [vmem:[%s1 + $0xa8] sm:$0xf]
  %v70 = vld [vmem:[%s1 + $0xac] sm:$0xf]
  %v71 = vld [vmem:[%s1 + $0xb0] sm:$0xf]
  %v72 = vld [vmem:[%s1 + $0xb4] sm:$0xf]
  %v73 = vld [vmem:[%s1 + $0xb8] sm:$0xf]
  %v74 = vld [vmem:[%s1 + $0xbc] sm:$0xf]
  %v75 = vld [vmem:[%s1 + $0xc0] sm:$0xf]
  %v76 = vld [vmem:[%s1 + $0xc4] sm:$0xf]
  %v77 = vld [vmem:[%s1 + $0xc8] sm:$0xf]
  %v78 = vld [vmem:[%s1 + $0xcc] sm:$0xf]
  %v79 = vld [vmem:[%s1 + $0xd0] sm:$0xf]
  %v80 = vld [vmem:[%s1 + $0xd4] sm:$0xf]
  %v81 = vld [vmem:[%s1 + $0xd8] sm:$0xf]
  %v82 = vld [vmem:[%s1 + $0xdc] sm:$0xf]
  %v83 = vld [vmem:[%s1 + $0xe0] sm:$0xf]
  %v84 = vld [vmem:[%s1 + $0xe4] sm:$0xf]
  %v85 = vld [vmem:[%s1 + $0xe8] sm:$0xf]
  %v86 = vld [vmem:[%s1 + $0xec] sm:$0xf]
  %v87 = vld [vmem:[%s1 + $0xf0] sm:$0xf]
  %v88 = vld [vmem:[%s1 + $0xf4] sm:$0xf]
  %v89 = vld [vmem:[%s1 + $0xf8] sm:$0xf]
  %v90 = vld [vmem:[%s1 + $0xfc] sm:$0xf]
  %v91 = vld [vmem:[%s1 + $0x100] sm:$0xf]
  %v92 = vld [vmem:[%s1 + $0x104] sm:$0xf]
  %v93 = vld [vmem:[%s1 + $0x108] sm:$0xf]
  %v94 = vld [vmem:[%s1 + $0x10c] sm:$0xf]
  %v95 = vld [vmem:[%s1 + $0x110] sm:$0xf]
  %v96 = vld [vmem:[%s1 + $0x114] sm:$0xf]
  %v97 = vld [vmem:[%s1 + $0x118] sm:$0xf]
  %v98 = vld [vmem:[%s1 + $0x11c] sm:$0xf]
  %v111 = vunpack.c.l.b16 %v15
  %v112 = vunpack.c.h.b16 %v15
  %v113 = vunpack.c.l.b16 %v16
  %v114 = vunpack.c.h.b16 %v16
  %v115 = vunpack.c.l.b16 %v17
  %v116 = vunpack.c.l.b16 %v18
  %v117 = vunpack.c.h.b16 %v18
  %v118 = vunpack.c.l.b16 %v19
  %v119 = vunpack.c.h.b16 %v19
  %v120 = vunpack.c.l.b16 %v20
  %v121 = vunpack.c.l.b16 %v21
  %v122 = vunpack.c.h.b16 %v21
  %v123 = vunpack.c.l.b16 %v22
  %v124 = vunpack.c.h.b16 %v22
  %v125 = vunpack.c.l.b16 %v23
  %v126 = vunpack.c.l.b16 %v24
  %v127 = vunpack.c.h.b16 %v24
  %v128 = vunpack.c.l.b16 %v25
  %v129 = vunpack.c.h.b16 %v25
  %v130 = vunpack.c.l.b16 %v26
  %v131 = vpack.c.b16 %v116, %v111
  %v132 = vpack.c.b16 %v117, %v112
  %v133 = vpack.c.b16 %v118, %v113
  %v134 = vpack.c.b16 %v119, %v114
  %v135 = vpack.c.b16 %v120, %v115
  %v136 = vpack.c.b16 %v126, %v121
  %v137 = vpack.c.b16 %v127, %v122
  %v138 = vpack.c.b16 %v128, %v123
  %v139 = vpack.c.b16 %v129, %v124
  %v140 = vpack.c.b16 %v130, %v125
  %v221 = vunpack.c.l.b16 %v27
  %v222 = vunpack.c.l.b16 %v28
  %v223 = vunpack.c.l.b16 %v29
  %v224 = vunpack.c.l.b16 %v30
  %v225 = vunpack.c.l.b16 %v31
  %v226 = vunpack.c.l.b16 %v32
  %v227 = vunpack.c.l.b16 %v33
  %v228 = vunpack.c.l.b16 %v34
  %v229 = vunpack.c.l.b16 %v35
  %v230 = vunpack.c.l.b16 %v36
  %v231 = vunpack.c.l.b16 %v37
  %v232 = vunpack.c.l.b16 %v38
  %v233 = vunpack.c.l.b16 %v39
  %v234 = vunpack.c.l.b16 %v40
  %v235 = vunpack.c.l.b16 %v41
  %v236 = vunpack.c.l.b16 %v42
  %v237 = vunpack.c.l.b16 %v43
  %v238 = vunpack.c.l.b16 %v44
  %v239 = vunpack.c.l.b16 %v45
  %v240 = vunpack.c.l.b16 %v46
  %v241 = vunpack.c.l.b16 %v47
  %v242 = vunpack.c.l.b16 %v48
  %v243 = vunpack.c.l.b16 %v49
  %v244 = vunpack.c.l.b16 %v50
  %v245 = vunpack.c.l.b16 %v51
  %v246 = vunpack.c.l.b16 %v52
  %v247 = vunpack.c.l.b16 %v53
  %v248 = vunpack.c.l.b16 %v54
  %v249 = vunpack.c.l.b16 %v55
  %v250 = vunpack.c.l.b16 %v56
  %v251 = vunpack.c.l.b16 %v57
  %v252 = vunpack.c.l.b16 %v58
  %v253 = vunpack.c.l.b16 %v59
  %v254 = vunpack.c.l.b16 %v60
  %v255 = vunpack.c.l.b16 %v61
  %v256 = vunpack.c.l.b16 %v62
  %v257 = vunpack.c.l.b16 %v63
  %v258 = vunpack.c.l.b16 %v64
  %v259 = vunpack.c.l.b16 %v65
  %v260 = vunpack.c.l.b16 %v66
  %v261 = vunpack.c.l.b16 %v67
  %v262 = vunpack.c.l.b16 %v68
  %v263 = vunpack.c.l.b16 %v69
  %v264 = vunpack.c.l.b16 %v70
  %v265 = vunpack.c.l.b16 %v71
  %v266 = vunpack.c.l.b16 %v72
  %v267 = vunpack.c.l.b16 %v73
  %v268 = vunpack.c.l.b16 %v74
  %v269 = vunpack.c.l.b16 %v75
  %v270 = vunpack.c.l.b16 %v76
  %v271 = vunpack.c.l.b16 %v77
  %v272 = vunpack.c.l.b16 %v78
  %v273 = vunpack.c.l.b16 %v79
  %v274 = vunpack.c.l.b16 %v80
  %v275 = vunpack.c.l.b16 %v81
  %v276 = vunpack.c.l.b16 %v82
  %v277 = vunpack.c.l.b16 %v83
  %v278 = vunpack.c.l.b16 %v84
  %v279 = vunpack.c.l.b16 %v85
  %v280 = vunpack.c.l.b16 %v86
  %v281 = vunpack.c.l.b16 %v87
  %v282 = vunpack.c.l.b16 %v88
  %v283 = vunpack.c.l.b16 %v89
  %v284 = vunpack.c.l.b16 %v90
  %v285 = vunpack.c.l.b16 %v91
  %v286 = vunpack.c.l.b16 %v92
  %v287 = vunpack.c.l.b16 %v93
  %v288 = vunpack.c.l.b16 %v94
  %v289 = vunpack.c.l.b16 %v95
  %v290 = vunpack.c.l.b16 %v96
  %v291 = vunpack.c.l.b16 %v97
  %v292 = vunpack.c.l.b16 %v98
  %v293 = vpack.c.b16 %v222, %v221
  %v294 = vpack.c.b16 %v224, %v223
  %v295 = vpack.c.b16 %v226, %v225
  %v296 = vpack.c.b16 %v228, %v227
  %v297 = vpack.c.b16 %v230, %v229
  %v298 = vpack.c.b16 %v232, %v231
  %v299 = vpack.c.b16 %v234, %v233
  %v300 = vpack.c.b16 %v236, %v235
  %v301 = vpack.c.b16 %v238, %v237
  %v302 = vpack.c.b16 %v240, %v239
  %v303 = vpack.c.b16 %v242, %v241
  %v304 = vpack.c.b16 %v244, %v243
  %v305 = vpack.c.b16 %v246, %v245
  %v306 = vpack.c.b16 %v248, %v247
  %v307 = vpack.c.b16 %v250, %v249
  %v308 = vpack.c.b16 %v252, %v251
  %v309 = vpack.c.b16 %v254, %v253
  %v310 = vpack.c.b16 %v256, %v255
  %v311 = vpack.c.b16 %v258, %v257
  %v312 = vpack.c.b16 %v260, %v259
  %v313 = vpack.c.b16 %v262, %v261
  %v314 = vpack.c.b16 %v264, %v263
  %v315 = vpack.c.b16 %v266, %v265
  %v316 = vpack.c.b16 %v268, %v267
  %v317 = vpack.c.b16 %v270, %v269
  %v318 = vpack.c.b16 %v272, %v271
  %v319 = vpack.c.b16 %v274, %v273
  %v320 = vpack.c.b16 %v276, %v275
  %v321 = vpack.c.b16 %v278, %v277
  %v322 = vpack.c.b16 %v280, %v279
  %v323 = vpack.c.b16 %v282, %v281
  %v324 = vpack.c.b16 %v284, %v283
  %v325 = vpack.c.b16 %v286, %v285
  %v326 = vpack.c.b16 %v288, %v287
  %v327 = vpack.c.b16 %v290, %v289
  %v328 = vpack.c.b16 %v292, %v291
  %vm365 = vcmask 523264
  %v367 = vsel %vm365, %v135, 0
  %v370 = vsel %vm365, %v140, 0
  %372 = vmatprep.subr.bf16.mxu0 0
  %373 = vmatpush1.bf16.msra.mxu0 %v293
  %374 = vmatprep.subr.bf16.mxu0 0
  %375 = vmatpush1.bf16.msra.mxu0 %v294
  %376 = vmatprep.subr.bf16.mxu0 0
  %377 = vmatpush1.bf16.msra.mxu0 %v295
  %378 = vmatprep.subr.bf16.mxu0 0
  %379 = vmatpush1.bf16.msra.mxu0 %v296
  %380 = vmatprep.subr.bf16.mxu0 0
  %381 = vmatpush1.bf16.msra.mxu0 %v297
  %382 = vmatprep.subr.bf16.mxu0 0
  %383 = vmatpush1.bf16.msra.mxu0 %v298
  %384 = vmatprep.subr.bf16.mxu0 0
  %385 = vmatpush1.bf16.msra.mxu0 %v299
  %386 = vmatprep.subr.bf16.mxu0 0
  %387 = vmatpush1.bf16.msra.mxu0 %v300
  %388 = vmatprep.subr.bf16.mxu0 0
  %389 = vmatpush1.bf16.msra.mxu0 %v301
  %390 = vmatprep.subr.bf16.mxu0 0
  %391 = vmatpush1.bf16.msra.mxu0 %v302
  %392 = vmatprep.subr.bf16.mxu0 0
  %393 = vmatpush1.bf16.msra.mxu0 %v303
  %394 = vmatprep.subr.bf16.mxu0 0
  %395 = vmatpush1.bf16.msra.mxu0 %v304
  %396 = vmatprep.subr.bf16.mxu0 0
  %397 = vmatpush1.bf16.msra.mxu0 %v305
  %398 = vmatprep.subr.bf16.mxu0 0
  %399 = vmatpush1.bf16.msra.mxu0 %v306
  %400 = vmatprep.subr.bf16.mxu0 0
  %401 = vmatpush1.bf16.msra.mxu0 %v307
  %402 = vmatprep.subr.bf16.mxu0 0
  %403 = vmatpush1.bf16.msra.mxu0 %v308
  %404 = vmatprep.mubr.bf16.mxu0 %v132
  %405 = vmatmul.mubr.bf16.gmra.mrb[0].mxu0 %v131
  %v406 = vpop.f32.mrb[0].mxu0
  %v407 = vadd.f32 0.0, %v406
  %v408 = vpop.f32.mrb[0].mxu0
  %v409 = vpop.f32.mrb[0].mxu0
  %v410 = vadd.f32 0.0, %v409
  %v411 = vpop.f32.mrb[0].mxu0
  %412 = vmatprep.mubr.bf16.mxu0 %v137
  %413 = vmatmul.mubr.bf16.gmra.mrb[0].mxu0 %v136
  %v414 = vpop.f32.mrb[0].mxu0
  %v415 = vadd.f32 0.0, %v414
  %v416 = vpop.f32.mrb[0].mxu0
  %v417 = vpop.f32.mrb[0].mxu0
  %v418 = vadd.f32 0.0, %v417
  %v419 = vpop.f32.mrb[0].mxu0
  %420 = vdwg.mxu0
  %421 = vmatprep.subr.bf16.mxu0 0
  %422 = vmatpush1.bf16.msra.mxu0 %v309
  %423 = vmatprep.subr.bf16.mxu0 0
  %424 = vmatpush1.bf16.msra.mxu0 %v310
  %425 = vmatprep.subr.bf16.mxu0 0
  %426 = vmatpush1.bf16.msra.mxu0 %v311
  %427 = vmatprep.subr.bf16.mxu0 0
  %428 = vmatpush1.bf16.msra.mxu0 %v312
  %429 = vmatprep.subr.bf16.mxu0 0
  %430 = vmatpush1.bf16.msra.mxu0 %v313
  %431 = vmatprep.subr.bf16.mxu0 0
  %432 = vmatpush1.bf16.msra.mxu0 %v314
  %433 = vmatprep.subr.bf16.mxu0 0
  %434 = vmatpush1.bf16.msra.mxu0 %v315
  %435 = vmatprep.subr.bf16.mxu0 0
  %436 = vmatpush1.bf16.msra.mxu0 %v316
  %437 = vmatprep.subr.bf16.mxu0 0
  %438 = vmatpush1.bf16.msra.mxu0 %v317
  %439 = vmatprep.subr.bf16.mxu0 0
  %440 = vmatpush1.bf16.msra.mxu0 %v318
  %441 = vmatprep.subr.bf16.mxu0 0
  %442 = vmatpush1.bf16.msra.mxu0 %v319
  %443 = vmatprep.subr.bf16.mxu0 0
  %444 = vmatpush1.bf16.msra.mxu0 %v320
  %445 = vmatprep.subr.bf16.mxu0 0
  %446 = vmatpush1.bf16.msra.mxu0 %v321
  %447 = vmatprep.subr.bf16.mxu0 0
  %448 = vmatpush1.bf16.msra.mxu0 %v322
  %449 = vmatprep.subr.bf16.mxu0 0
  %450 = vmatpush1.bf16.msra.mxu0 %v323
  %451 = vmatprep.subr.bf16.mxu0 0
  %452 = vmatpush1.bf16.msra.mxu0 %v324
  %453 = vmatprep.mubr.bf16.mxu0 %v134
  %454 = vmatmul.mubr.bf16.gmra.mrb[0].mxu0 %v133
  %v455 = vpop.f32.mrb[0].mxu0
  %v456 = vadd.f32 %v407, %v455
  %v457 = vpop.f32.mrb[0].mxu0
  %v458 = vpop.f32.mrb[0].mxu0
  %v459 = vadd.f32 %v410, %v458
  %v460 = vpop.f32.mrb[0].mxu0
  %461 = vmatprep.mubr.bf16.mxu0 %v139
  %462 = vmatmul.mubr.bf16.gmra.mrb[0].mxu0 %v138
  %v463 = vpop.f32.mrb[0].mxu0
  %v464 = vadd.f32 %v415, %v463
  %v465 = vpop.f32.mrb[0].mxu0
  %v466 = vpop.f32.mrb[0].mxu0
  %v467 = vadd.f32 %v418, %v466
  %v468 = vpop.f32.mrb[0].mxu0
  %469 = vdwg.mxu0
  %470 = vmatprep.subr.bf16.mxu0 0
  %471 = vmatpush1.bf16.msra.mxu0 %v325
  %472 = vmatprep.subr.bf16.mxu0 0
  %473 = vmatpush1.bf16.msra.mxu0 %v326
  %474 = vmatprep.subr.bf16.mxu0 0
  %475 = vmatpush1.bf16.msra.mxu0 %v327
  %476 = vmatprep.subr.bf16.mxu0 0
  %477 = vmatpush1.bf16.msra.mxu0 %v328
  %478 = vmatprep.subr.bf16.mxu0 0
  %479 = vmatpush1.bf16.msra.mxu0 0
  %480 = vmatprep.subr.bf16.mxu0 0
  %481 = vmatpush1.bf16.msra.mxu0 0
  %482 = vmatprep.subr.bf16.mxu0 0
  %483 = vmatpush1.bf16.msra.mxu0 0
  %484 = vmatprep.subr.bf16.mxu0 0
  %485 = vmatpush1.bf16.msra.mxu0 0
  %486 = vmatprep.subr.bf16.mxu0 0
  %487 = vmatpush1.bf16.msra.mxu0 0
  %488 = vmatprep.subr.bf16.mxu0 0
  %489 = vmatpush1.bf16.msra.mxu0 0
  %490 = vmatprep.subr.bf16.mxu0 0
  %491 = vmatpush1.bf16.msra.mxu0 0
  %492 = vmatprep.subr.bf16.mxu0 0
  %493 = vmatpush1.bf16.msra.mxu0 0
  %494 = vmatprep.subr.bf16.mxu0 0
  %495 = vmatpush1.bf16.msra.mxu0 0
  %496 = vmatprep.subr.bf16.mxu0 0
  %497 = vmatpush1.bf16.msra.mxu0 0
  %498 = vmatprep.subr.bf16.mxu0 0
  %499 = vmatpush1.bf16.msra.mxu0 0
  %500 = vmatprep.subr.bf16.mxu0 0
  %501 = vmatpush1.bf16.msra.mxu0 0
  %502 = vmatprep.mubr.bf16.mxu0 0
  %503 = vmatmul.mubr.bf16.gmra.mrb[0].mxu0 %v367
  %v504 = vpop.f32.mrb[0].mxu0
  %v505 = vadd.f32 %v456, %v504
  %v506 = vpop.f32.mrb[0].mxu0
  %v507 = vpop.f32.mrb[0].mxu0
  %v508 = vadd.f32 %v459, %v507
  %v509 = vpop.f32.mrb[0].mxu0
  %510 = vmatprep.mubr.bf16.mxu0 0
  %511 = vmatmul.mubr.bf16.gmra.mrb[0].mxu0 %v370
  %v512 = vpop.f32.mrb[0].mxu0
  %v513 = vadd.f32 %v464, %v512
  %v514 = vpop.f32.mrb[0].mxu0
  %v515 = vpop.f32.mrb[0].mxu0
  %v516 = vadd.f32 %v467, %v515
  %v517 = vpop.f32.mrb[0].mxu0
  %518 = vdwg.mxu0
  %519 = vst [vmem:[%s2] sm:$0xff] %v505
  %520 = vst [vmem:[%s2 + $0x8] sm:$0xff] %v508
  %521 = vst [vmem:[%s2 + $0x10] sm:$0xff] %v513
  %522 = vst [vmem:[%s2 + $0x18] sm:$0xff] %v516
  %p523 = scmp.eq.s32.totalorder 0, 0
  // Predicated region
  $region10: #{generator_forward.11} parent=0 // pred_check
    %p524 = pneg %p523
  $region11: #{generator_forward.11} parent=0 // pred_check_branch
    %526 = sbr.rel (%p524) target = $region13
  $region12: #{generator_forward.11} parent=0 // pred_region
    %527 = vst [vmem:[%s3] sm:$0x1] 0.0
    %528 = vst [vmem:[%s4] sm:$0x1] 0.0
  $region13: #{generator_forward.11} parent=0 // pred_fallthru
    _
  %v529 = vld [vmem:[%s3] sm:$0x1]
  %v530 = vadd.f32 %v505, %v508
  %v531 = vadd.f32 %v530, %v513
  %v532 = vadd.f32 %v531, %v516
  %v533 = vrot.slane %v532, 4
  %v534 = vadd.f32 %v532, %v533
  %v535 = vrot.slane %v534, 2
  %v536 = vadd.f32 %v534, %v535
  %v537 = vrot.slane %v536, 1
  %v538 = vadd.f32 %v536, %v537
  %v539 = vadd.f32 %v529, %v538
  %540 = vst [vmem:[%s3] sm:$0x1] %v539
  %v541 = vld [vmem:[%s4] sm:$0x1]
  %v542 = vmul.f32 %v505, %v505
  %v543 = vmul.f32 %v508, %v508
  %v544 = vmul.f32 %v513, %v513
  %v545 = vmul.f32 %v516, %v516
  %v546 = vadd.f32 %v542, %v543
  %v547 = vadd.f32 %v546, %v544
  %v548 = vadd.f32 %v547, %v545
  %v549 = vrot.slane %v548, 4
  %v550 = vadd.f32 %v548, %v549
  %v551 = vrot.slane %v550, 2
  %v552 = vadd.f32 %v550, %v551
  %v553 = vrot.slane %v552, 1
  %v554 = vadd.f32 %v552, %v553
  %v555 = vadd.f32 %v541, %v554
  %556 = vst [vmem:[%s4] sm:$0x1] %v555
  // Predicated region
  $region14: #{generator_forward.11} parent=0 // pred_check
    _
  $region15: #{generator_forward.11} parent=0 // pred_check_branch
    %558 = sbr.rel (0) target = $region17
  $region16: #{generator_forward.11} parent=0 // pred_region
    _
  $region17: #{generator_forward.11} parent=0 // pred_fallthru
    _
  // Predicated region
  $region18: #{generator_forward.11} parent=0 // pred_check
    _
  $region19: #{generator_forward.11} parent=0 // pred_check_branch
    %560 = sbr.rel (0) target = $region21
  $region20: #{generator_forward.11} parent=0 // pred_region
    _
  $region21: #{generator_forward.11} parent=0 // pred_fallthru
    _
  // Predicated region
  $region22: #{generator_forward.11} parent=0 // pred_check
    _
  $region23: #{generator_forward.11} parent=0 // pred_check_branch
    %562 = sbr.rel (0) target = $region25
  $region24: #{generator_forward.11} parent=0 // pred_region
    _
  $region25: #{generator_forward.11} parent=0 // pred_fallthru
    _
  // Predicated region
  $region26: #{generator_forward.11} parent=0 // pred_check
    _
  $region27: #{generator_forward.11} parent=0 // pred_check_branch
    %564 = sbr.rel (0) target = $region29
  $region28: #{generator_forward.11} parent=0 // pred_region
    _
  $region29: #{generator_forward.11} parent=0 // pred_fallthru
    _
  // Predicated region
  $region30: #{generator_forward.11} parent=0 // pred_check
    _
  $region31: #{generator_forward.11} parent=0 // pred_check_branch
    %566 = sbr.rel (0) target = $region33
  $region32: #{generator_forward.11} parent=0 // pred_region
    _
  $region33: #{generator_forward.11} parent=0 // pred_fallthru
    _
  // Predicated region
  $region34: #{generator_forward.11} parent=0 // pred_check
    _
  $region35: #{generator_forward.11} parent=0 // pred_check_branch
    %568 = sbr.rel (0) target = $region37
  $region36: #{generator_forward.11} parent=0 // pred_region
    _
  $region37: #{generator_forward.11} parent=0 // pred_fallthru
    _

// kernel: tile.58
$region0: #{tile.58}
  #allocation0 [shape = 's32[1]{0}', space=sflag, size = 0x4, scoped, tag = 'scoped memory for tile.58']
  %s0 = inlined_call_operand.vmem [shape: f32[32], index: 0, kind: input, shape index: {}]
  %s1 = inlined_call_operand.vmem [shape: f32[8,32], index: 1, kind: output, shape index: {}]
  // Predicated region
  $region2: #{tile.58} parent=0 // pred_check
    _
  $region3: #{tile.58} parent=0 // pred_check_branch
    %3 = sbr.rel (0) target = $region5
  $region4: #{tile.58} parent=0 // pred_region
    _
  $region5: #{tile.58} parent=0 // pred_fallthru
    _
  %v4 = vld [vmem:[%s0] ss:$0 sm:$0xff]
  %5 = vst [vmem:[%s1] sm:$0xff] %v4

// kernel: tile.59
$region0: #{tile.59}
  %s0 = inlined_call_operand.vmem [shape: f32[8,32], index: 0, kind: input, shape index: {}]
  %s1 = inlined_call_operand.vmem [shape: f32[1,256], index: 1, kind: output, shape index: {}]
  $region1: #{tile.59} parent=0
    #allocation0 [shape = 'u8[8192]{0}', space=vmem, size = 0x2000, scoped, tag = 'scoped mem for output reshape']
    %s2 = smov 3
    %v3 = vld [vmem:[%s0] ss:$4 sm:%s2]
    %vm4 = vcmask 261120
    %5 = vst.msk [vmem:[#allocation0] ss:$8 sm:$0x3] %vm4, %v3
    %s6 = scalar_lea.vmem %s0, 3
    %s7 = smov 3
    %v8 = vld [vmem:[%s6] ss:$4 sm:%s7]
    %9 = vrot.lane.b32.xlu0 %v8, 96
    %v10 = vpop.permute.xlu0 %9
    %vm11 = vcmask 1048320
    %12 = vst.msk [vmem:[#allocation0] ss:$8 sm:$0x3] %vm11, %v10
    %s13 = scalar_lea.vmem %s0, 2
    %s14 = smov 3
    %v15 = vld [vmem:[%s13] ss:$4 sm:%s14]
    %16 = vrot.lane.b32.xlu0 %v15, 64
    %v17 = vpop.permute.xlu0 %16
    %vm18 = vcmask 785920
    %19 = vst.msk [vmem:[#allocation0] ss:$8 sm:$0x3] %vm18, %v17
    %s20 = scalar_lea.vmem %s0, 1
    %s21 = smov 3
    %v22 = vld [vmem:[%s20] ss:$4 sm:%s21]
    %23 = vrot.lane.b32.xlu0 %v22, 32
    %v24 = vpop.permute.xlu0 %23
    %vm25 = vcmask 523520
    %26 = vst.msk [vmem:[#allocation0] ss:$8 sm:$0x3] %vm25, %v24
    %s28 = sshllo.u32 0, 1
    %v30 = vld [vmem:[#allocation0] sm:%s28]
    %s31 = sshllo.u32 0, 1
    %32 = vst [vmem:[%s1] sm:%s31] %v30
    %s33 = scalar_lea.vmem [#allocation0], 8
    %v34 = vld [vmem:[%s33] sm:%s28]
    %s35 = sshllo.u32 0, 1
    %s36 = scalar_lea.vmem %s1, 1
    %37 = vst [vmem:[%s36] sm:%s35] %v34

// kernel: generator_forward.12
$region0: #{generator_forward.12}
  #allocation0 [shape = 'u32[]', space=smem, size = 0x4, offset = 0x4, fixed_abs, tag = 'smem constant byte address 0x4 - core index']
  #allocation1 [shape = 'u32[144,128]{1,0:T(1,128)}', space=vmem, size = 0x12000, scoped, tag = 'internal scratch']
  %s0 = inlined_call_operand.vmem [shape: f32[16,256], index: 0, kind: input, shape index: {}]
  %s1 = inlined_call_operand.vmem [shape: f32[1,256], index: 1, kind: input, shape index: {}]
  %s2 = inlined_call_operand.vmem [shape: f32[1,256], index: 2, kind: input, shape index: {}]
  %s3 = inlined_call_operand.vmem [shape: f32[16,256], index: 3, kind: output, shape index: {}]
  %s4 = sld [smem:[#allocation0]]
  $region22: #{generator_forward.12} parent=0
    _
  %s6 = ssub.s32 1, %s4
  %s7 = scalar_select 0, %s6, %s4
  // Predicated region
  $region2: #{generator_forward.12} parent=0 // pred_check
    _
  $region3: #{generator_forward.12} parent=0 // pred_check_branch
    %9 = sbr.rel (0) target = $region5
  $region4: #{generator_forward.12} parent=0 // pred_region
    _
  $region5: #{generator_forward.12} parent=0 // pred_fallthru
    _
  // Predicated region
  $region6: #{generator_forward.12} parent=0 // pred_check
    _
  $region7: #{generator_forward.12} parent=0 // pred_check_branch
    %11 = sbr.rel (0) target = $region9
  $region8: #{generator_forward.12} parent=0 // pred_region
    _
  $region9: #{generator_forward.12} parent=0 // pred_fallthru
    _
  // Predicated region
  $region10: #{generator_forward.12} parent=0 // pred_check
    _
  $region11: #{generator_forward.12} parent=0 // pred_check_branch
    %13 = sbr.rel (0) target = $region13
  $region12: #{generator_forward.12} parent=0 // pred_region
    _
  $region13: #{generator_forward.12} parent=0 // pred_fallthru
    _
  %v14 = vld [vmem:[%s0] sm:$0xff]
  %v15 = vld [vmem:[%s0 + $0x8] sm:$0xff]
  %v16 = vld [vmem:[%s0 + $0x10] sm:$0xff]
  %v17 = vld [vmem:[%s0 + $0x18] sm:$0xff]
  %v18 = vld [vmem:[%s1] sm:$0x3]
  %v20 = vlaneseq
  %v21 = vshrl.u32 %v20, 7
  %v22 = vsub.s32 0, %v21
  %v23 = vrot.slane %v18, %v22
  %v24 = vlaneseq
  %v25 = vshrl.u32 %v24, 7
  %v26 = vsub.s32 1, %v25
  %v27 = vrot.slane %v18, %v26
  %v30 = vmul.f32 %v14, %v23
  %v31 = vmul.f32 %v15, %v27
  %v32 = vmul.f32 %v16, %v23
  %v33 = vmul.f32 %v17, %v27
  %v34 = vld [vmem:[%s2] sm:$0x3]
  %v36 = vlaneseq
  %v37 = vshrl.u32 %v36, 7
  %v38 = vsub.s32 0, %v37
  %v39 = vrot.slane %v34, %v38
  %v40 = vlaneseq
  %v41 = vshrl.u32 %v40, 7
  %v42 = vsub.s32 1, %v41
  %v43 = vrot.slane %v34, %v42
  %v46 = vadd.f32 %v30, %v39
  %v47 = vadd.f32 %v31, %v43
  %v48 = vadd.f32 %v32, %v39
  %v49 = vadd.f32 %v33, %v43
  %v50 = vmax.f32 %v46, 0.0
  %v51 = vmax.f32 %v47, 0.0
  %v52 = vmax.f32 %v48, 0.0
  %v53 = vmax.f32 %v49, 0.0
  %54 = vst [vmem:[%s3] sm:$0xff] %v50
  %55 = vst [vmem:[%s3 + $0x8] sm:$0xff] %v51
  %56 = vst [vmem:[%s3 + $0x10] sm:$0xff] %v52
  %57 = vst [vmem:[%s3 + $0x18] sm:$0xff] %v53
  // Predicated region
  $region14: #{generator_forward.12} parent=0 // pred_check
    _
  $region15: #{generator_forward.12} parent=0 // pred_check_branch
    %59 = sbr.rel (0) target = $region17
  $region16: #{generator_forward.12} parent=0 // pred_region
    _
  $region17: #{generator_forward.12} parent=0 // pred_fallthru
    _
  // Predicated region
  $region18: #{generator_forward.12} parent=0 // pred_check
    _
  $region19: #{generator_forward.12} parent=0 // pred_check_branch
    %61 = sbr.rel (0) target = $region21
  $region20: #{generator_forward.12} parent=0 // pred_region
    _
  $region21: #{generator_forward.12} parent=0 // pred_fallthru
    _

// kernel: generator_forward.13
$region0: #{generator_forward.13}
  #allocation0 [shape = 'u32[]', space=smem, size = 0x4, offset = 0x4, fixed_abs, tag = 'smem constant byte address 0x4 - core index']
  #allocation1 [shape = 'u32[144,128]{1,0:T(1,128)}', space=vmem, size = 0x12000, scoped, tag = 'internal scratch']
  %s0 = inlined_call_operand.vmem [shape: bf16[128,288], index: 0, kind: input, shape index: {}]
  %s1 = inlined_call_operand.vmem [shape: bf16[288,64], index: 1, kind: input, shape index: {}]
  %s2 = inlined_call_operand.vmem [shape: f32[128,64], index: 2, kind: output, shape index: {0}]
  %s3 = inlined_call_operand.vmem [shape: f32[1,64], index: 3, kind: output, shape index: {1}]
  %s4 = inlined_call_operand.vmem [shape: f32[1,64], index: 4, kind: output, shape index: {2}]
  %5 = xla_tuple %s2, %s3, %s4
  %s6 = sld [smem:[#allocation0]]
  $region38: #{generator_forward.13} parent=0
    _
  %s8 = ssub.s32 1, %s6
  %s9 = scalar_select 0, %s8, %s6
  // Predicated region
  $region2: #{generator_forward.13} parent=0 // pred_check
    _
  $region3: #{generator_forward.13} parent=0 // pred_check_branch
    %11 = sbr.rel (0) target = $region5
  $region4: #{generator_forward.13} parent=0 // pred_region
    _
  $region5: #{generator_forward.13} parent=0 // pred_fallthru
    _
  // Predicated region
  $region6: #{generator_forward.13} parent=0 // pred_check
    _
  $region7: #{generator_forward.13} parent=0 // pred_check_branch
    %13 = sbr.rel (0) target = $region9
  $region8: #{generator_forward.13} parent=0 // pred_region
    _
  $region9: #{generator_forward.13} parent=0 // pred_fallthru
    _
  %v15 = vld [vmem:[%s0] sm:$0xff]
  %v16 = vld [vmem:[%s0 + $0x8] sm:$0xf]
  %v17 = vld [vmem:[%s0 + $0xc] sm:$0xff]
  %v18 = vld [vmem:[%s0 + $0x14] sm:$0xf]
  %v19 = vld [vmem:[%s0 + $0x18] sm:$0xff]
  %v20 = vld [vmem:[%s0 + $0x20] sm:$0xf]
  %v21 = vld [vmem:[%s0 + $0x24] sm:$0xff]
  %v22 = vld [vmem:[%s0 + $0x2c] sm:$0xf]
  %v23 = vld [vmem:[%s0 + $0x30] sm:$0xff]
  %v24 = vld [vmem:[%s0 + $0x38] sm:$0xf]
  %v25 = vld [vmem:[%s0 + $0x3c] sm:$0xff]
  %v26 = vld [vmem:[%s0 + $0x44] sm:$0xf]
  %v27 = vld [vmem:[%s0 + $0x48] sm:$0xff]
  %v28 = vld [vmem:[%s0 + $0x50] sm:$0xf]
  %v29 = vld [vmem:[%s0 + $0x54] sm:$0xff]
  %v30 = vld [vmem:[%s0 + $0x5c] sm:$0xf]
  %v31 = vld [vmem:[%s0 + $0x60] sm:$0xff]
  %v32 = vld [vmem:[%s0 + $0x68] sm:$0xf]
  %v33 = vld [vmem:[%s0 + $0x6c] sm:$0xff]
  %v34 = vld [vmem:[%s0 + $0x74] sm:$0xf]
  %v35 = vld [vmem:[%s0 + $0x78] sm:$0xff]
  %v36 = vld [vmem:[%s0 + $0x80] sm:$0xf]
  %v37 = vld [vmem:[%s0 + $0x84] sm:$0xff]
  %v38 = vld [vmem:[%s0 + $0x8c] sm:$0xf]
  %v39 = vld [vmem:[%s0 + $0x90] sm:$0xff]
  %v40 = vld [vmem:[%s0 + $0x98] sm:$0xf]
  %v41 = vld [vmem:[%s0 + $0x9c] sm:$0xff]
  %v42 = vld [vmem:[%s0 + $0xa4] sm:$0xf]
  %v43 = vld [vmem:[%s0 + $0xa8] sm:$0xff]
  %v44 = vld [vmem:[%s0 + $0xb0] sm:$0xf]
  %v45 = vld [vmem:[%s0 + $0xb4] sm:$0xff]
  %v46 = vld [vmem:[%s0 + $0xbc] sm:$0xf]
  %v47 = vld [vmem:[%s1] sm:$0xf]
  %v48 = vld [vmem:[%s1 + $0x4] sm:$0xf]
  %v49 = vld [vmem:[%s1 + $0x8] sm:$0xf]
  %v50 = vld [vmem:[%s1 + $0xc] sm:$0xf]
  %v51 = vld [vmem:[%s1 + $0x10] sm:$0xf]
  %v52 = vld [vmem:[%s1 + $0x14] sm:$0xf]
  %v53 = vld [vmem:[%s1 + $0x18] sm:$0xf]
  %v54 = vld [vmem:[%s1 + $0x1c] sm:$0xf]
  %v55 = vld [vmem:[%s1 + $0x20] sm:$0xf]
  %v56 = vld [vmem:[%s1 + $0x24] sm:$0xf]
  %v57 = vld [vmem:[%s1 + $0x28] sm:$0xf]
  %v58 = vld [vmem:[%s1 + $0x2c] sm:$0xf]
  %v59 = vld [vmem:[%s1 + $0x30] sm:$0xf]
  %v60 = vld [vmem:[%s1 + $0x34] sm:$0xf]
  %v61 = vld [vmem:[%s1 + $0x38] sm:$0xf]
  %v62 = vld [vmem:[%s1 + $0x3c] sm:$0xf]
  %v63 = vld [vmem:[%s1 + $0x40] sm:$0xf]
  %v64 = vld [vmem:[%s1 + $0x44] sm:$0xf]
  %v65 = vld [vmem:[%s1 + $0x48] sm:$0xf]
  %v66 = vld [vmem:[%s1 + $0x4c] sm:$0xf]
  %v67 = vld [vmem:[%s1 + $0x50] sm:$0xf]
  %v68 = vld [vmem:[%s1 + $0x54] sm:$0xf]
  %v69 = vld [vmem:[%s1 + $0x58] sm:$0xf]
  %v70 = vld [vmem:[%s1 + $0x5c] sm:$0xf]
  %v71 = vld [vmem:[%s1 + $0x60] sm:$0xf]
  %v72 = vld [vmem:[%s1 + $0x64] sm:$0xf]
  %v73 = vld [vmem:[%s1 + $0x68] sm:$0xf]
  %v74 = vld [vmem:[%s1 + $0x6c] sm:$0xf]
  %v75 = vld [vmem:[%s1 + $0x70] sm:$0xf]
  %v76 = vld [vmem:[%s1 + $0x74] sm:$0xf]
  %v77 = vld [vmem:[%s1 + $0x78] sm:$0xf]
  %v78 = vld [vmem:[%s1 + $0x7c] sm:$0xf]
  %v79 = vld [vmem:[%s1 + $0x80] sm:$0xf]
  %v80 = vld [vmem:[%s1 + $0x84] sm:$0xf]
  %v81 = vld [vmem:[%s1 + $0x88] sm:$0xf]
  %v82 = vld [vmem:[%s1 + $0x8c] sm:$0xf]
  %v115 = vunpack.c.l.b16 %v15
  %v116 = vunpack.c.h.b16 %v15
  %v117 = vunpack.c.l.b16 %v16
  %v118 = vunpack.c.l.b16 %v17
  %v119 = vunpack.c.h.b16 %v17
  %v120 = vunpack.c.l.b16 %v18
  %v121 = vunpack.c.l.b16 %v19
  %v122 = vunpack.c.h.b16 %v19
  %v123 = vunpack.c.l.b16 %v20
  %v124 = vunpack.c.l.b16 %v21
  %v125 = vunpack.c.h.b16 %v21
  %v126 = vunpack.c.l.b16 %v22
  %v127 = vunpack.c.l.b16 %v23
  %v128 = vunpack.c.h.b16 %v23
  %v129 = vunpack.c.l.b16 %v24
  %v130 = vunpack.c.l.b16 %v25
  %v131 = vunpack.c.h.b16 %v25
  %v132 = vunpack.c.l.b16 %v26
  %v133 = vunpack.c.l.b16 %v27
  %v134 = vunpack.c.h.b16 %v27
  %v135 = vunpack.c.l.b16 %v28
  %v136 = vunpack.c.l.b16 %v29
  %v137 = vunpack.c.h.b16 %v29
  %v138 = vunpack.c.l.b16 %v30
  %v139 = vunpack.c.l.b16 %v31
  %v140 = vunpack.c.h.b16 %v31
  %v141 = vunpack.c.l.b16 %v32
  %v142 = vunpack.c.l.b16 %v33
  %v143 = vunpack.c.h.b16 %v33
  %v144 = vunpack.c.l.b16 %v34
  %v145 = vunpack.c.l.b16 %v35
  %v146 = vunpack.c.h.b16 %v35
  %v147 = vunpack.c.l.b16 %v36
  %v148 = vunpack.c.l.b16 %v37
  %v149 = vunpack.c.h.b16 %v37
  %v150 = vunpack.c.l.b16 %v38
  %v151 = vunpack.c.l.b16 %v39
  %v152 = vunpack.c.h.b16 %v39
  %v153 = vunpack.c.l.b16 %v40
  %v154 = vunpack.c.l.b16 %v41
  %v155 = vunpack.c.h.b16 %v41
  %v156 = vunpack.c.l.b16 %v42
  %v157 = vunpack.c.l.b16 %v43
  %v158 = vunpack.c.h.b16 %v43
  %v159 = vunpack.c.l.b16 %v44
  %v160 = vunpack.c.l.b16 %v45
  %v161 = vunpack.c.h.b16 %v45
  %v162 = vunpack.c.l.b16 %v46
  %v163 = vpack.c.b16 %v118, %v115
  %v164 = vpack.c.b16 %v119, %v116
  %v165 = vpack.c.b16 %v120, %v117
  %v166 = vpack.c.b16 %v124, %v121
  %v167 = vpack.c.b16 %v125, %v122
  %v168 = vpack.c.b16 %v126, %v123
  %v169 = vpack.c.b16 %v130, %v127
  %v170 = vpack.c.b16 %v131, %v128
  %v171 = vpack.c.b16 %v132, %v129
  %v172 = vpack.c.b16 %v136, %v133
  %v173 = vpack.c.b16 %v137, %v134
  %v174 = vpack.c.b16 %v138, %v135
  %v175 = vpack.c.b16 %v142, %v139
  %v176 = vpack.c.b16 %v143, %v140
  %v177 = vpack.c.b16 %v144, %v141
  %v178 = vpack.c.b16 %v148, %v145
  %v179 = vpack.c.b16 %v149, %v146
  %v180 = vpack.c.b16 %v150, %v147
  %v181 = vpack.c.b16 %v154, %v151
  %v182 = vpack.c.b16 %v155, %v152
  %v183 = vpack.c.b16 %v156, %v153
  %v184 = vpack.c.b16 %v160, %v157
  %v185 = vpack.c.b16 %v161, %v158
  %v186 = vpack.c.b16 %v162, %v159
  %v239 = vunpack.c.l.b16 %v47
  %v240 = vunpack.c.l.b16 %v48
  %v241 = vunpack.c.l.b16 %v49
  %v242 = vunpack.c.l.b16 %v50
  %v243 = vunpack.c.l.b16 %v51
  %v244 = vunpack.c.l.b16 %v52
  %v245 = vunpack.c.l.b16 %v53
  %v246 = vunpack.c.l.b16 %v54
  %v247 = vunpack.c.l.b16 %v55
  %v248 = vunpack.c.l.b16 %v56
  %v249 = vunpack.c.l.b16 %v57
  %v250 = vunpack.c.l.b16 %v58
  %v251 = vunpack.c.l.b16 %v59
  %v252 = vunpack.c.l.b16 %v60
  %v253 = vunpack.c.l.b16 %v61
  %v254 = vunpack.c.l.b16 %v62
  %v255 = vunpack.c.l.b16 %v63
  %v256 = vunpack.c.l.b16 %v64
  %v257 = vunpack.c.l.b16 %v65
  %v258 = vunpack.c.l.b16 %v66
  %v259 = vunpack.c.l.b16 %v67
  %v260 = vunpack.c.l.b16 %v68
  %v261 = vunpack.c.l.b16 %v69
  %v262 = vunpack.c.l.b16 %v70
  %v263 = vunpack.c.l.b16 %v71
  %v264 = vunpack.c.l.b16 %v72
  %v265 = vunpack.c.l.b16 %v73
  %v266 = vunpack.c.l.b16 %v74
  %v267 = vunpack.c.l.b16 %v75
  %v268 = vunpack.c.l.b16 %v76
  %v269 = vunpack.c.l.b16 %v77
  %v270 = vunpack.c.l.b16 %v78
  %v271 = vunpack.c.l.b16 %v79
  %v272 = vunpack.c.l.b16 %v80
  %v273 = vunpack.c.l.b16 %v81
  %v274 = vunpack.c.l.b16 %v82
  %v275 = vpack.c.b16 %v240, %v239
  %v276 = vpack.c.b16 %v242, %v241
  %v277 = vpack.c.b16 %v244, %v243
  %v278 = vpack.c.b16 %v246, %v245
  %v279 = vpack.c.b16 %v248, %v247
  %v280 = vpack.c.b16 %v250, %v249
  %v281 = vpack.c.b16 %v252, %v251
  %v282 = vpack.c.b16 %v254, %v253
  %v283 = vpack.c.b16 %v256, %v255
  %v284 = vpack.c.b16 %v258, %v257
  %v285 = vpack.c.b16 %v260, %v259
  %v286 = vpack.c.b16 %v262, %v261
  %v287 = vpack.c.b16 %v264, %v263
  %v288 = vpack.c.b16 %v266, %v265
  %v289 = vpack.c.b16 %v268, %v267
  %v290 = vpack.c.b16 %v270, %v269
  %v291 = vpack.c.b16 %v272, %v271
  %v292 = vpack.c.b16 %v274, %v273
  %vm311 = vcmask 261120
  %v313 = vsel %vm311, %v165, 0
  %v316 = vsel %vm311, %v168, 0
  %v319 = vsel %vm311, %v171, 0
  %v322 = vsel %vm311, %v174, 0
  %v325 = vsel %vm311, %v177, 0
  %v328 = vsel %vm311, %v180, 0
  %v331 = vsel %vm311, %v183, 0
  %v334 = vsel %vm311, %v186, 0
  %336 = vmatprep.subr.bf16.mxu0 0
  %337 = vmatpush1.bf16.msra.mxu0 %v275
  %338 = vmatprep.subr.bf16.mxu0 0
  %339 = vmatpush1.bf16.msra.mxu0 %v276
  %340 = vmatprep.subr.bf16.mxu0 0
  %341 = vmatpush1.bf16.msra.mxu0 %v277
  %342 = vmatprep.subr.bf16.mxu0 0
  %343 = vmatpush1.bf16.msra.mxu0 %v278
  %344 = vmatprep.subr.bf16.mxu0 0
  %345 = vmatpush1.bf16.msra.mxu0 %v279
  %346 = vmatprep.subr.bf16.mxu0 0
  %347 = vmatpush1.bf16.msra.mxu0 %v280
  %348 = vmatprep.subr.bf16.mxu0 0
  %349 = vmatpush1.bf16.msra.mxu0 %v281
  %350 = vmatprep.subr.bf16.mxu0 0
  %351 = vmatpush1.bf16.msra.mxu0 %v282
  %352 = vmatprep.subr.bf16.mxu0 0
  %353 = vmatpush1.bf16.msra.mxu0 %v283
  %354 = vmatprep.subr.bf16.mxu0 0
  %355 = vmatpush1.bf16.msra.mxu0 %v284
  %356 = vmatprep.subr.bf16.mxu0 0
  %357 = vmatpush1.bf16.msra.mxu0 %v285
  %358 = vmatprep.subr.bf16.mxu0 0
  %359 = vmatpush1.bf16.msra.mxu0 %v286
  %360 = vmatprep.subr.bf16.mxu0 0
  %361 = vmatpush1.bf16.msra.mxu0 %v287
  %362 = vmatprep.subr.bf16.mxu0 0
  %363 = vmatpush1.bf16.msra.mxu0 %v288
  %364 = vmatprep.subr.bf16.mxu0 0
  %365 = vmatpush1.bf16.msra.mxu0 %v289
  %366 = vmatprep.subr.bf16.mxu0 0
  %367 = vmatpush1.bf16.msra.mxu0 %v290
  %368 = vmatprep.mubr.bf16.mxu0 %v164
  %369 = vmatmul.mubr.bf16.gmra.mrb[0].mxu0 %v163
  %v370 = vpop.f32.mrb[0].mxu0
  %v371 = vadd.f32 0.0, %v370
  %v372 = vpop.f32.mrb[0].mxu0
  %v373 = vpop.f32.mrb[0].mxu0
  %v374 = vadd.f32 0.0, %v373
  %v375 = vpop.f32.mrb[0].mxu0
  %376 = vmatprep.mubr.bf16.mxu0 %v167
  %377 = vmatmul.mubr.bf16.gmra.mrb[0].mxu0 %v166
  %v378 = vpop.f32.mrb[0].mxu0
  %v379 = vadd.f32 0.0, %v378
  %v380 = vpop.f32.mrb[0].mxu0
  %v381 = vpop.f32.mrb[0].mxu0
  %v382 = vadd.f32 0.0, %v381
  %v383 = vpop.f32.mrb[0].mxu0
  %384 = vmatprep.mubr.bf16.mxu0 %v170
  %385 = vmatmul.mubr.bf16.gmra.mrb[0].mxu0 %v169
  %v386 = vpop.f32.mrb[0].mxu0
  %v387 = vadd.f32 0.0, %v386
  %v388 = vpop.f32.mrb[0].mxu0
  %v389 = vpop.f32.mrb[0].mxu0
  %v390 = vadd.f32 0.0, %v389
  %v391 = vpop.f32.mrb[0].mxu0
  %392 = vmatprep.mubr.bf16.mxu0 %v173
  %393 = vmatmul.mubr.bf16.gmra.mrb[0].mxu0 %v172
  %v394 = vpop.f32.mrb[0].mxu0
  %v395 = vadd.f32 0.0, %v394
  %v396 = vpop.f32.mrb[0].mxu0
  %v397 = vpop.f32.mrb[0].mxu0
  %v398 = vadd.f32 0.0, %v397
  %v399 = vpop.f32.mrb[0].mxu0
  %400 = vmatprep.mubr.bf16.mxu0 %v176
  %401 = vmatmul.mubr.bf16.gmra.mrb[0].mxu0 %v175
  %v402 = vpop.f32.mrb[0].mxu0
  %v403 = vadd.f32 0.0, %v402
  %v404 = vpop.f32.mrb[0].mxu0
  %v405 = vpop.f32.mrb[0].mxu0
  %v406 = vadd.f32 0.0, %v405
  %v407 = vpop.f32.mrb[0].mxu0
  %408 = vmatprep.mubr.bf16.mxu0 %v179
  %409 = vmatmul.mubr.bf16.gmra.mrb[0].mxu0 %v178
  %v410 = vpop.f32.mrb[0].mxu0
  %v411 = vadd.f32 0.0, %v410
  %v412 = vpop.f32.mrb[0].mxu0
  %v413 = vpop.f32.mrb[0].mxu0
  %v414 = vadd.f32 0.0, %v413
  %v415 = vpop.f32.mrb[0].mxu0
  %416 = vmatprep.mubr.bf16.mxu0 %v182
  %417 = vmatmul.mubr.bf16.gmra.mrb[0].mxu0 %v181
  %v418 = vpop.f32.mrb[0].mxu0
  %v419 = vadd.f32 0.0, %v418
  %v420 = vpop.f32.mrb[0].mxu0
  %v421 = vpop.f32.mrb[0].mxu0
  %v422 = vadd.f32 0.0, %v421
  %v423 = vpop.f32.mrb[0].mxu0
  %424 = vmatprep.mubr.bf16.mxu0 %v185
  %425 = vmatmul.mubr.bf16.gmra.mrb[0].mxu0 %v184
  %v426 = vpop.f32.mrb[0].mxu0
  %v427 = vadd.f32 0.0, %v426
  %v428 = vpop.f32.mrb[0].mxu0
  %v429 = vpop.f32.mrb[0].mxu0
  %v430 = vadd.f32 0.0, %v429
  %v431 = vpop.f32.mrb[0].mxu0
  %432 = vdwg.mxu0
  %433 = vmatprep.subr.bf16.mxu0 0
  %434 = vmatpush1.bf16.msra.mxu0 %v291
  %435 = vmatprep.subr.bf16.mxu0 0
  %436 = vmatpush1.bf16.msra.mxu0 %v292
  %437 = vmatprep.subr.bf16.mxu0 0
  %438 = vmatpush1.bf16.msra.mxu0 0
  %439 = vmatprep.subr.bf16.mxu0 0
  %440 = vmatpush1.bf16.msra.mxu0 0
  %441 = vmatprep.subr.bf16.mxu0 0
  %442 = vmatpush1.bf16.msra.mxu0 0
  %443 = vmatprep.subr.bf16.mxu0 0
  %444 = vmatpush1.bf16.msra.mxu0 0
  %445 = vmatprep.subr.bf16.mxu0 0
  %446 = vmatpush1.bf16.msra.mxu0 0
  %447 = vmatprep.subr.bf16.mxu0 0
  %448 = vmatpush1.bf16.msra.mxu0 0
  %449 = vmatprep.subr.bf16.mxu0 0
  %450 = vmatpush1.bf16.msra.mxu0 0
  %451 = vmatprep.subr.bf16.mxu0 0
  %452 = vmatpush1.bf16.msra.mxu0 0
  %453 = vmatprep.subr.bf16.mxu0 0
  %454 = vmatpush1.bf16.msra.mxu0 0
  %455 = vmatprep.subr.bf16.mxu0 0
  %456 = vmatpush1.bf16.msra.mxu0 0
  %457 = vmatprep.subr.bf16.mxu0 0
  %458 = vmatpush1.bf16.msra.mxu0 0
  %459 = vmatprep.subr.bf16.mxu0 0
  %460 = vmatpush1.bf16.msra.mxu0 0
  %461 = vmatprep.subr.bf16.mxu0 0
  %462 = vmatpush1.bf16.msra.mxu0 0
  %463 = vmatprep.subr.bf16.mxu0 0
  %464 = vmatpush1.bf16.msra.mxu0 0
  %465 = vmatprep.mubr.bf16.mxu0 0
  %466 = vmatmul.mubr.bf16.gmra.mrb[0].mxu0 %v313
  %v467 = vpop.f32.mrb[0].mxu0
  %v468 = vadd.f32 %v371, %v467
  %v469 = vpop.f32.mrb[0].mxu0
  %v470 = vpop.f32.mrb[0].mxu0
  %v471 = vadd.f32 %v374, %v470
  %v472 = vpop.f32.mrb[0].mxu0
  %473 = vmatprep.mubr.bf16.mxu0 0
  %474 = vmatmul.mubr.bf16.gmra.mrb[0].mxu0 %v316
  %v475 = vpop.f32.mrb[0].mxu0
  %v476 = vadd.f32 %v379, %v475
  %v477 = vpop.f32.mrb[0].mxu0
  %v478 = vpop.f32.mrb[0].mxu0
  %v479 = vadd.f32 %v382, %v478
  %v480 = vpop.f32.mrb[0].mxu0
  %481 = vmatprep.mubr.bf16.mxu0 0
  %482 = vmatmul.mubr.bf16.gmra.mrb[0].mxu0 %v319
  %v483 = vpop.f32.mrb[0].mxu0
  %v484 = vadd.f32 %v387, %v483
  %v485 = vpop.f32.mrb[0].mxu0
  %v486 = vpop.f32.mrb[0].mxu0
  %v487 = vadd.f32 %v390, %v486
  %v488 = vpop.f32.mrb[0].mxu0
  %489 = vmatprep.mubr.bf16.mxu0 0
  %490 = vmatmul.mubr.bf16.gmra.mrb[0].mxu0 %v322
  %v491 = vpop.f32.mrb[0].mxu0
  %v492 = vadd.f32 %v395, %v491
  %v493 = vpop.f32.mrb[0].mxu0
  %v494 = vpop.f32.mrb[0].mxu0
  %v495 = vadd.f32 %v398, %v494
  %v496 = vpop.f32.mrb[0].mxu0
  %497 = vmatprep.mubr.bf16.mxu0 0
  %498 = vmatmul.mubr.bf16.gmra.mrb[0].mxu0 %v325
  %v499 = vpop.f32.mrb[0].mxu0
  %v500 = vadd.f32 %v403, %v499
  %v501 = vpop.f32.mrb[0].mxu0
  %v502 = vpop.f32.mrb[0].mxu0
  %v503 = vadd.f32 %v406, %v502
  %v504 = vpop.f32.mrb[0].mxu0
  %505 = vmatprep.mubr.bf16.mxu0 0
  %506 = vmatmul.mubr.bf16.gmra.mrb[0].mxu0 %v328
  %v507 = vpop.f32.mrb[0].mxu0
  %v508 = vadd.f32 %v411, %v507
  %v509 = vpop.f32.mrb[0].mxu0
  %v510 = vpop.f32.mrb[0].mxu0
  %v511 = vadd.f32 %v414, %v510
  %v512 = vpop.f32.mrb[0].mxu0
  %513 = vmatprep.mubr.bf16.mxu0 0
  %514 = vmatmul.mubr.bf16.gmra.mrb[0].mxu0 %v331
  %v515 = vpop.f32.mrb[0].mxu0
  %v516 = vadd.f32 %v419, %v515
  %v517 = vpop.f32.mrb[0].mxu0
  %v518 = vpop.f32.mrb[0].mxu0
  %v519 = vadd.f32 %v422, %v518
  %v520 = vpop.f32.mrb[0].mxu0
  %521 = vmatprep.mubr.bf16.mxu0 0
  %522 = vmatmul.mubr.bf16.gmra.mrb[0].mxu0 %v334
  %v523 = vpop.f32.mrb[0].mxu0
  %v524 = vadd.f32 %v427, %v523
  %v525 = vpop.f32.mrb[0].mxu0
  %v526 = vpop.f32.mrb[0].mxu0
  %v527 = vadd.f32 %v430, %v526
  %v528 = vpop.f32.mrb[0].mxu0
  %529 = vdwg.mxu0
  %vm530 = vcmask 523264
  %531 = vst.msk [vmem:[%s2] sm:$0xff] %vm530, %v468
  %532 = vst.msk [vmem:[%s2 + $0x8] sm:$0xff] %vm530, %v471
  %533 = vst.msk [vmem:[%s2 + $0x10] sm:$0xff] %vm530, %v476
  %534 = vst.msk [vmem:[%s2 + $0x18] sm:$0xff] %vm530, %v479
  %535 = vst.msk [vmem:[%s2 + $0x20] sm:$0xff] %vm530, %v484
  %536 = vst.msk [vmem:[%s2 + $0x28] sm:$0xff] %vm530, %v487
  %537 = vst.msk [vmem:[%s2 + $0x30] sm:$0xff] %vm530, %v492
  %538 = vst.msk [vmem:[%s2 + $0x38] sm:$0xff] %vm530, %v495
  %539 = vst.msk [vmem:[%s2 + $0x40] sm:$0xff] %vm530, %v500
  %540 = vst.msk [vmem:[%s2 + $0x48] sm:$0xff] %vm530, %v503
  %541 = vst.msk [vmem:[%s2 + $0x50] sm:$0xff] %vm530, %v508
  %542 = vst.msk [vmem:[%s2 + $0x58] sm:$0xff] %vm530, %v511
  %543 = vst.msk [vmem:[%s2 + $0x60] sm:$0xff] %vm530, %v516
  %544 = vst.msk [vmem:[%s2 + $0x68] sm:$0xff] %vm530, %v519
  %545 = vst.msk [vmem:[%s2 + $0x70] sm:$0xff] %vm530, %v524
  %546 = vst.msk [vmem:[%s2 + $0x78] sm:$0xff] %vm530, %v527
  %p547 = scmp.eq.s32.totalorder 0, 0
  // Predicated region
  $region10: #{generator_forward.13} parent=0 // pred_check
    %p548 = pneg %p547
  $region11: #{generator_forward.13} parent=0 // pred_check_branch
    %550 = sbr.rel (%p548) target = $region13
  $region12: #{generator_forward.13} parent=0 // pred_region
    %vm551 = vcmask 516096
    %552 = vst.msk [vmem:[%s3] sm:$0x1] %vm551, 0.0
    %553 = vst.msk [vmem:[%s4] sm:$0x1] %vm551, 0.0
  $region13: #{generator_forward.13} parent=0 // pred_fallthru
    _
  %v554 = vld [vmem:[%s3] sm:$0x1]
  %v555 = vsel %vm530, %v468, 0.0
  %v556 = vsel %vm530, %v471, 0.0
  %v557 = vadd.f32 %v555, %v556
  %v558 = vsel %vm530, %v476, 0.0
  %v559 = vadd.f32 %v557, %v558
  %v560 = vsel %vm530, %v479, 0.0
  %v561 = vadd.f32 %v559, %v560
  %v562 = vsel %vm530, %v484, 0.0
  %v563 = vadd.f32 %v561, %v562
  %v564 = vsel %vm530, %v487, 0.0
  %v565 = vadd.f32 %v563, %v564
  %v566 = vsel %vm530, %v492, 0.0
  %v567 = vadd.f32 %v565, %v566
  %v568 = vsel %vm530, %v495, 0.0
  %v569 = vadd.f32 %v567, %v568
  %v570 = vsel %vm530, %v500, 0.0
  %v571 = vadd.f32 %v569, %v570
  %v572 = vsel %vm530, %v503, 0.0
  %v573 = vadd.f32 %v571, %v572
  %v574 = vsel %vm530, %v508, 0.0
  %v575 = vadd.f32 %v573, %v574
  %v576 = vsel %vm530, %v511, 0.0
  %v577 = vadd.f32 %v575, %v576
  %v578 = vsel %vm530, %v516, 0.0
  %v579 = vadd.f32 %v577, %v578
  %v580 = vsel %vm530, %v519, 0.0
  %v581 = vadd.f32 %v579, %v580
  %v582 = vsel %vm530, %v524, 0.0
  %v583 = vadd.f32 %v581, %v582
  %v584 = vsel %vm530, %v527, 0.0
  %v585 = vadd.f32 %v583, %v584
  %v586 = vrot.slane %v585, 4
  %v587 = vadd.f32 %v585, %v586
  %v588 = vrot.slane %v587, 2
  %v589 = vadd.f32 %v587, %v588
  %v590 = vrot.slane %v589, 1
  %v591 = vadd.f32 %v589, %v590
  %v592 = vadd.f32 %v554, %v591
  %vm593 = vcmask 516096
  %594 = vst.msk [vmem:[%s3] sm:$0x1] %vm593, %v592
  %v595 = vld [vmem:[%s4] sm:$0x1]
  %v596 = vmul.f32 %v468, %v468
  %v597 = vmul.f32 %v471, %v471
  %v598 = vmul.f32 %v476, %v476
  %v599 = vmul.f32 %v479, %v479
  %v600 = vmul.f32 %v484, %v484
  %v601 = vmul.f32 %v487, %v487
  %v602 = vmul.f32 %v492, %v492
  %v603 = vmul.f32 %v495, %v495
  %v604 = vmul.f32 %v500, %v500
  %v605 = vmul.f32 %v503, %v503
  %v606 = vmul.f32 %v508, %v508
  %v607 = vmul.f32 %v511, %v511
  %v608 = vmul.f32 %v516, %v516
  %v609 = vmul.f32 %v519, %v519
  %v610 = vmul.f32 %v524, %v524
  %v611 = vmul.f32 %v527, %v527
  %v612 = vsel %vm530, %v596, 0.0
  %v613 = vsel %vm530, %v597, 0.0
  %v614 = vadd.f32 %v612, %v613
  %v615 = vsel %vm530, %v598, 0.0
  %v616 = vadd.f32 %v614, %v615
  %v617 = vsel %vm530, %v599, 0.0
  %v618 = vadd.f32 %v616, %v617
  %v619 = vsel %vm530, %v600, 0.0
  %v620 = vadd.f32 %v618, %v619
  %v621 = vsel %vm530, %v601, 0.0
  %v622 = vadd.f32 %v620, %v621
  %v623 = vsel %vm530, %v602, 0.0
  %v624 = vadd.f32 %v622, %v623
  %v625 = vsel %vm530, %v603, 0.0
  %v626 = vadd.f32 %v624, %v625
  %v627 = vsel %vm530, %v604, 0.0
  %v628 = vadd.f32 %v626, %v627
  %v629 = vsel %vm530, %v605, 0.0
  %v630 = vadd.f32 %v628, %v629
  %v631 = vsel %vm530, %v606, 0.0
  %v632 = vadd.f32 %v630, %v631
  %v633 = vsel %vm530, %v607, 0.0
  %v634 = vadd.f32 %v632, %v633
  %v635 = vsel %vm530, %v608, 0.0
  %v636 = vadd.f32 %v634, %v635
  %v637 = vsel %vm530, %v609, 0.0
  %v638 = vadd.f32 %v636, %v637
  %v639 = vsel %vm530, %v610, 0.0
  %v640 = vadd.f32 %v638, %v639
  %v641 = vsel %vm530, %v611, 0.0
  %v642 = vadd.f32 %v640, %v641
  %v643 = vrot.slane %v642, 4
  %v644 = vadd.f32 %v642, %v643
  %v645 = vrot.slane %v644, 2
  %v646 = vadd.f32 %v644, %v645
  %v647 = vrot.slane %v646, 1
  %v648 = vadd.f32 %v646, %v647
  %v649 = vadd.f32 %v595, %v648
  %650 = vst.msk [vmem:[%s4] sm:$0x1] %vm593, %v649
  // Predicated region
  $region14: #{generator_forward.13} parent=0 // pred_check
    _
  $region15: #{generator_forward.13} parent=0 // pred_check_branch
    %652 = sbr.rel (0) target = $region17
  $region16: #{generator_forward.13} parent=0 // pred_region
    _
  $region17: #{generator_forward.13} parent=0 // pred_fallthru
    _
  // Predicated region
  $region18: #{generator_forward.13} parent=0 // pred_check
    _
  $region19: #{generator_forward.13} parent=0 // pred_check_branch
    %654 = sbr.rel (0) target = $region21
  $region20: #{generator_forward.13} parent=0 // pred_region
    _
  $region21: #{generator_forward.13} parent=0 // pred_fallthru
    _
  // Predicated region
  $region22: #{generator_forward.13} parent=0 // pred_check
    _
  $region23: #{generator_forward.13} parent=0 // pred_check_branch
    %656 = sbr.rel (0) target = $region25
  $region24: #{generator_forward.13} parent=0 // pred_region
    _
  $region25: #{generator_forward.13} parent=0 // pred_fallthru
    _
  // Predicated region
  $region26: #{generator_forward.13} parent=0 // pred_check
    _
  $region27: #{generator_forward.13} parent=0 // pred_check_branch
    %658 = sbr.rel (0) target = $region29
  $region28: #{generator_forward.13} parent=0 // pred_region
    _
  $region29: #{generator_forward.13} parent=0 // pred_fallthru
    _
  // Predicated region
  $region30: #{generator_forward.13} parent=0 // pred_check
    _
  $region31: #{generator_forward.13} parent=0 // pred_check_branch
    %660 = sbr.rel (0) target = $region33
  $region32: #{generator_forward.13} parent=0 // pred_region
    _
  $region33: #{generator_forward.13} parent=0 // pred_fallthru
    _
  // Predicated region
  $region34: #{generator_forward.13} parent=0 // pred_check
    _
  $region35: #{generator_forward.13} parent=0 // pred_check_branch
    %662 = sbr.rel (0) target = $region37
  $region36: #{generator_forward.13} parent=0 // pred_region
    _
  $region37: #{generator_forward.13} parent=0 // pred_fallthru
    _

// kernel: tile.68
$region0: #{tile.68}
  #allocation0 [shape = 's32[1]{0}', space=sflag, size = 0x4, scoped, tag = 'scoped memory for tile.68']
  %s0 = inlined_call_operand.vmem [shape: f32[16], index: 0, kind: input, shape index: {}]
  %s1 = inlined_call_operand.vmem [shape: f32[16,16], index: 1, kind: output, shape index: {}]
  // Predicated region
  $region2: #{tile.68} parent=0 // pred_check
    _
  $region3: #{tile.68} parent=0 // pred_check_branch
    %3 = sbr.rel (0) target = $region5
  $region4: #{tile.68} parent=0 // pred_region
    _
  $region5: #{tile.68} parent=0 // pred_fallthru
    _
  %v4 = vld [vmem:[%s0] ss:$0 sm:$0xff]
  %5 = vst [vmem:[%s1] sm:$0xff] %v4
  %s6 = scalar_lea.vmem %s1, 8
  %7 = vst [vmem:[%s6] sm:$0xff] %v4

// kernel: tile.69
$region0: #{tile.69}
  %s0 = inlined_call_operand.vmem [shape: f32[16,16], index: 0, kind: input, shape index: {}]
  %s1 = inlined_call_operand.vmem [shape: f32[1,256], index: 1, kind: output, shape index: {}]
  $region1: #{tile.69} parent=0
    #allocation0 [shape = 'u8[8192]{0}', space=vmem, size = 0x2000, scoped, tag = 'scoped mem for output reshape']
    %s2 = smov 3
    %v3 = vld [vmem:[%s0] ss:$8 sm:%s2]
    %vm4 = vcmask 130048
    %5 = vst.msk [vmem:[#allocation0] ss:$8 sm:$0x3] %vm4, %v3
    %s6 = scalar_lea.vmem %s0, 7
    %s7 = smov 3
    %v8 = vld [vmem:[%s6] ss:$8 sm:%s7]
    %9 = vrot.lane.b32.xlu0 %v8, 112
    %v10 = vpop.permute.xlu0 %9
    %vm11 = vcmask 1048448
    %12 = vst.msk [vmem:[#allocation0] ss:$8 sm:$0x3] %vm11, %v10
    %s13 = scalar_lea.vmem %s0, 6
    %s14 = smov 3
    %v15 = vld [vmem:[%s13] ss:$8 sm:%s14]
    %16 = vrot.lane.b32.xlu0 %v15, 96
    %v17 = vpop.permute.xlu0 %16
    %vm18 = vcmask 917248
    %19 = vst.msk [vmem:[#allocation0] ss:$8 sm:$0x3] %vm18, %v17
    %s20 = scalar_lea.vmem %s0, 5
    %s21 = smov 3
    %v22 = vld [vmem:[%s20] ss:$8 sm:%s21]
    %23 = vrot.lane.b32.xlu0 %v22, 80
    %v24 = vpop.permute.xlu0 %23
    %vm25 = vcmask 786048
    %26 = vst.msk [vmem:[#allocation0] ss:$8 sm:$0x3] %vm25, %v24
    %s27 = scalar_lea.vmem %s0, 4
    %s28 = smov 3
    %v29 = vld [vmem:[%s27] ss:$8 sm:%s28]
    %30 = vrot.lane.b32.xlu0 %v29, 64
    %v31 = vpop.permute.xlu0 %30
    %vm32 = vcmask 654848
    %33 = vst.msk [vmem:[#allocation0] ss:$8 sm:$0x3] %vm32, %v31
    %s34 = scalar_lea.vmem %s0, 3
    %s35 = smov 3
    %v36 = vld [vmem:[%s34] ss:$8 sm:%s35]
    %37 = vrot.lane.b32.xlu0 %v36, 48
    %v38 = vpop.permute.xlu0 %37
    %vm39 = vcmask 523648
    %40 = vst.msk [vmem:[#allocation0] ss:$8 sm:$0x3] %vm39, %v38
    %s41 = scalar_lea.vmem %s0, 2
    %s42 = smov 3
    %v43 = vld [vmem:[%s41] ss:$8 sm:%s42]
    %44 = vrot.lane.b32.xlu0 %v43, 32
    %v45 = vpop.permute.xlu0 %44
    %vm46 = vcmask 392448
    %47 = vst.msk [vmem:[#allocation0] ss:$8 sm:$0x3] %vm46, %v45
    %s48 = scalar_lea.vmem %s0, 1
    %s49 = smov 3
    %v50 = vld [vmem:[%s48] ss:$8 sm:%s49]
    %51 = vrot.lane.b32.xlu0 %v50, 16
    %v52 = vpop.permute.xlu0 %51
    %vm53 = vcmask 261248
    %54 = vst.msk [vmem:[#allocation0] ss:$8 sm:$0x3] %vm53, %v52
    %s56 = sshllo.u32 0, 1
    %v58 = vld [vmem:[#allocation0] sm:%s56]
    %s59 = sshllo.u32 0, 1
    %60 = vst [vmem:[%s1] sm:%s59] %v58
    %s61 = scalar_lea.vmem [#allocation0], 8
    %v62 = vld [vmem:[%s61] sm:%s56]
    %s63 = sshllo.u32 0, 1
    %s64 = scalar_lea.vmem %s1, 1
    %65 = vst [vmem:[%s64] sm:%s63] %v62

// kernel: generator_forward.14
$region0: #{generator_forward.14}
  #allocation0 [shape = 'u32[]', space=smem, size = 0x4, offset = 0x4, fixed_abs, tag = 'smem constant byte address 0x4 - core index']
  #allocation1 [shape = 'u32[144,128]{1,0:T(1,128)}', space=vmem, size = 0x12000, scoped, tag = 'internal scratch']
  %s0 = inlined_call_operand.vmem [shape: f32[32,256], index: 0, kind: input, shape index: {}]
  %s1 = inlined_call_operand.vmem [shape: f32[1,256], index: 1, kind: input, shape index: {}]
  %s2 = inlined_call_operand.vmem [shape: f32[1,256], index: 2, kind: input, shape index: {}]
  %s3 = inlined_call_operand.vmem [shape: f32[32,256], index: 3, kind: output, shape index: {}]
  %s4 = sld [smem:[#allocation0]]
  $region22: #{generator_forward.14} parent=0
    _
  %s6 = ssub.s32 1, %s4
  %s7 = scalar_select 0, %s6, %s4
  // Predicated region
  $region2: #{generator_forward.14} parent=0 // pred_check
    _
  $region3: #{generator_forward.14} parent=0 // pred_check_branch
    %9 = sbr.rel (0) target = $region5
  $region4: #{generator_forward.14} parent=0 // pred_region
    _
  $region5: #{generator_forward.14} parent=0 // pred_fallthru
    _
  // Predicated region
  $region6: #{generator_forward.14} parent=0 // pred_check
    _
  $region7: #{generator_forward.14} parent=0 // pred_check_branch
    %11 = sbr.rel (0) target = $region9
  $region8: #{generator_forward.14} parent=0 // pred_region
    _
  $region9: #{generator_forward.14} parent=0 // pred_fallthru
    _
  // Predicated region
  $region10: #{generator_forward.14} parent=0 // pred_check
    _
  $region11: #{generator_forward.14} parent=0 // pred_check_branch
    %13 = sbr.rel (0) target = $region13
  $region12: #{generator_forward.14} parent=0 // pred_region
    _
  $region13: #{generator_forward.14} parent=0 // pred_fallthru
    _
  %v14 = vld [vmem:[%s0] sm:$0xff]
  %v15 = vld [vmem:[%s0 + $0x8] sm:$0xff]
  %v16 = vld [vmem:[%s0 + $0x10] sm:$0xff]
  %v17 = vld [vmem:[%s0 + $0x18] sm:$0xff]
  %v18 = vld [vmem:[%s0 + $0x20] sm:$0xff]
  %v19 = vld [vmem:[%s0 + $0x28] sm:$0xff]
  %v20 = vld [vmem:[%s0 + $0x30] sm:$0xff]
  %v21 = vld [vmem:[%s0 + $0x38] sm:$0xff]
  %v22 = vld [vmem:[%s1] sm:$0x3]
  %v24 = vlaneseq
  %v25 = vshrl.u32 %v24, 7
  %v26 = vsub.s32 0, %v25
  %v27 = vrot.slane %v22, %v26
  %v28 = vlaneseq
  %v29 = vshrl.u32 %v28, 7
  %v30 = vsub.s32 1, %v29
  %v31 = vrot.slane %v22, %v30
  %v34 = vmul.f32 %v14, %v27
  %v35 = vmul.f32 %v15, %v31
  %v36 = vmul.f32 %v16, %v27
  %v37 = vmul.f32 %v17, %v31
  %v38 = vmul.f32 %v18, %v27
  %v39 = vmul.f32 %v19, %v31
  %v40 = vmul.f32 %v20, %v27
  %v41 = vmul.f32 %v21, %v31
  %v42 = vld [vmem:[%s2] sm:$0x3]
  %v44 = vlaneseq
  %v45 = vshrl.u32 %v44, 7
  %v46 = vsub.s32 0, %v45
  %v47 = vrot.slane %v42, %v46
  %v48 = vlaneseq
  %v49 = vshrl.u32 %v48, 7
  %v50 = vsub.s32 1, %v49
  %v51 = vrot.slane %v42, %v50
  %v54 = vadd.f32 %v34, %v47
  %v55 = vadd.f32 %v35, %v51
  %v56 = vadd.f32 %v36, %v47
  %v57 = vadd.f32 %v37, %v51
  %v58 = vadd.f32 %v38, %v47
  %v59 = vadd.f32 %v39, %v51
  %v60 = vadd.f32 %v40, %v47
  %v61 = vadd.f32 %v41, %v51
  %v62 = vmax.f32 %v54, 0.0
  %v63 = vmax.f32 %v55, 0.0
  %v64 = vmax.f32 %v56, 0.0
  %v65 = vmax.f32 %v57, 0.0
  %v66 = vmax.f32 %v58, 0.0
  %v67 = vmax.f32 %v59, 0.0
  %v68 = vmax.f32 %v60, 0.0
  %v69 = vmax.f32 %v61, 0.0
  %70 = vst [vmem:[%s3] sm:$0xff] %v62
  %71 = vst [vmem:[%s3 + $0x8] sm:$0xff] %v63
  %72 = vst [vmem:[%s3 + $0x10] sm:$0xff] %v64
  %73 = vst [vmem:[%s3 + $0x18] sm:$0xff] %v65
  %74 = vst [vmem:[%s3 + $0x20] sm:$0xff] %v66
  %75 = vst [vmem:[%s3 + $0x28] sm:$0xff] %v67
  %76 = vst [vmem:[%s3 + $0x30] sm:$0xff] %v68
  %77 = vst [vmem:[%s3 + $0x38] sm:$0xff] %v69
  // Predicated region
  $region14: #{generator_forward.14} parent=0 // pred_check
    _
  $region15: #{generator_forward.14} parent=0 // pred_check_branch
    %79 = sbr.rel (0) target = $region17
  $region16: #{generator_forward.14} parent=0 // pred_region
    _
  $region17: #{generator_forward.14} parent=0 // pred_fallthru
    _
  // Predicated region
  $region18: #{generator_forward.14} parent=0 // pred_check
    _
  $region19: #{generator_forward.14} parent=0 // pred_check_branch
    %81 = sbr.rel (0) target = $region21
  $region20: #{generator_forward.14} parent=0 // pred_region
    _
  $region21: #{generator_forward.14} parent=0 // pred_fallthru
    _

// kernel: generator_forward.15
$region0: #{generator_forward.15}
  #allocation0 [shape = 'u32[]', space=smem, size = 0x4, offset = 0x4, fixed_abs, tag = 'smem constant byte address 0x4 - core index']
  #allocation1 [shape = 'u32[144,128]{1,0:T(1,128)}', space=vmem, size = 0x12000, scoped, tag = 'internal scratch']
  %s0 = inlined_call_operand.vmem [shape: bf16[512,144], index: 0, kind: input, shape index: {}]
  %s1 = inlined_call_operand.vmem [shape: bf16[144,32], index: 1, kind: input, shape index: {}]
  %s2 = inlined_call_operand.vmem [shape: f32[512,32], index: 2, kind: output, shape index: {0}]
  %s3 = inlined_call_operand.vmem [shape: f32[1,32], index: 3, kind: output, shape index: {1}]
  %s4 = inlined_call_operand.vmem [shape: f32[1,32], index: 4, kind: output, shape index: {2}]
  %5 = xla_tuple %s2, %s3, %s4
  %s6 = sld [smem:[#allocation0]]
  $region38: #{generator_forward.15} parent=0
    _
  %s8 = ssub.s32 1, %s6
  %s9 = scalar_select 0, %s8, %s6
  // Predicated region
  $region2: #{generator_forward.15} parent=0 // pred_check
    _
  $region3: #{generator_forward.15} parent=0 // pred_check_branch
    %11 = sbr.rel (0) target = $region5
  $region4: #{generator_forward.15} parent=0 // pred_region
    _
  $region5: #{generator_forward.15} parent=0 // pred_fallthru
    _
  // Predicated region
  $region6: #{generator_forward.15} parent=0 // pred_check
    _
  $region7: #{generator_forward.15} parent=0 // pred_check_branch
    %13 = sbr.rel (0) target = $region9
  $region8: #{generator_forward.15} parent=0 // pred_region
    _
  $region9: #{generator_forward.15} parent=0 // pred_fallthru
    _
  %v15 = vld [vmem:[%s0] sm:$0xff]
  %v16 = vld [vmem:[%s0 + $0x8] sm:$0xff]
  %v17 = vld [vmem:[%s0 + $0x10] sm:$0xff]
  %v18 = vld [vmem:[%s0 + $0x18] sm:$0xff]
  %v19 = vld [vmem:[%s0 + $0x20] sm:$0xff]
  %v20 = vld [vmem:[%s0 + $0x28] sm:$0xff]
  %v21 = vld [vmem:[%s0 + $0x30] sm:$0xff]
  %v22 = vld [vmem:[%s0 + $0x38] sm:$0xff]
  %v23 = vld [vmem:[%s0 + $0x40] sm:$0xff]
  %v24 = vld [vmem:[%s0 + $0x48] sm:$0xff]
  %v25 = vld [vmem:[%s0 + $0x50] sm:$0xff]
  %v26 = vld [vmem:[%s0 + $0x58] sm:$0xff]
  %v27 = vld [vmem:[%s0 + $0x60] sm:$0xff]
  %v28 = vld [vmem:[%s0 + $0x68] sm:$0xff]
  %v29 = vld [vmem:[%s0 + $0x70] sm:$0xff]
  %v30 = vld [vmem:[%s0 + $0x78] sm:$0xff]
  %v31 = vld [vmem:[%s0 + $0x80] sm:$0xff]
  %v32 = vld [vmem:[%s0 + $0x88] sm:$0xff]
  %v33 = vld [vmem:[%s0 + $0x90] sm:$0xff]
  %v34 = vld [vmem:[%s0 + $0x98] sm:$0xff]
  %v35 = vld [vmem:[%s0 + $0xa0] sm:$0xff]
  %v36 = vld [vmem:[%s0 + $0xa8] sm:$0xff]
  %v37 = vld [vmem:[%s0 + $0xb0] sm:$0xff]
  %v38 = vld [vmem:[%s0 + $0xb8] sm:$0xff]
  %v39 = vld [vmem:[%s0 + $0xc0] sm:$0xff]
  %v40 = vld [vmem:[%s0 + $0xc8] sm:$0xff]
  %v41 = vld [vmem:[%s0 + $0xd0] sm:$0xff]
  %v42 = vld [vmem:[%s0 + $0xd8] sm:$0xff]
  %v43 = vld [vmem:[%s0 + $0xe0] sm:$0xff]
  %v44 = vld [vmem:[%s0 + $0xe8] sm:$0xff]
  %v45 = vld [vmem:[%s0 + $0xf0] sm:$0xff]
  %v46 = vld [vmem:[%s0 + $0xf8] sm:$0xff]
  %v47 = vld [vmem:[%s0 + $0x100] sm:$0xff]
  %v48 = vld [vmem:[%s0 + $0x108] sm:$0xff]
  %v49 = vld [vmem:[%s0 + $0x110] sm:$0xff]
  %v50 = vld [vmem:[%s0 + $0x118] sm:$0xff]
  %v51 = vld [vmem:[%s0 + $0x120] sm:$0xff]
  %v52 = vld [vmem:[%s0 + $0x128] sm:$0xff]
  %v53 = vld [vmem:[%s0 + $0x130] sm:$0xff]
  %v54 = vld [vmem:[%s0 + $0x138] sm:$0xff]
  %v55 = vld [vmem:[%s0 + $0x140] sm:$0xff]
  %v56 = vld [vmem:[%s0 + $0x148] sm:$0xff]
  %v57 = vld [vmem:[%s0 + $0x150] sm:$0xff]
  %v58 = vld [vmem:[%s0 + $0x158] sm:$0xff]
  %v59 = vld [vmem:[%s0 + $0x160] sm:$0xff]
  %v60 = vld [vmem:[%s0 + $0x168] sm:$0xff]
  %v61 = vld [vmem:[%s0 + $0x170] sm:$0xff]
  %v62 = vld [vmem:[%s0 + $0x178] sm:$0xff]
  %v63 = vld [vmem:[%s0 + $0x180] sm:$0xff]
  %v64 = vld [vmem:[%s0 + $0x188] sm:$0xff]
  %v65 = vld [vmem:[%s0 + $0x190] sm:$0xff]
  %v66 = vld [vmem:[%s0 + $0x198] sm:$0xff]
  %v67 = vld [vmem:[%s0 + $0x1a0] sm:$0xff]
  %v68 = vld [vmem:[%s0 + $0x1a8] sm:$0xff]
  %v69 = vld [vmem:[%s0 + $0x1b0] sm:$0xff]
  %v70 = vld [vmem:[%s0 + $0x1b8] sm:$0xff]
  %v71 = vld [vmem:[%s0 + $0x1c0] sm:$0xff]
  %v72 = vld [vmem:[%s0 + $0x1c8] sm:$0xff]
  %v73 = vld [vmem:[%s0 + $0x1d0] sm:$0xff]
  %v74 = vld [vmem:[%s0 + $0x1d8] sm:$0xff]
  %v75 = vld [vmem:[%s0 + $0x1e0] sm:$0xff]
  %v76 = vld [vmem:[%s0 + $0x1e8] sm:$0xff]
  %v77 = vld [vmem:[%s0 + $0x1f0] sm:$0xff]
  %v78 = vld [vmem:[%s0 + $0x1f8] sm:$0xff]
  %v79 = vld [vmem:[%s1] sm:$0xf]
  %v80 = vld [vmem:[%s1 + $0x4] sm:$0xf]
  %v81 = vld [vmem:[%s1 + $0x8] sm:$0xf]
  %v82 = vld [vmem:[%s1 + $0xc] sm:$0xf]
  %v83 = vld [vmem:[%s1 + $0x10] sm:$0xf]
  %v84 = vld [vmem:[%s1 + $0x14] sm:$0xf]
  %v85 = vld [vmem:[%s1 + $0x18] sm:$0xf]
  %v86 = vld [vmem:[%s1 + $0x1c] sm:$0xf]
  %v87 = vld [vmem:[%s1 + $0x20] sm:$0xf]
  %v88 = vld [vmem:[%s1 + $0x24] sm:$0xf]
  %v89 = vld [vmem:[%s1 + $0x28] sm:$0xf]
  %v90 = vld [vmem:[%s1 + $0x2c] sm:$0xf]
  %v91 = vld [vmem:[%s1 + $0x30] sm:$0xf]
  %v92 = vld [vmem:[%s1 + $0x34] sm:$0xf]
  %v93 = vld [vmem:[%s1 + $0x38] sm:$0xf]
  %v94 = vld [vmem:[%s1 + $0x3c] sm:$0xf]
  %v95 = vld [vmem:[%s1 + $0x40] sm:$0xf]
  %v96 = vld [vmem:[%s1 + $0x44] sm:$0xf]
  %v161 = vunpack.c.l.b16 %v15
  %v162 = vunpack.c.h.b16 %v15
  %v163 = vunpack.c.l.b16 %v16
  %v164 = vunpack.c.h.b16 %v16
  %v165 = vunpack.c.l.b16 %v17
  %v166 = vunpack.c.h.b16 %v17
  %v167 = vunpack.c.l.b16 %v18
  %v168 = vunpack.c.h.b16 %v18
  %v169 = vunpack.c.l.b16 %v19
  %v170 = vunpack.c.h.b16 %v19
  %v171 = vunpack.c.l.b16 %v20
  %v172 = vunpack.c.h.b16 %v20
  %v173 = vunpack.c.l.b16 %v21
  %v174 = vunpack.c.h.b16 %v21
  %v175 = vunpack.c.l.b16 %v22
  %v176 = vunpack.c.h.b16 %v22
  %v177 = vunpack.c.l.b16 %v23
  %v178 = vunpack.c.h.b16 %v23
  %v179 = vunpack.c.l.b16 %v24
  %v180 = vunpack.c.h.b16 %v24
  %v181 = vunpack.c.l.b16 %v25
  %v182 = vunpack.c.h.b16 %v25
  %v183 = vunpack.c.l.b16 %v26
  %v184 = vunpack.c.h.b16 %v26
  %v185 = vunpack.c.l.b16 %v27
  %v186 = vunpack.c.h.b16 %v27
  %v187 = vunpack.c.l.b16 %v28
  %v188 = vunpack.c.h.b16 %v28
  %v189 = vunpack.c.l.b16 %v29
  %v190 = vunpack.c.h.b16 %v29
  %v191 = vunpack.c.l.b16 %v30
  %v192 = vunpack.c.h.b16 %v30
  %v193 = vunpack.c.l.b16 %v31
  %v194 = vunpack.c.h.b16 %v31
  %v195 = vunpack.c.l.b16 %v32
  %v196 = vunpack.c.h.b16 %v32
  %v197 = vunpack.c.l.b16 %v33
  %v198 = vunpack.c.h.b16 %v33
  %v199 = vunpack.c.l.b16 %v34
  %v200 = vunpack.c.h.b16 %v34
  %v201 = vunpack.c.l.b16 %v35
  %v202 = vunpack.c.h.b16 %v35
  %v203 = vunpack.c.l.b16 %v36
  %v204 = vunpack.c.h.b16 %v36
  %v205 = vunpack.c.l.b16 %v37
  %v206 = vunpack.c.h.b16 %v37
  %v207 = vunpack.c.l.b16 %v38
  %v208 = vunpack.c.h.b16 %v38
  %v209 = vunpack.c.l.b16 %v39
  %v210 = vunpack.c.h.b16 %v39
  %v211 = vunpack.c.l.b16 %v40
  %v212 = vunpack.c.h.b16 %v40
  %v213 = vunpack.c.l.b16 %v41
  %v214 = vunpack.c.h.b16 %v41
  %v215 = vunpack.c.l.b16 %v42
  %v216 = vunpack.c.h.b16 %v42
  %v217 = vunpack.c.l.b16 %v43
  %v218 = vunpack.c.h.b16 %v43
  %v219 = vunpack.c.l.b16 %v44
  %v220 = vunpack.c.h.b16 %v44
  %v221 = vunpack.c.l.b16 %v45
  %v222 = vunpack.c.h.b16 %v45
  %v223 = vunpack.c.l.b16 %v46
  %v224 = vunpack.c.h.b16 %v46
  %v225 = vunpack.c.l.b16 %v47
  %v226 = vunpack.c.h.b16 %v47
  %v227 = vunpack.c.l.b16 %v48
  %v228 = vunpack.c.h.b16 %v48
  %v229 = vunpack.c.l.b16 %v49
  %v230 = vunpack.c.h.b16 %v49
  %v231 = vunpack.c.l.b16 %v50
  %v232 = vunpack.c.h.b16 %v50
  %v233 = vunpack.c.l.b16 %v51
  %v234 = vunpack.c.h.b16 %v51
  %v235 = vunpack.c.l.b16 %v52
  %v236 = vunpack.c.h.b16 %v52
  %v237 = vunpack.c.l.b16 %v53
  %v238 = vunpack.c.h.b16 %v53
  %v239 = vunpack.c.l.b16 %v54
  %v240 = vunpack.c.h.b16 %v54
  %v241 = vunpack.c.l.b16 %v55
  %v242 = vunpack.c.h.b16 %v55
  %v243 = vunpack.c.l.b16 %v56
  %v244 = vunpack.c.h.b16 %v56
  %v245 = vunpack.c.l.b16 %v57
  %v246 = vunpack.c.h.b16 %v57
  %v247 = vunpack.c.l.b16 %v58
  %v248 = vunpack.c.h.b16 %v58
  %v249 = vunpack.c.l.b16 %v59
  %v250 = vunpack.c.h.b16 %v59
  %v251 = vunpack.c.l.b16 %v60
  %v252 = vunpack.c.h.b16 %v60
  %v253 = vunpack.c.l.b16 %v61
  %v254 = vunpack.c.h.b16 %v61
  %v255 = vunpack.c.l.b16 %v62
  %v256 = vunpack.c.h.b16 %v62
  %v257 = vunpack.c.l.b16 %v63
  %v258 = vunpack.c.h.b16 %v63
  %v259 = vunpack.c.l.b16 %v64
  %v260 = vunpack.c.h.b16 %v64
  %v261 = vunpack.c.l.b16 %v65
  %v262 = vunpack.c.h.b16 %v65
  %v263 = vunpack.c.l.b16 %v66
  %v264 = vunpack.c.h.b16 %v66
  %v265 = vunpack.c.l.b16 %v67
  %v266 = vunpack.c.h.b16 %v67
  %v267 = vunpack.c.l.b16 %v68
  %v268 = vunpack.c.h.b16 %v68
  %v269 = vunpack.c.l.b16 %v69
  %v270 = vunpack.c.h.b16 %v69
  %v271 = vunpack.c.l.b16 %v70
  %v272 = vunpack.c.h.b16 %v70
  %v273 = vunpack.c.l.b16 %v71
  %v274 = vunpack.c.h.b16 %v71
  %v275 = vunpack.c.l.b16 %v72
  %v276 = vunpack.c.h.b16 %v72
  %v277 = vunpack.c.l.b16 %v73
  %v278 = vunpack.c.h.b16 %v73
  %v279 = vunpack.c.l.b16 %v74
  %v280 = vunpack.c.h.b16 %v74
  %v281 = vunpack.c.l.b16 %v75
  %v282 = vunpack.c.h.b16 %v75
  %v283 = vunpack.c.l.b16 %v76
  %v284 = vunpack.c.h.b16 %v76
  %v285 = vunpack.c.l.b16 %v77
  %v286 = vunpack.c.h.b16 %v77
  %v287 = vunpack.c.l.b16 %v78
  %v288 = vunpack.c.h.b16 %v78
  %v289 = vpack.c.b16 %v163, %v161
  %v290 = vpack.c.b16 %v164, %v162
  %v291 = vpack.c.b16 %v167, %v165
  %v292 = vpack.c.b16 %v168, %v166
  %v293 = vpack.c.b16 %v171, %v169
  %v294 = vpack.c.b16 %v172, %v170
  %v295 = vpack.c.b16 %v175, %v173
  %v296 = vpack.c.b16 %v176, %v174
  %v297 = vpack.c.b16 %v179, %v177
  %v298 = vpack.c.b16 %v180, %v178
  %v299 = vpack.c.b16 %v183, %v181
  %v300 = vpack.c.b16 %v184, %v182
  %v301 = vpack.c.b16 %v187, %v185
  %v302 = vpack.c.b16 %v188, %v186
  %v303 = vpack.c.b16 %v191, %v189
  %v304 = vpack.c.b16 %v192, %v190
  %v305 = vpack.c.b16 %v195, %v193
  %v306 = vpack.c.b16 %v196, %v194
  %v307 = vpack.c.b16 %v199, %v197
  %v308 = vpack.c.b16 %v200, %v198
  %v309 = vpack.c.b16 %v203, %v201
  %v310 = vpack.c.b16 %v204, %v202
  %v311 = vpack.c.b16 %v207, %v205
  %v312 = vpack.c.b16 %v208, %v206
  %v313 = vpack.c.b16 %v211, %v209
  %v314 = vpack.c.b16 %v212, %v210
  %v315 = vpack.c.b16 %v215, %v213
  %v316 = vpack.c.b16 %v216, %v214
  %v317 = vpack.c.b16 %v219, %v217
  %v318 = vpack.c.b16 %v220, %v218
  %v319 = vpack.c.b16 %v223, %v221
  %v320 = vpack.c.b16 %v224, %v222
  %v321 = vpack.c.b16 %v227, %v225
  %v322 = vpack.c.b16 %v228, %v226
  %v323 = vpack.c.b16 %v231, %v229
  %v324 = vpack.c.b16 %v232, %v230
  %v325 = vpack.c.b16 %v235, %v233
  %v326 = vpack.c.b16 %v236, %v234
  %v327 = vpack.c.b16 %v239, %v237
  %v328 = vpack.c.b16 %v240, %v238
  %v329 = vpack.c.b16 %v243, %v241
  %v330 = vpack.c.b16 %v244, %v242
  %v331 = vpack.c.b16 %v247, %v245
  %v332 = vpack.c.b16 %v248, %v246
  %v333 = vpack.c.b16 %v251, %v249
  %v334 = vpack.c.b16 %v252, %v250
  %v335 = vpack.c.b16 %v255, %v253
  %v336 = vpack.c.b16 %v256, %v254
  %v337 = vpack.c.b16 %v259, %v257
  %v338 = vpack.c.b16 %v260, %v258
  %v339 = vpack.c.b16 %v263, %v261
  %v340 = vpack.c.b16 %v264, %v262
  %v341 = vpack.c.b16 %v267, %v265
  %v342 = vpack.c.b16 %v268, %v266
  %v343 = vpack.c.b16 %v271, %v269
  %v344 = vpack.c.b16 %v272, %v270
  %v345 = vpack.c.b16 %v275, %v273
  %v346 = vpack.c.b16 %v276, %v274
  %v347 = vpack.c.b16 %v279, %v277
  %v348 = vpack.c.b16 %v280, %v278
  %v349 = vpack.c.b16 %v283, %v281
  %v350 = vpack.c.b16 %v284, %v282
  %v351 = vpack.c.b16 %v287, %v285
  %v352 = vpack.c.b16 %v288, %v286
  %v403 = vunpack.c.l.b16 %v79
  %v404 = vunpack.c.l.b16 %v80
  %v405 = vunpack.c.l.b16 %v81
  %v406 = vunpack.c.l.b16 %v82
  %v407 = vunpack.c.l.b16 %v83
  %v408 = vunpack.c.l.b16 %v84
  %v409 = vunpack.c.l.b16 %v85
  %v410 = vunpack.c.l.b16 %v86
  %v411 = vunpack.c.l.b16 %v87
  %v412 = vunpack.c.l.b16 %v88
  %v413 = vunpack.c.l.b16 %v89
  %v414 = vunpack.c.l.b16 %v90
  %v415 = vunpack.c.l.b16 %v91
  %v416 = vunpack.c.l.b16 %v92
  %v417 = vunpack.c.l.b16 %v93
  %v418 = vunpack.c.l.b16 %v94
  %v419 = vunpack.c.l.b16 %v95
  %v420 = vunpack.c.l.b16 %v96
  %v421 = vpack.c.b16 %v404, %v403
  %v422 = vpack.c.b16 %v406, %v405
  %v423 = vpack.c.b16 %v408, %v407
  %v424 = vpack.c.b16 %v410, %v409
  %v425 = vpack.c.b16 %v412, %v411
  %v426 = vpack.c.b16 %v414, %v413
  %v427 = vpack.c.b16 %v416, %v415
  %v428 = vpack.c.b16 %v418, %v417
  %v429 = vpack.c.b16 %v420, %v419
  %vm439 = vcmask 130048
  %v441 = vsel %vm439, %v290, 0
  %v444 = vsel %vm439, %v292, 0
  %v447 = vsel %vm439, %v294, 0
  %v450 = vsel %vm439, %v296, 0
  %v453 = vsel %vm439, %v298, 0
  %v456 = vsel %vm439, %v300, 0
  %v459 = vsel %vm439, %v302, 0
  %v462 = vsel %vm439, %v304, 0
  %v465 = vsel %vm439, %v306, 0
  %v468 = vsel %vm439, %v308, 0
  %v471 = vsel %vm439, %v310, 0
  %v474 = vsel %vm439, %v312, 0
  %v477 = vsel %vm439, %v314, 0
  %v480 = vsel %vm439, %v316, 0
  %v483 = vsel %vm439, %v318, 0
  %v486 = vsel %vm439, %v320, 0
  %v489 = vsel %vm439, %v322, 0
  %v492 = vsel %vm439, %v324, 0
  %v495 = vsel %vm439, %v326, 0
  %v498 = vsel %vm439, %v328, 0
  %v501 = vsel %vm439, %v330, 0
  %v504 = vsel %vm439, %v332, 0
  %v507 = vsel %vm439, %v334, 0
  %v510 = vsel %vm439, %v336, 0
  %v513 = vsel %vm439, %v338, 0
  %v516 = vsel %vm439, %v340, 0
  %v519 = vsel %vm439, %v342, 0
  %v522 = vsel %vm439, %v344, 0
  %v525 = vsel %vm439, %v346, 0
  %v528 = vsel %vm439, %v348, 0
  %v531 = vsel %vm439, %v350, 0
  %v534 = vsel %vm439, %v352, 0
  %536 = vmatprep.subr.bf16.mxu0 0
  %537 = vmatpush1.bf16.msra.mxu0 %v421
  %538 = vmatprep.subr.bf16.mxu0 0
  %539 = vmatpush1.bf16.msra.mxu0 %v422
  %540 = vmatprep.subr.bf16.mxu0 0
  %541 = vmatpush1.bf16.msra.mxu0 %v423
  %542 = vmatprep.subr.bf16.mxu0 0
  %543 = vmatpush1.bf16.msra.mxu0 %v424
  %544 = vmatprep.subr.bf16.mxu0 0
  %545 = vmatpush1.bf16.msra.mxu0 %v425
  %546 = vmatprep.subr.bf16.mxu0 0
  %547 = vmatpush1.bf16.msra.mxu0 %v426
  %548 = vmatprep.subr.bf16.mxu0 0
  %549 = vmatpush1.bf16.msra.mxu0 %v427
  %550 = vmatprep.subr.bf16.mxu0 0
  %551 = vmatpush1.bf16.msra.mxu0 %v428
  %552 = vmatprep.subr.bf16.mxu0 0
  %553 = vmatpush1.bf16.msra.mxu0 %v429
  %554 = vmatprep.subr.bf16.mxu0 0
  %555 = vmatpush1.bf16.msra.mxu0 0
  %556 = vmatprep.subr.bf16.mxu0 0
  %557 = vmatpush1.bf16.msra.mxu0 0
  %558 = vmatprep.subr.bf16.mxu0 0
  %559 = vmatpush1.bf16.msra.mxu0 0
  %560 = vmatprep.subr.bf16.mxu0 0
  %561 = vmatpush1.bf16.msra.mxu0 0
  %562 = vmatprep.subr.bf16.mxu0 0
  %563 = vmatpush1.bf16.msra.mxu0 0
  %564 = vmatprep.subr.bf16.mxu0 0
  %565 = vmatpush1.bf16.msra.mxu0 0
  %566 = vmatprep.subr.bf16.mxu0 0
  %567 = vmatpush1.bf16.msra.mxu0 0
  %568 = vmatprep.mubr.bf16.mxu0 %v441
  %569 = vmatmul.mubr.bf16.gmra.mrb[0].mxu0 %v289
  %v570 = vpop.f32.mrb[0].mxu0
  %v571 = vadd.f32 0.0, %v570
  %v572 = vpop.f32.mrb[0].mxu0
  %v573 = vpop.f32.mrb[0].mxu0
  %v574 = vadd.f32 0.0, %v573
  %v575 = vpop.f32.mrb[0].mxu0
  %576 = vmatprep.mubr.bf16.mxu0 %v444
  %577 = vmatmul.mubr.bf16.gmra.mrb[0].mxu0 %v291
  %v578 = vpop.f32.mrb[0].mxu0
  %v579 = vadd.f32 0.0, %v578
  %v580 = vpop.f32.mrb[0].mxu0
  %v581 = vpop.f32.mrb[0].mxu0
  %v582 = vadd.f32 0.0, %v581
  %v583 = vpop.f32.mrb[0].mxu0
  %584 = vmatprep.mubr.bf16.mxu0 %v447
  %585 = vmatmul.mubr.bf16.gmra.mrb[0].mxu0 %v293
  %v586 = vpop.f32.mrb[0].mxu0
  %v587 = vadd.f32 0.0, %v586
  %v588 = vpop.f32.mrb[0].mxu0
  %v589 = vpop.f32.mrb[0].mxu0
  %v590 = vadd.f32 0.0, %v589
  %v591 = vpop.f32.mrb[0].mxu0
  %592 = vmatprep.mubr.bf16.mxu0 %v450
  %593 = vmatmul.mubr.bf16.gmra.mrb[0].mxu0 %v295
  %v594 = vpop.f32.mrb[0].mxu0
  %v595 = vadd.f32 0.0, %v594
  %v596 = vpop.f32.mrb[0].mxu0
  %v597 = vpop.f32.mrb[0].mxu0
  %v598 = vadd.f32 0.0, %v597
  %v599 = vpop.f32.mrb[0].mxu0
  %600 = vmatprep.mubr.bf16.mxu0 %v453
  %601 = vmatmul.mubr.bf16.gmra.mrb[0].mxu0 %v297
  %v602 = vpop.f32.mrb[0].mxu0
  %v603 = vadd.f32 0.0, %v602
  %v604 = vpop.f32.mrb[0].mxu0
  %v605 = vpop.f32.mrb[0].mxu0
  %v606 = vadd.f32 0.0, %v605
  %v607 = vpop.f32.mrb[0].mxu0
  %608 = vmatprep.mubr.bf16.mxu0 %v456
  %609 = vmatmul.mubr.bf16.gmra.mrb[0].mxu0 %v299
  %v610 = vpop.f32.mrb[0].mxu0
  %v611 = vadd.f32 0.0, %v610
  %v612 = vpop.f32.mrb[0].mxu0
  %v613 = vpop.f32.mrb[0].mxu0
  %v614 = vadd.f32 0.0, %v613
  %v615 = vpop.f32.mrb[0].mxu0
  %616 = vmatprep.mubr.bf16.mxu0 %v459
  %617 = vmatmul.mubr.bf16.gmra.mrb[0].mxu0 %v301
  %v618 = vpop.f32.mrb[0].mxu0
  %v619 = vadd.f32 0.0, %v618
  %v620 = vpop.f32.mrb[0].mxu0
  %v621 = vpop.f32.mrb[0].mxu0
  %v622 = vadd.f32 0.0, %v621
  %v623 = vpop.f32.mrb[0].mxu0
  %624 = vmatprep.mubr.bf16.mxu0 %v462
  %625 = vmatmul.mubr.bf16.gmra.mrb[0].mxu0 %v303
  %v626 = vpop.f32.mrb[0].mxu0
  %v627 = vadd.f32 0.0, %v626
  %v628 = vpop.f32.mrb[0].mxu0
  %v629 = vpop.f32.mrb[0].mxu0
  %v630 = vadd.f32 0.0, %v629
  %v631 = vpop.f32.mrb[0].mxu0
  %632 = vmatprep.mubr.bf16.mxu0 %v465
  %633 = vmatmul.mubr.bf16.gmra.mrb[0].mxu0 %v305
  %v634 = vpop.f32.mrb[0].mxu0
  %v635 = vadd.f32 0.0, %v634
  %v636 = vpop.f32.mrb[0].mxu0
  %v637 = vpop.f32.mrb[0].mxu0
  %v638 = vadd.f32 0.0, %v637
  %v639 = vpop.f32.mrb[0].mxu0
  %640 = vmatprep.mubr.bf16.mxu0 %v468
  %641 = vmatmul.mubr.bf16.gmra.mrb[0].mxu0 %v307
  %v642 = vpop.f32.mrb[0].mxu0
  %v643 = vadd.f32 0.0, %v642
  %v644 = vpop.f32.mrb[0].mxu0
  %v645 = vpop.f32.mrb[0].mxu0
  %v646 = vadd.f32 0.0, %v645
  %v647 = vpop.f32.mrb[0].mxu0
  %648 = vmatprep.mubr.bf16.mxu0 %v471
  %649 = vmatmul.mubr.bf16.gmra.mrb[0].mxu0 %v309
  %v650 = vpop.f32.mrb[0].mxu0
  %v651 = vadd.f32 0.0, %v650
  %v652 = vpop.f32.mrb[0].mxu0
  %v653 = vpop.f32.mrb[0].mxu0
  %v654 = vadd.f32 0.0, %v653
  %v655 = vpop.f32.mrb[0].mxu0
  %656 = vmatprep.mubr.bf16.mxu0 %v474
  %657 = vmatmul.mubr.bf16.gmra.mrb[0].mxu0 %v311
  %v658 = vpop.f32.mrb[0].mxu0
  %v659 = vadd.f32 0.0, %v658
  %v660 = vpop.f32.mrb[0].mxu0
  %v661 = vpop.f32.mrb[0].mxu0
  %v662 = vadd.f32 0.0, %v661
  %v663 = vpop.f32.mrb[0].mxu0
  %664 = vmatprep.mubr.bf16.mxu0 %v477
  %665 = vmatmul.mubr.bf16.gmra.mrb[0].mxu0 %v313
  %v666 = vpop.f32.mrb[0].mxu0
  %v667 = vadd.f32 0.0, %v666
  %v668 = vpop.f32.mrb[0].mxu0
  %v669 = vpop.f32.mrb[0].mxu0
  %v670 = vadd.f32 0.0, %v669
  %v671 = vpop.f32.mrb[0].mxu0
  %672 = vmatprep.mubr.bf16.mxu0 %v480
  %673 = vmatmul.mubr.bf16.gmra.mrb[0].mxu0 %v315
  %v674 = vpop.f32.mrb[0].mxu0
  %v675 = vadd.f32 0.0, %v674
  %v676 = vpop.f32.mrb[0].mxu0
  %v677 = vpop.f32.mrb[0].mxu0
  %v678 = vadd.f32 0.0, %v677
  %v679 = vpop.f32.mrb[0].mxu0
  %680 = vmatprep.mubr.bf16.mxu0 %v483
  %681 = vmatmul.mubr.bf16.gmra.mrb[0].mxu0 %v317
  %v682 = vpop.f32.mrb[0].mxu0
  %v683 = vadd.f32 0.0, %v682
  %v684 = vpop.f32.mrb[0].mxu0
  %v685 = vpop.f32.mrb[0].mxu0
  %v686 = vadd.f32 0.0, %v685
  %v687 = vpop.f32.mrb[0].mxu0
  %688 = vmatprep.mubr.bf16.mxu0 %v486
  %689 = vmatmul.mubr.bf16.gmra.mrb[0].mxu0 %v319
  %v690 = vpop.f32.mrb[0].mxu0
  %v691 = vadd.f32 0.0, %v690
  %v692 = vpop.f32.mrb[0].mxu0
  %v693 = vpop.f32.mrb[0].mxu0
  %v694 = vadd.f32 0.0, %v693
  %v695 = vpop.f32.mrb[0].mxu0
  %696 = vmatprep.mubr.bf16.mxu0 %v489
  %697 = vmatmul.mubr.bf16.gmra.mrb[0].mxu0 %v321
  %v698 = vpop.f32.mrb[0].mxu0
  %v699 = vadd.f32 0.0, %v698
  %v700 = vpop.f32.mrb[0].mxu0
  %v701 = vpop.f32.mrb[0].mxu0
  %v702 = vadd.f32 0.0, %v701
  %v703 = vpop.f32.mrb[0].mxu0
  %704 = vmatprep.mubr.bf16.mxu0 %v492
  %705 = vmatmul.mubr.bf16.gmra.mrb[0].mxu0 %v323
  %v706 = vpop.f32.mrb[0].mxu0
  %v707 = vadd.f32 0.0, %v706
  %v708 = vpop.f32.mrb[0].mxu0
  %v709 = vpop.f32.mrb[0].mxu0
  %v710 = vadd.f32 0.0, %v709
  %v711 = vpop.f32.mrb[0].mxu0
  %712 = vmatprep.mubr.bf16.mxu0 %v495
  %713 = vmatmul.mubr.bf16.gmra.mrb[0].mxu0 %v325
  %v714 = vpop.f32.mrb[0].mxu0
  %v715 = vadd.f32 0.0, %v714
  %v716 = vpop.f32.mrb[0].mxu0
  %v717 = vpop.f32.mrb[0].mxu0
  %v718 = vadd.f32 0.0, %v717
  %v719 = vpop.f32.mrb[0].mxu0
  %720 = vmatprep.mubr.bf16.mxu0 %v498
  %721 = vmatmul.mubr.bf16.gmra.mrb[0].mxu0 %v327
  %v722 = vpop.f32.mrb[0].mxu0
  %v723 = vadd.f32 0.0, %v722
  %v724 = vpop.f32.mrb[0].mxu0
  %v725 = vpop.f32.mrb[0].mxu0
  %v726 = vadd.f32 0.0, %v725
  %v727 = vpop.f32.mrb[0].mxu0
  %728 = vmatprep.mubr.bf16.mxu0 %v501
  %729 = vmatmul.mubr.bf16.gmra.mrb[0].mxu0 %v329
  %v730 = vpop.f32.mrb[0].mxu0
  %v731 = vadd.f32 0.0, %v730
  %v732 = vpop.f32.mrb[0].mxu0
  %v733 = vpop.f32.mrb[0].mxu0
  %v734 = vadd.f32 0.0, %v733
  %v735 = vpop.f32.mrb[0].mxu0
  %736 = vmatprep.mubr.bf16.mxu0 %v504
  %737 = vmatmul.mubr.bf16.gmra.mrb[0].mxu0 %v331
  %v738 = vpop.f32.mrb[0].mxu0
  %v739 = vadd.f32 0.0, %v738
  %v740 = vpop.f32.mrb[0].mxu0
  %v741 = vpop.f32.mrb[0].mxu0
  %v742 = vadd.f32 0.0, %v741
  %v743 = vpop.f32.mrb[0].mxu0
  %744 = vmatprep.mubr.bf16.mxu0 %v507
  %745 = vmatmul.mubr.bf16.gmra.mrb[0].mxu0 %v333
  %v746 = vpop.f32.mrb[0].mxu0
  %v747 = vadd.f32 0.0, %v746
  %v748 = vpop.f32.mrb[0].mxu0
  %v749 = vpop.f32.mrb[0].mxu0
  %v750 = vadd.f32 0.0, %v749
  %v751 = vpop.f32.mrb[0].mxu0
  %752 = vmatprep.mubr.bf16.mxu0 %v510
  %753 = vmatmul.mubr.bf16.gmra.mrb[0].mxu0 %v335
  %v754 = vpop.f32.mrb[0].mxu0
  %v755 = vadd.f32 0.0, %v754
  %v756 = vpop.f32.mrb[0].mxu0
  %v757 = vpop.f32.mrb[0].mxu0
  %v758 = vadd.f32 0.0, %v757
  %v759 = vpop.f32.mrb[0].mxu0
  %760 = vmatprep.mubr.bf16.mxu0 %v513
  %761 = vmatmul.mubr.bf16.gmra.mrb[0].mxu0 %v337
  %v762 = vpop.f32.mrb[0].mxu0
  %v763 = vadd.f32 0.0, %v762
  %v764 = vpop.f32.mrb[0].mxu0
  %v765 = vpop.f32.mrb[0].mxu0
  %v766 = vadd.f32 0.0, %v765
  %v767 = vpop.f32.mrb[0].mxu0
  %768 = vmatprep.mubr.bf16.mxu0 %v516
  %769 = vmatmul.mubr.bf16.gmra.mrb[0].mxu0 %v339
  %v770 = vpop.f32.mrb[0].mxu0
  %v771 = vadd.f32 0.0, %v770
  %v772 = vpop.f32.mrb[0].mxu0
  %v773 = vpop.f32.mrb[0].mxu0
  %v774 = vadd.f32 0.0, %v773
  %v775 = vpop.f32.mrb[0].mxu0
  %776 = vmatprep.mubr.bf16.mxu0 %v519
  %777 = vmatmul.mubr.bf16.gmra.mrb[0].mxu0 %v341
  %v778 = vpop.f32.mrb[0].mxu0
  %v779 = vadd.f32 0.0, %v778
  %v780 = vpop.f32.mrb[0].mxu0
  %v781 = vpop.f32.mrb[0].mxu0
  %v782 = vadd.f32 0.0, %v781
  %v783 = vpop.f32.mrb[0].mxu0
  %784 = vmatprep.mubr.bf16.mxu0 %v522
  %785 = vmatmul.mubr.bf16.gmra.mrb[0].mxu0 %v343
  %v786 = vpop.f32.mrb[0].mxu0
  %v787 = vadd.f32 0.0, %v786
  %v788 = vpop.f32.mrb[0].mxu0
  %v789 = vpop.f32.mrb[0].mxu0
  %v790 = vadd.f32 0.0, %v789
  %v791 = vpop.f32.mrb[0].mxu0
  %792 = vmatprep.mubr.bf16.mxu0 %v525
  %793 = vmatmul.mubr.bf16.gmra.mrb[0].mxu0 %v345
  %v794 = vpop.f32.mrb[0].mxu0
  %v795 = vadd.f32 0.0, %v794
  %v796 = vpop.f32.mrb[0].mxu0
  %v797 = vpop.f32.mrb[0].mxu0
  %v798 = vadd.f32 0.0, %v797
  %v799 = vpop.f32.mrb[0].mxu0
  %800 = vmatprep.mubr.bf16.mxu0 %v528
  %801 = vmatmul.mubr.bf16.gmra.mrb[0].mxu0 %v347
  %v802 = vpop.f32.mrb[0].mxu0
  %v803 = vadd.f32 0.0, %v802
  %v804 = vpop.f32.mrb[0].mxu0
  %v805 = vpop.f32.mrb[0].mxu0
  %v806 = vadd.f32 0.0, %v805
  %v807 = vpop.f32.mrb[0].mxu0
  %808 = vmatprep.mubr.bf16.mxu0 %v531
  %809 = vmatmul.mubr.bf16.gmra.mrb[0].mxu0 %v349
  %v810 = vpop.f32.mrb[0].mxu0
  %v811 = vadd.f32 0.0, %v810
  %v812 = vpop.f32.mrb[0].mxu0
  %v813 = vpop.f32.mrb[0].mxu0
  %v814 = vadd.f32 0.0, %v813
  %v815 = vpop.f32.mrb[0].mxu0
  %816 = vmatprep.mubr.bf16.mxu0 %v534
  %817 = vmatmul.mubr.bf16.gmra.mrb[0].mxu0 %v351
  %v818 = vpop.f32.mrb[0].mxu0
  %v819 = vadd.f32 0.0, %v818
  %v820 = vpop.f32.mrb[0].mxu0
  %v821 = vpop.f32.mrb[0].mxu0
  %v822 = vadd.f32 0.0, %v821
  %v823 = vpop.f32.mrb[0].mxu0
  %824 = vdwg.mxu0
  %vm825 = vcmask 261120
  %826 = vst.msk [vmem:[%s2] sm:$0xff] %vm825, %v571
  %827 = vst.msk [vmem:[%s2 + $0x8] sm:$0xff] %vm825, %v574
  %828 = vst.msk [vmem:[%s2 + $0x10] sm:$0xff] %vm825, %v579
  %829 = vst.msk [vmem:[%s2 + $0x18] sm:$0xff] %vm825, %v582
  %830 = vst.msk [vmem:[%s2 + $0x20] sm:$0xff] %vm825, %v587
  %831 = vst.msk [vmem:[%s2 + $0x28] sm:$0xff] %vm825, %v590
  %832 = vst.msk [vmem:[%s2 + $0x30] sm:$0xff] %vm825, %v595
  %833 = vst.msk [vmem:[%s2 + $0x38] sm:$0xff] %vm825, %v598
  %834 = vst.msk [vmem:[%s2 + $0x40] sm:$0xff] %vm825, %v603
  %835 = vst.msk [vmem:[%s2 + $0x48] sm:$0xff] %vm825, %v606
  %836 = vst.msk [vmem:[%s2 + $0x50] sm:$0xff] %vm825, %v611
  %837 = vst.msk [vmem:[%s2 + $0x58] sm:$0xff] %vm825, %v614
  %838 = vst.msk [vmem:[%s2 + $0x60] sm:$0xff] %vm825, %v619
  %839 = vst.msk [vmem:[%s2 + $0x68] sm:$0xff] %vm825, %v622
  %840 = vst.msk [vmem:[%s2 + $0x70] sm:$0xff] %vm825, %v627
  %841 = vst.msk [vmem:[%s2 + $0x78] sm:$0xff] %vm825, %v630
  %842 = vst.msk [vmem:[%s2 + $0x80] sm:$0xff] %vm825, %v635
  %843 = vst.msk [vmem:[%s2 + $0x88] sm:$0xff] %vm825, %v638
  %844 = vst.msk [vmem:[%s2 + $0x90] sm:$0xff] %vm825, %v643
  %845 = vst.msk [vmem:[%s2 + $0x98] sm:$0xff] %vm825, %v646
  %846 = vst.msk [vmem:[%s2 + $0xa0] sm:$0xff] %vm825, %v651
  %847 = vst.msk [vmem:[%s2 + $0xa8] sm:$0xff] %vm825, %v654
  %848 = vst.msk [vmem:[%s2 + $0xb0] sm:$0xff] %vm825, %v659
  %849 = vst.msk [vmem:[%s2 + $0xb8] sm:$0xff] %vm825, %v662
  %850 = vst.msk [vmem:[%s2 + $0xc0] sm:$0xff] %vm825, %v667
  %851 = vst.msk [vmem:[%s2 + $0xc8] sm:$0xff] %vm825, %v670
  %852 = vst.msk [vmem:[%s2 + $0xd0] sm:$0xff] %vm825, %v675
  %853 = vst.msk [vmem:[%s2 + $0xd8] sm:$0xff] %vm825, %v678
  %854 = vst.msk [vmem:[%s2 + $0xe0] sm:$0xff] %vm825, %v683
  %855 = vst.msk [vmem:[%s2 + $0xe8] sm:$0xff] %vm825, %v686
  %856 = vst.msk [vmem:[%s2 + $0xf0] sm:$0xff] %vm825, %v691
  %857 = vst.msk [vmem:[%s2 + $0xf8] sm:$0xff] %vm825, %v694
  %858 = vst.msk [vmem:[%s2 + $0x100] sm:$0xff] %vm825, %v699
  %859 = vst.msk [vmem:[%s2 + $0x108] sm:$0xff] %vm825, %v702
  %860 = vst.msk [vmem:[%s2 + $0x110] sm:$0xff] %vm825, %v707
  %861 = vst.msk [vmem:[%s2 + $0x118] sm:$0xff] %vm825, %v710
  %862 = vst.msk [vmem:[%s2 + $0x120] sm:$0xff] %vm825, %v715
  %863 = vst.msk [vmem:[%s2 + $0x128] sm:$0xff] %vm825, %v718
  %864 = vst.msk [vmem:[%s2 + $0x130] sm:$0xff] %vm825, %v723
  %865 = vst.msk [vmem:[%s2 + $0x138] sm:$0xff] %vm825, %v726
  %866 = vst.msk [vmem:[%s2 + $0x140] sm:$0xff] %vm825, %v731
  %867 = vst.msk [vmem:[%s2 + $0x148] sm:$0xff] %vm825, %v734
  %868 = vst.msk [vmem:[%s2 + $0x150] sm:$0xff] %vm825, %v739
  %869 = vst.msk [vmem:[%s2 + $0x158] sm:$0xff] %vm825, %v742
  %870 = vst.msk [vmem:[%s2 + $0x160] sm:$0xff] %vm825, %v747
  %871 = vst.msk [vmem:[%s2 + $0x168] sm:$0xff] %vm825, %v750
  %872 = vst.msk [vmem:[%s2 + $0x170] sm:$0xff] %vm825, %v755
  %873 = vst.msk [vmem:[%s2 + $0x178] sm:$0xff] %vm825, %v758
  %874 = vst.msk [vmem:[%s2 + $0x180] sm:$0xff] %vm825, %v763
  %875 = vst.msk [vmem:[%s2 + $0x188] sm:$0xff] %vm825, %v766
  %876 = vst.msk [vmem:[%s2 + $0x190] sm:$0xff] %vm825, %v771
  %877 = vst.msk [vmem:[%s2 + $0x198] sm:$0xff] %vm825, %v774
  %878 = vst.msk [vmem:[%s2 + $0x1a0] sm:$0xff] %vm825, %v779
  %879 = vst.msk [vmem:[%s2 + $0x1a8] sm:$0xff] %vm825, %v782
  %880 = vst.msk [vmem:[%s2 + $0x1b0] sm:$0xff] %vm825, %v787
  %881 = vst.msk [vmem:[%s2 + $0x1b8] sm:$0xff] %vm825, %v790
  %882 = vst.msk [vmem:[%s2 + $0x1c0] sm:$0xff] %vm825, %v795
  %883 = vst.msk [vmem:[%s2 + $0x1c8] sm:$0xff] %vm825, %v798
  %884 = vst.msk [vmem:[%s2 + $0x1d0] sm:$0xff] %vm825, %v803
  %885 = vst.msk [vmem:[%s2 + $0x1d8] sm:$0xff] %vm825, %v806
  %886 = vst.msk [vmem:[%s2 + $0x1e0] sm:$0xff] %vm825, %v811
  %887 = vst.msk [vmem:[%s2 + $0x1e8] sm:$0xff] %vm825, %v814
  %888 = vst.msk [vmem:[%s2 + $0x1f0] sm:$0xff] %vm825, %v819
  %889 = vst.msk [vmem:[%s2 + $0x1f8] sm:$0xff] %vm825, %v822
  %p890 = scmp.eq.s32.totalorder 0, 0
  // Predicated region
  $region10: #{generator_forward.15} parent=0 // pred_check
    %p891 = pneg %p890
  $region11: #{generator_forward.15} parent=0 // pred_check_branch
    %893 = sbr.rel (%p891) target = $region13
  $region12: #{generator_forward.15} parent=0 // pred_region
    %vm894 = vcmask 253952
    %895 = vst.msk [vmem:[%s3] sm:$0x1] %vm894, 0.0
    %896 = vst.msk [vmem:[%s4] sm:$0x1] %vm894, 0.0
  $region13: #{generator_forward.15} parent=0 // pred_fallthru
    _
  %v897 = vld [vmem:[%s3] sm:$0x1]
  %v898 = vsel %vm825, %v571, 0.0
  %v899 = vsel %vm825, %v574, 0.0
  %v900 = vadd.f32 %v898, %v899
  %v901 = vsel %vm825, %v579, 0.0
  %v902 = vadd.f32 %v900, %v901
  %v903 = vsel %vm825, %v582, 0.0
  %v904 = vadd.f32 %v902, %v903
  %v905 = vsel %vm825, %v587, 0.0
  %v906 = vadd.f32 %v904, %v905
  %v907 = vsel %vm825, %v590, 0.0
  %v908 = vadd.f32 %v906, %v907
  %v909 = vsel %vm825, %v595, 0.0
  %v910 = vadd.f32 %v908, %v909
  %v911 = vsel %vm825, %v598, 0.0
  %v912 = vadd.f32 %v910, %v911
  %v913 = vsel %vm825, %v603, 0.0
  %v914 = vadd.f32 %v912, %v913
  %v915 = vsel %vm825, %v606, 0.0
  %v916 = vadd.f32 %v914, %v915
  %v917 = vsel %vm825, %v611, 0.0
  %v918 = vadd.f32 %v916, %v917
  %v919 = vsel %vm825, %v614, 0.0
  %v920 = vadd.f32 %v918, %v919
  %v921 = vsel %vm825, %v619, 0.0
  %v922 = vadd.f32 %v920, %v921
  %v923 = vsel %vm825, %v622, 0.0
  %v924 = vadd.f32 %v922, %v923
  %v925 = vsel %vm825, %v627, 0.0
  %v926 = vadd.f32 %v924, %v925
  %v927 = vsel %vm825, %v630, 0.0
  %v928 = vadd.f32 %v926, %v927
  %v929 = vsel %vm825, %v635, 0.0
  %v930 = vadd.f32 %v928, %v929
  %v931 = vsel %vm825, %v638, 0.0
  %v932 = vadd.f32 %v930, %v931
  %v933 = vsel %vm825, %v643, 0.0
  %v934 = vadd.f32 %v932, %v933
  %v935 = vsel %vm825, %v646, 0.0
  %v936 = vadd.f32 %v934, %v935
  %v937 = vsel %vm825, %v651, 0.0
  %v938 = vadd.f32 %v936, %v937
  %v939 = vsel %vm825, %v654, 0.0
  %v940 = vadd.f32 %v938, %v939
  %v941 = vsel %vm825, %v659, 0.0
  %v942 = vadd.f32 %v940, %v941
  %v943 = vsel %vm825, %v662, 0.0
  %v944 = vadd.f32 %v942, %v943
  %v945 = vsel %vm825, %v667, 0.0
  %v946 = vadd.f32 %v944, %v945
  %v947 = vsel %vm825, %v670, 0.0
  %v948 = vadd.f32 %v946, %v947
  %v949 = vsel %vm825, %v675, 0.0
  %v950 = vadd.f32 %v948, %v949
  %v951 = vsel %vm825, %v678, 0.0
  %v952 = vadd.f32 %v950, %v951
  %v953 = vsel %vm825, %v683, 0.0
  %v954 = vadd.f32 %v952, %v953
  %v955 = vsel %vm825, %v686, 0.0
  %v956 = vadd.f32 %v954, %v955
  %v957 = vsel %vm825, %v691, 0.0
  %v958 = vadd.f32 %v956, %v957
  %v959 = vsel %vm825, %v694, 0.0
  %v960 = vadd.f32 %v958, %v959
  %v961 = vsel %vm825, %v699, 0.0
  %v962 = vadd.f32 %v960, %v961
  %v963 = vsel %vm825, %v702, 0.0
  %v964 = vadd.f32 %v962, %v963
  %v965 = vsel %vm825, %v707, 0.0
  %v966 = vadd.f32 %v964, %v965
  %v967 = vsel %vm825, %v710, 0.0
  %v968 = vadd.f32 %v966, %v967
  %v969 = vsel %vm825, %v715, 0.0
  %v970 = vadd.f32 %v968, %v969
  %v971 = vsel %vm825, %v718, 0.0
  %v972 = vadd.f32 %v970, %v971
  %v973 = vsel %vm825, %v723, 0.0
  %v974 = vadd.f32 %v972, %v973
  %v975 = vsel %vm825, %v726, 0.0
  %v976 = vadd.f32 %v974, %v975
  %v977 = vsel %vm825, %v731, 0.0
  %v978 = vadd.f32 %v976, %v977
  %v979 = vsel %vm825, %v734, 0.0
  %v980 = vadd.f32 %v978, %v979
  %v981 = vsel %vm825, %v739, 0.0
  %v982 = vadd.f32 %v980, %v981
  %v983 = vsel %vm825, %v742, 0.0
  %v984 = vadd.f32 %v982, %v983
  %v985 = vsel %vm825, %v747, 0.0
  %v986 = vadd.f32 %v984, %v985
  %v987 = vsel %vm825, %v750, 0.0
  %v988 = vadd.f32 %v986, %v987
  %v989 = vsel %vm825, %v755, 0.0
  %v990 = vadd.f32 %v988, %v989
  %v991 = vsel %vm825, %v758, 0.0
  %v992 = vadd.f32 %v990, %v991
  %v993 = vsel %vm825, %v763, 0.0
  %v994 = vadd.f32 %v992, %v993
  %v995 = vsel %vm825, %v766, 0.0
  %v996 = vadd.f32 %v994, %v995
  %v997 = vsel %vm825, %v771, 0.0
  %v998 = vadd.f32 %v996, %v997
  %v999 = vsel %vm825, %v774, 0.0
  %v1000 = vadd.f32 %v998, %v999
  %v1001 = vsel %vm825, %v779, 0.0
  %v1002 = vadd.f32 %v1000, %v1001
  %v1003 = vsel %vm825, %v782, 0.0
  %v1004 = vadd.f32 %v1002, %v1003
  %v1005 = vsel %vm825, %v787, 0.0
  %v1006 = vadd.f32 %v1004, %v1005
  %v1007 = vsel %vm825, %v790, 0.0
  %v1008 = vadd.f32 %v1006, %v1007
  %v1009 = vsel %vm825, %v795, 0.0
  %v1010 = vadd.f32 %v1008, %v1009
  %v1011 = vsel %vm825, %v798, 0.0
  %v1012 = vadd.f32 %v1010, %v1011
  %v1013 = vsel %vm825, %v803, 0.0
  %v1014 = vadd.f32 %v1012, %v1013
  %v1015 = vsel %vm825, %v806, 0.0
  %v1016 = vadd.f32 %v1014, %v1015
  %v1017 = vsel %vm825, %v811, 0.0
  %v1018 = vadd.f32 %v1016, %v1017
  %v1019 = vsel %vm825, %v814, 0.0
  %v1020 = vadd.f32 %v1018, %v1019
  %v1021 = vsel %vm825, %v819, 0.0
  %v1022 = vadd.f32 %v1020, %v1021
  %v1023 = vsel %vm825, %v822, 0.0
  %v1024 = vadd.f32 %v1022, %v1023
  %v1025 = vrot.slane %v1024, 4
  %v1026 = vadd.f32 %v1024, %v1025
  %v1027 = vrot.slane %v1026, 2
  %v1028 = vadd.f32 %v1026, %v1027
  %v1029 = vrot.slane %v1028, 1
  %v1030 = vadd.f32 %v1028, %v1029
  %v1031 = vadd.f32 %v897, %v1030
  %vm1032 = vcmask 253952
  %1033 = vst.msk [vmem:[%s3] sm:$0x1] %vm1032, %v1031
  %v1034 = vld [vmem:[%s4] sm:$0x1]
  %v1035 = vmul.f32 %v571, %v571
  %v1036 = vmul.f32 %v574, %v574
  %v1037 = vmul.f32 %v579, %v579
  %v1038 = vmul.f32 %v582, %v582
  %v1039 = vmul.f32 %v587, %v587
  %v1040 = vmul.f32 %v590, %v590
  %v1041 = vmul.f32 %v595, %v595
  %v1042 = vmul.f32 %v598, %v598
  %v1043 = vmul.f32 %v603, %v603
  %v1044 = vmul.f32 %v606, %v606
  %v1045 = vmul.f32 %v611, %v611
  %v1046 = vmul.f32 %v614, %v614
  %v1047 = vmul.f32 %v619, %v619
  %v1048 = vmul.f32 %v622, %v622
  %v1049 = vmul.f32 %v627, %v627
  %v1050 = vmul.f32 %v630, %v630
  %v1051 = vmul.f32 %v635, %v635
  %v1052 = vmul.f32 %v638, %v638
  %v1053 = vmul.f32 %v643, %v643
  %v1054 = vmul.f32 %v646, %v646
  %v1055 = vmul.f32 %v651, %v651
  %v1056 = vmul.f32 %v654, %v654
  %v1057 = vmul.f32 %v659, %v659
  %v1058 = vmul.f32 %v662, %v662
  %v1059 = vmul.f32 %v667, %v667
  %v1060 = vmul.f32 %v670, %v670
  %v1061 = vmul.f32 %v675, %v675
  %v1062 = vmul.f32 %v678, %v678
  %v1063 = vmul.f32 %v683, %v683
  %v1064 = vmul.f32 %v686, %v686
  %v1065 = vmul.f32 %v691, %v691
  %v1066 = vmul.f32 %v694, %v694
  %v1067 = vmul.f32 %v699, %v699
  %v1068 = vmul.f32 %v702, %v702
  %v1069 = vmul.f32 %v707, %v707
  %v1070 = vmul.f32 %v710, %v710
  %v1071 = vmul.f32 %v715, %v715
  %v1072 = vmul.f32 %v718, %v718
  %v1073 = vmul.f32 %v723, %v723
  %v1074 = vmul.f32 %v726, %v726
  %v1075 = vmul.f32 %v731, %v731
  %v1076 = vmul.f32 %v734, %v734
  %v1077 = vmul.f32 %v739, %v739
  %v1078 = vmul.f32 %v742, %v742
  %v1079 = vmul.f32 %v747, %v747
  %v1080 = vmul.f32 %v750, %v750
  %v1081 = vmul.f32 %v755, %v755
  %v1082 = vmul.f32 %v758, %v758
  %v1083 = vmul.f32 %v763, %v763
  %v1084 = vmul.f32 %v766, %v766
  %v1085 = vmul.f32 %v771, %v771
  %v1086 = vmul.f32 %v774, %v774
  %v1087 = vmul.f32 %v779, %v779
  %v1088 = vmul.f32 %v782, %v782
  %v1089 = vmul.f32 %v787, %v787
  %v1090 = vmul.f32 %v790, %v790
  %v1091 = vmul.f32 %v795, %v795
  %v1092 = vmul.f32 %v798, %v798
  %v1093 = vmul.f32 %v803, %v803
  %v1094 = vmul.f32 %v806, %v806
  %v1095 = vmul.f32 %v811, %v811
  %v1096 = vmul.f32 %v814, %v814
  %v1097 = vmul.f32 %v819, %v819
  %v1098 = vmul.f32 %v822, %v822
  %v1099 = vsel %vm825, %v1035, 0.0
  %v1100 = vsel %vm825, %v1036, 0.0
  %v1101 = vadd.f32 %v1099, %v1100
  %v1102 = vsel %vm825, %v1037, 0.0
  %v1103 = vadd.f32 %v1101, %v1102
  %v1104 = vsel %vm825, %v1038, 0.0
  %v1105 = vadd.f32 %v1103, %v1104
  %v1106 = vsel %vm825, %v1039, 0.0
  %v1107 = vadd.f32 %v1105, %v1106
  %v1108 = vsel %vm825, %v1040, 0.0
  %v1109 = vadd.f32 %v1107, %v1108
  %v1110 = vsel %vm825, %v1041, 0.0
  %v1111 = vadd.f32 %v1109, %v1110
  %v1112 = vsel %vm825, %v1042, 0.0
  %v1113 = vadd.f32 %v1111, %v1112
  %v1114 = vsel %vm825, %v1043, 0.0
  %v1115 = vadd.f32 %v1113, %v1114
  %v1116 = vsel %vm825, %v1044, 0.0
  %v1117 = vadd.f32 %v1115, %v1116
  %v1118 = vsel %vm825, %v1045, 0.0
  %v1119 = vadd.f32 %v1117, %v1118
  %v1120 = vsel %vm825, %v1046, 0.0
  %v1121 = vadd.f32 %v1119, %v1120
  %v1122 = vsel %vm825, %v1047, 0.0
  %v1123 = vadd.f32 %v1121, %v1122
  %v1124 = vsel %vm825, %v1048, 0.0
  %v1125 = vadd.f32 %v1123, %v1124
  %v1126 = vsel %vm825, %v1049, 0.0
  %v1127 = vadd.f32 %v1125, %v1126
  %v1128 = vsel %vm825, %v1050, 0.0
  %v1129 = vadd.f32 %v1127, %v1128
  %v1130 = vsel %vm825, %v1051, 0.0
  %v1131 = vadd.f32 %v1129, %v1130
  %v1132 = vsel %vm825, %v1052, 0.0
  %v1133 = vadd.f32 %v1131, %v1132
  %v1134 = vsel %vm825, %v1053, 0.0
  %v1135 = vadd.f32 %v1133, %v1134
  %v1136 = vsel %vm825, %v1054, 0.0
  %v1137 = vadd.f32 %v1135, %v1136
  %v1138 = vsel %vm825, %v1055, 0.0
  %v1139 = vadd.f32 %v1137, %v1138
  %v1140 = vsel %vm825, %v1056, 0.0
  %v1141 = vadd.f32 %v1139, %v1140
  %v1142 = vsel %vm825, %v1057, 0.0
  %v1143 = vadd.f32 %v1141, %v1142
  %v1144 = vsel %vm825, %v1058, 0.0
  %v1145 = vadd.f32 %v1143, %v1144
  %v1146 = vsel %vm825, %v1059, 0.0
  %v1147 = vadd.f32 %v1145, %v1146
  %v1148 = vsel %vm825, %v1060, 0.0
  %v1149 = vadd.f32 %v1147, %v1148
  %v1150 = vsel %vm825, %v1061, 0.0
  %v1151 = vadd.f32 %v1149, %v1150
  %v1152 = vsel %vm825, %v1062, 0.0
  %v1153 = vadd.f32 %v1151, %v1152
  %v1154 = vsel %vm825, %v1063, 0.0
  %v1155 = vadd.f32 %v1153, %v1154
  %v1156 = vsel %vm825, %v1064, 0.0
  %v1157 = vadd.f32 %v1155, %v1156
  %v1158 = vsel %vm825, %v1065, 0.0
  %v1159 = vadd.f32 %v1157, %v1158
  %v1160 = vsel %vm825, %v1066, 0.0
  %v1161 = vadd.f32 %v1159, %v1160
  %v1162 = vsel %vm825, %v1067, 0.0
  %v1163 = vadd.f32 %v1161, %v1162
  %v1164 = vsel %vm825, %v1068, 0.0
  %v1165 = vadd.f32 %v1163, %v1164
  %v1166 = vsel %vm825, %v1069, 0.0
  %v1167 = vadd.f32 %v1165, %v1166
  %v1168 = vsel %vm825, %v1070, 0.0
  %v1169 = vadd.f32 %v1167, %v1168
  %v1170 = vsel %vm825, %v1071, 0.0
  %v1171 = vadd.f32 %v1169, %v1170
  %v1172 = vsel %vm825, %v1072, 0.0
  %v1173 = vadd.f32 %v1171, %v1172
  %v1174 = vsel %vm825, %v1073, 0.0
  %v1175 = vadd.f32 %v1173, %v1174
  %v1176 = vsel %vm825, %v1074, 0.0
  %v1177 = vadd.f32 %v1175, %v1176
  %v1178 = vsel %vm825, %v1075, 0.0
  %v1179 = vadd.f32 %v1177, %v1178
  %v1180 = vsel %vm825, %v1076, 0.0
  %v1181 = vadd.f32 %v1179, %v1180
  %v1182 = vsel %vm825, %v1077, 0.0
  %v1183 = vadd.f32 %v1181, %v1182
  %v1184 = vsel %vm825, %v1078, 0.0
  %v1185 = vadd.f32 %v1183, %v1184
  %v1186 = vsel %vm825, %v1079, 0.0
  %v1187 = vadd.f32 %v1185, %v1186
  %v1188 = vsel %vm825, %v1080, 0.0
  %v1189 = vadd.f32 %v1187, %v1188
  %v1190 = vsel %vm825, %v1081, 0.0
  %v1191 = vadd.f32 %v1189, %v1190
  %v1192 = vsel %vm825, %v1082, 0.0
  %v1193 = vadd.f32 %v1191, %v1192
  %v1194 = vsel %vm825, %v1083, 0.0
  %v1195 = vadd.f32 %v1193, %v1194
  %v1196 = vsel %vm825, %v1084, 0.0
  %v1197 = vadd.f32 %v1195, %v1196
  %v1198 = vsel %vm825, %v1085, 0.0
  %v1199 = vadd.f32 %v1197, %v1198
  %v1200 = vsel %vm825, %v1086, 0.0
  %v1201 = vadd.f32 %v1199, %v1200
  %v1202 = vsel %vm825, %v1087, 0.0
  %v1203 = vadd.f32 %v1201, %v1202
  %v1204 = vsel %vm825, %v1088, 0.0
  %v1205 = vadd.f32 %v1203, %v1204
  %v1206 = vsel %vm825, %v1089, 0.0
  %v1207 = vadd.f32 %v1205, %v1206
  %v1208 = vsel %vm825, %v1090, 0.0
  %v1209 = vadd.f32 %v1207, %v1208
  %v1210 = vsel %vm825, %v1091, 0.0
  %v1211 = vadd.f32 %v1209, %v1210
  %v1212 = vsel %vm825, %v1092, 0.0
  %v1213 = vadd.f32 %v1211, %v1212
  %v1214 = vsel %vm825, %v1093, 0.0
  %v1215 = vadd.f32 %v1213, %v1214
  %v1216 = vsel %vm825, %v1094, 0.0
  %v1217 = vadd.f32 %v1215, %v1216
  %v1218 = vsel %vm825, %v1095, 0.0
  %v1219 = vadd.f32 %v1217, %v1218
  %v1220 = vsel %vm825, %v1096, 0.0
  %v1221 = vadd.f32 %v1219, %v1220
  %v1222 = vsel %vm825, %v1097, 0.0
  %v1223 = vadd.f32 %v1221, %v1222
  %v1224 = vsel %vm825, %v1098, 0.0
  %v1225 = vadd.f32 %v1223, %v1224
  %v1226 = vrot.slane %v1225, 4
  %v1227 = vadd.f32 %v1225, %v1226
  %v1228 = vrot.slane %v1227, 2
  %v1229 = vadd.f32 %v1227, %v1228
  %v1230 = vrot.slane %v1229, 1
  %v1231 = vadd.f32 %v1229, %v1230
  %v1232 = vadd.f32 %v1034, %v1231
  %1233 = vst.msk [vmem:[%s4] sm:$0x1] %vm1032, %v1232
  // Predicated region
  $region14: #{generator_forward.15} parent=0 // pred_check
    _
  $region15: #{generator_forward.15} parent=0 // pred_check_branch
    %1235 = sbr.rel (0) target = $region17
  $region16: #{generator_forward.15} parent=0 // pred_region
    _
  $region17: #{generator_forward.15} parent=0 // pred_fallthru
    _
  // Predicated region
  $region18: #{generator_forward.15} parent=0 // pred_check
    _
  $region19: #{generator_forward.15} parent=0 // pred_check_branch
    %1237 = sbr.rel (0) target = $region21
  $region20: #{generator_forward.15} parent=0 // pred_region
    _
  $region21: #{generator_forward.15} parent=0 // pred_fallthru
    _
  // Predicated region
  $region22: #{generator_forward.15} parent=0 // pred_check
    _
  $region23: #{generator_forward.15} parent=0 // pred_check_branch
    %1239 = sbr.rel (0) target = $region25
  $region24: #{generator_forward.15} parent=0 // pred_region
    _
  $region25: #{generator_forward.15} parent=0 // pred_fallthru
    _
  // Predicated region
  $region26: #{generator_forward.15} parent=0 // pred_check
    _
  $region27: #{generator_forward.15} parent=0 // pred_check_branch
    %1241 = sbr.rel (0) target = $region29
  $region28: #{generator_forward.15} parent=0 // pred_region
    _
  $region29: #{generator_forward.15} parent=0 // pred_fallthru
    _
  // Predicated region
  $region30: #{generator_forward.15} parent=0 // pred_check
    _
  $region31: #{generator_forward.15} parent=0 // pred_check_branch
    %1243 = sbr.rel (0) target = $region33
  $region32: #{generator_forward.15} parent=0 // pred_region
    _
  $region33: #{generator_forward.15} parent=0 // pred_fallthru
    _
  // Predicated region
  $region34: #{generator_forward.15} parent=0 // pred_check
    _
  $region35: #{generator_forward.15} parent=0 // pred_check_branch
    %1245 = sbr.rel (0) target = $region37
  $region36: #{generator_forward.15} parent=0 // pred_region
    _
  $region37: #{generator_forward.15} parent=0 // pred_fallthru
    _

// kernel: tile.78
$region0: #{tile.78}
  #allocation0 [shape = 's32[1]{0}', space=sflag, size = 0x4, scoped, tag = 'scoped memory for tile.78']
  %s0 = inlined_call_operand.vmem [shape: f32[8], index: 0, kind: input, shape index: {}]
  %s1 = inlined_call_operand.vmem [shape: f32[32,8], index: 1, kind: output, shape index: {}]
  // Predicated region
  $region2: #{tile.78} parent=0 // pred_check
    _
  $region3: #{tile.78} parent=0 // pred_check_branch
    %3 = sbr.rel (0) target = $region5
  $region4: #{tile.78} parent=0 // pred_region
    _
  $region5: #{tile.78} parent=0 // pred_fallthru
    _
  %v4 = vld [vmem:[%s0] ss:$0 sm:$0xff]
  %5 = vst [vmem:[%s1] sm:$0xff] %v4
  %s6 = scalar_lea.vmem %s1, 8
  %7 = vst [vmem:[%s6] sm:$0xff] %v4
  %s8 = scalar_lea.vmem %s1, 16
  %9 = vst [vmem:[%s8] sm:$0xff] %v4
  %s10 = scalar_lea.vmem %s1, 24
  %11 = vst [vmem:[%s10] sm:$0xff] %v4

// kernel: tile.79
$region0: #{tile.79}
  %s0 = inlined_call_operand.vmem [shape: f32[32,8], index: 0, kind: input, shape index: {}]
  %s1 = inlined_call_operand.vmem [shape: f32[1,256], index: 1, kind: output, shape index: {}]
  $region1: #{tile.79} parent=0
    #allocation0 [shape = 'u8[8192]{0}', space=vmem, size = 0x2000, scoped, tag = 'scoped mem for output reshape']
    %s2 = smov 3
    %v3 = vld [vmem:[%s0] ss:$16 sm:%s2]
    %vm4 = vcmask 64512
    %5 = vst.msk [vmem:[#allocation0] ss:$8 sm:$0x3] %vm4, %v3
    %s6 = scalar_lea.vmem %s0, 15
    %s7 = smov 3
    %v8 = vld [vmem:[%s6] ss:$16 sm:%s7]
    %9 = vrot.lane.b32.xlu0 %v8, 120
    %v10 = vpop.permute.xlu0 %9
    %vm11 = vcmask 1048512
    %12 = vst.msk [vmem:[#allocation0] ss:$8 sm:$0x3] %vm11, %v10
    %s13 = scalar_lea.vmem %s0, 14
    %s14 = smov 3
    %v15 = vld [vmem:[%s13] ss:$16 sm:%s14]
    %16 = vrot.lane.b32.xlu0 %v15, 112
    %v17 = vpop.permute.xlu0 %16
    %vm18 = vcmask 982912
    %19 = vst.msk [vmem:[#allocation0] ss:$8 sm:$0x3] %vm18, %v17
    %s20 = scalar_lea.vmem %s0, 13
    %s21 = smov 3
    %v22 = vld [vmem:[%s20] ss:$16 sm:%s21]
    %23 = vrot.lane.b32.xlu0 %v22, 104
    %v24 = vpop.permute.xlu0 %23
    %vm25 = vcmask 917312
    %26 = vst.msk [vmem:[#allocation0] ss:$8 sm:$0x3] %vm25, %v24
    %s27 = scalar_lea.vmem %s0, 12
    %s28 = smov 3
    %v29 = vld [vmem:[%s27] ss:$16 sm:%s28]
    %30 = vrot.lane.b32.xlu0 %v29, 96
    %v31 = vpop.permute.xlu0 %30
    %vm32 = vcmask 851712
    %33 = vst.msk [vmem:[#allocation0] ss:$8 sm:$0x3] %vm32, %v31
    %s34 = scalar_lea.vmem %s0, 11
    %s35 = smov 3
    %v36 = vld [vmem:[%s34] ss:$16 sm:%s35]
    %37 = vrot.lane.b32.xlu0 %v36, 88
    %v38 = vpop.permute.xlu0 %37
    %vm39 = vcmask 786112
    %40 = vst.msk [vmem:[#allocation0] ss:$8 sm:$0x3] %vm39, %v38
    %s41 = scalar_lea.vmem %s0, 10
    %s42 = smov 3
    %v43 = vld [vmem:[%s41] ss:$16 sm:%s42]
    %44 = vrot.lane.b32.xlu0 %v43, 80
    %v45 = vpop.permute.xlu0 %44
    %vm46 = vcmask 720512
    %47 = vst.msk [vmem:[#allocation0] ss:$8 sm:$0x3] %vm46, %v45
    %s48 = scalar_lea.vmem %s0, 9
    %s49 = smov 3
    %v50 = vld [vmem:[%s48] ss:$16 sm:%s49]
    %51 = vrot.lane.b32.xlu0 %v50, 72
    %v52 = vpop.permute.xlu0 %51
    %vm53 = vcmask 654912
    %54 = vst.msk [vmem:[#allocation0] ss:$8 sm:$0x3] %vm53, %v52
    %s55 = scalar_lea.vmem %s0, 8
    %s56 = smov 3
    %v57 = vld [vmem:[%s55] ss:$16 sm:%s56]
    %58 = vrot.lane.b32.xlu0 %v57, 64
    %v59 = vpop.permute.xlu0 %58
    %vm60 = vcmask 589312
    %61 = vst.msk [vmem:[#allocation0] ss:$8 sm:$0x3] %vm60, %v59
    %s62 = scalar_lea.vmem %s0, 7
    %s63 = smov 3
    %v64 = vld [vmem:[%s62] ss:$16 sm:%s63]
    %65 = vrot.lane.b32.xlu0 %v64, 56
    %v66 = vpop.permute.xlu0 %65
    %vm67 = vcmask 523712
    %68 = vst.msk [vmem:[#allocation0] ss:$8 sm:$0x3] %vm67, %v66
    %s69 = scalar_lea.vmem %s0, 6
    %s70 = smov 3
    %v71 = vld [vmem:[%s69] ss:$16 sm:%s70]
    %72 = vrot.lane.b32.xlu0 %v71, 48
    %v73 = vpop.permute.xlu0 %72
    %vm74 = vcmask 458112
    %75 = vst.msk [vmem:[#allocation0] ss:$8 sm:$0x3] %vm74, %v73
    %s76 = scalar_lea.vmem %s0, 5
    %s77 = smov 3
    %v78 = vld [vmem:[%s76] ss:$16 sm:%s77]
    %79 = vrot.lane.b32.xlu0 %v78, 40
    %v80 = vpop.permute.xlu0 %79
    %vm81 = vcmask 392512
    %82 = vst.msk [vmem:[#allocation0] ss:$8 sm:$0x3] %vm81, %v80
    %s83 = scalar_lea.vmem %s0, 4
    %s84 = smov 3
    %v85 = vld [vmem:[%s83] ss:$16 sm:%s84]
    %86 = vrot.lane.b32.xlu0 %v85, 32
    %v87 = vpop.permute.xlu0 %86
    %vm88 = vcmask 326912
    %89 = vst.msk [vmem:[#allocation0] ss:$8 sm:$0x3] %vm88, %v87
    %s90 = scalar_lea.vmem %s0, 3
    %s91 = smov 3
    %v92 = vld [vmem:[%s90] ss:$16 sm:%s91]
    %93 = vrot.lane.b32.xlu0 %v92, 24
    %v94 = vpop.permute.xlu0 %93
    %vm95 = vcmask 261312
    %96 = vst.msk [vmem:[#allocation0] ss:$8 sm:$0x3] %vm95, %v94
    %s97 = scalar_lea.vmem %s0, 2
    %s98 = smov 3
    %v99 = vld [vmem:[%s97] ss:$16 sm:%s98]
    %100 = vrot.lane.b32.xlu0 %v99, 16
    %v101 = vpop.permute.xlu0 %100
    %vm102 = vcmask 195712
    %103 = vst.msk [vmem:[#allocation0] ss:$8 sm:$0x3] %vm102, %v101
    %s104 = scalar_lea.vmem %s0, 1
    %s105 = smov 3
    %v106 = vld [vmem:[%s104] ss:$16 sm:%s105]
    %107 = vrot.lane.b32.xlu0 %v106, 8
    %v108 = vpop.permute.xlu0 %107
    %vm109 = vcmask 130112
    %110 = vst.msk [vmem:[#allocation0] ss:$8 sm:$0x3] %vm109, %v108
    %s112 = sshllo.u32 0, 1
    %v114 = vld [vmem:[#allocation0] sm:%s112]
    %s115 = sshllo.u32 0, 1
    %116 = vst [vmem:[%s1] sm:%s115] %v114
    %s117 = scalar_lea.vmem [#allocation0], 8
    %v118 = vld [vmem:[%s117] sm:%s112]
    %s119 = sshllo.u32 0, 1
    %s120 = scalar_lea.vmem %s1, 1
    %121 = vst [vmem:[%s120] sm:%s119] %v118

// kernel: generator_forward.16
$region0: #{generator_forward.16}
  #allocation0 [shape = 'u32[]', space=smem, size = 0x4, offset = 0x4, fixed_abs, tag = 'smem constant byte address 0x4 - core index']
  #allocation1 [shape = 'u32[144,128]{1,0:T(1,128)}', space=vmem, size = 0x12000, scoped, tag = 'internal scratch']
  %s0 = inlined_call_operand.vmem [shape: f32[64,256], index: 0, kind: input, shape index: {}]
  %s1 = inlined_call_operand.vmem [shape: f32[1,256], index: 1, kind: input, shape index: {}]
  %s2 = inlined_call_operand.vmem [shape: f32[1,256], index: 2, kind: input, shape index: {}]
  %s3 = inlined_call_operand.vmem [shape: f32[64,256], index: 3, kind: output, shape index: {}]
  %s4 = sld [smem:[#allocation0]]
  $region22: #{generator_forward.16} parent=0
    _
  %s6 = ssub.s32 1, %s4
  %s7 = scalar_select 0, %s6, %s4
  // Predicated region
  $region2: #{generator_forward.16} parent=0 // pred_check
    _
  $region3: #{generator_forward.16} parent=0 // pred_check_branch
    %9 = sbr.rel (0) target = $region5
  $region4: #{generator_forward.16} parent=0 // pred_region
    _
  $region5: #{generator_forward.16} parent=0 // pred_fallthru
    _
  // Predicated region
  $region6: #{generator_forward.16} parent=0 // pred_check
    _
  $region7: #{generator_forward.16} parent=0 // pred_check_branch
    %11 = sbr.rel (0) target = $region9
  $region8: #{generator_forward.16} parent=0 // pred_region
    _
  $region9: #{generator_forward.16} parent=0 // pred_fallthru
    _
  // Predicated region
  $region10: #{generator_forward.16} parent=0 // pred_check
    _
  $region11: #{generator_forward.16} parent=0 // pred_check_branch
    %13 = sbr.rel (0) target = $region13
  $region12: #{generator_forward.16} parent=0 // pred_region
    _
  $region13: #{generator_forward.16} parent=0 // pred_fallthru
    _
  %v14 = vld [vmem:[%s0] sm:$0xff]
  %v15 = vld [vmem:[%s0 + $0x8] sm:$0xff]
  %v16 = vld [vmem:[%s0 + $0x10] sm:$0xff]
  %v17 = vld [vmem:[%s0 + $0x18] sm:$0xff]
  %v18 = vld [vmem:[%s0 + $0x20] sm:$0xff]
  %v19 = vld [vmem:[%s0 + $0x28] sm:$0xff]
  %v20 = vld [vmem:[%s0 + $0x30] sm:$0xff]
  %v21 = vld [vmem:[%s0 + $0x38] sm:$0xff]
  %v22 = vld [vmem:[%s0 + $0x40] sm:$0xff]
  %v23 = vld [vmem:[%s0 + $0x48] sm:$0xff]
  %v24 = vld [vmem:[%s0 + $0x50] sm:$0xff]
  %v25 = vld [vmem:[%s0 + $0x58] sm:$0xff]
  %v26 = vld [vmem:[%s0 + $0x60] sm:$0xff]
  %v27 = vld [vmem:[%s0 + $0x68] sm:$0xff]
  %v28 = vld [vmem:[%s0 + $0x70] sm:$0xff]
  %v29 = vld [vmem:[%s0 + $0x78] sm:$0xff]
  %v30 = vld [vmem:[%s1] sm:$0x3]
  %v32 = vlaneseq
  %v33 = vshrl.u32 %v32, 7
  %v34 = vsub.s32 0, %v33
  %v35 = vrot.slane %v30, %v34
  %v36 = vlaneseq
  %v37 = vshrl.u32 %v36, 7
  %v38 = vsub.s32 1, %v37
  %v39 = vrot.slane %v30, %v38
  %v42 = vmul.f32 %v14, %v35
  %v43 = vmul.f32 %v15, %v39
  %v44 = vmul.f32 %v16, %v35
  %v45 = vmul.f32 %v17, %v39
  %v46 = vmul.f32 %v18, %v35
  %v47 = vmul.f32 %v19, %v39
  %v48 = vmul.f32 %v20, %v35
  %v49 = vmul.f32 %v21, %v39
  %v50 = vmul.f32 %v22, %v35
  %v51 = vmul.f32 %v23, %v39
  %v52 = vmul.f32 %v24, %v35
  %v53 = vmul.f32 %v25, %v39
  %v54 = vmul.f32 %v26, %v35
  %v55 = vmul.f32 %v27, %v39
  %v56 = vmul.f32 %v28, %v35
  %v57 = vmul.f32 %v29, %v39
  %v58 = vld [vmem:[%s2] sm:$0x3]
  %v60 = vlaneseq
  %v61 = vshrl.u32 %v60, 7
  %v62 = vsub.s32 0, %v61
  %v63 = vrot.slane %v58, %v62
  %v64 = vlaneseq
  %v65 = vshrl.u32 %v64, 7
  %v66 = vsub.s32 1, %v65
  %v67 = vrot.slane %v58, %v66
  %v70 = vadd.f32 %v42, %v63
  %v71 = vadd.f32 %v43, %v67
  %v72 = vadd.f32 %v44, %v63
  %v73 = vadd.f32 %v45, %v67
  %v74 = vadd.f32 %v46, %v63
  %v75 = vadd.f32 %v47, %v67
  %v76 = vadd.f32 %v48, %v63
  %v77 = vadd.f32 %v49, %v67
  %v78 = vadd.f32 %v50, %v63
  %v79 = vadd.f32 %v51, %v67
  %v80 = vadd.f32 %v52, %v63
  %v81 = vadd.f32 %v53, %v67
  %v82 = vadd.f32 %v54, %v63
  %v83 = vadd.f32 %v55, %v67
  %v84 = vadd.f32 %v56, %v63
  %v85 = vadd.f32 %v57, %v67
  %v86 = vmax.f32 %v70, 0.0
  %v87 = vmax.f32 %v71, 0.0
  %v88 = vmax.f32 %v72, 0.0
  %v89 = vmax.f32 %v73, 0.0
  %v90 = vmax.f32 %v74, 0.0
  %v91 = vmax.f32 %v75, 0.0
  %v92 = vmax.f32 %v76, 0.0
  %v93 = vmax.f32 %v77, 0.0
  %v94 = vmax.f32 %v78, 0.0
  %v95 = vmax.f32 %v79, 0.0
  %v96 = vmax.f32 %v80, 0.0
  %v97 = vmax.f32 %v81, 0.0
  %v98 = vmax.f32 %v82, 0.0
  %v99 = vmax.f32 %v83, 0.0
  %v100 = vmax.f32 %v84, 0.0
  %v101 = vmax.f32 %v85, 0.0
  %102 = vst [vmem:[%s3] sm:$0xff] %v86
  %103 = vst [vmem:[%s3 + $0x8] sm:$0xff] %v87
  %104 = vst [vmem:[%s3 + $0x10] sm:$0xff] %v88
  %105 = vst [vmem:[%s3 + $0x18] sm:$0xff] %v89
  %106 = vst [vmem:[%s3 + $0x20] sm:$0xff] %v90
  %107 = vst [vmem:[%s3 + $0x28] sm:$0xff] %v91
  %108 = vst [vmem:[%s3 + $0x30] sm:$0xff] %v92
  %109 = vst [vmem:[%s3 + $0x38] sm:$0xff] %v93
  %110 = vst [vmem:[%s3 + $0x40] sm:$0xff] %v94
  %111 = vst [vmem:[%s3 + $0x48] sm:$0xff] %v95
  %112 = vst [vmem:[%s3 + $0x50] sm:$0xff] %v96
  %113 = vst [vmem:[%s3 + $0x58] sm:$0xff] %v97
  %114 = vst [vmem:[%s3 + $0x60] sm:$0xff] %v98
  %115 = vst [vmem:[%s3 + $0x68] sm:$0xff] %v99
  %116 = vst [vmem:[%s3 + $0x70] sm:$0xff] %v100
  %117 = vst [vmem:[%s3 + $0x78] sm:$0xff] %v101
  // Predicated region
  $region14: #{generator_forward.16} parent=0 // pred_check
    _
  $region15: #{generator_forward.16} parent=0 // pred_check_branch
    %119 = sbr.rel (0) target = $region17
  $region16: #{generator_forward.16} parent=0 // pred_region
    _
  $region17: #{generator_forward.16} parent=0 // pred_fallthru
    _
  // Predicated region
  $region18: #{generator_forward.16} parent=0 // pred_check
    _
  $region19: #{generator_forward.16} parent=0 // pred_check_branch
    %121 = sbr.rel (0) target = $region21
  $region20: #{generator_forward.16} parent=0 // pred_region
    _
  $region21: #{generator_forward.16} parent=0 // pred_fallthru
    _

// kernel: generator_forward.17
$region0: #{generator_forward.17}
  #allocation0 [shape = 'u32[]', space=smem, size = 0x4, offset = 0x4, fixed_abs, tag = 'smem constant byte address 0x4 - core index']
  #allocation1 [shape = 'u32[144,128]{1,0:T(1,128)}', space=vmem, size = 0x12000, scoped, tag = 'internal scratch']
  %s0 = inlined_call_operand.vmem [shape: bf16[2048,72], index: 0, kind: input, shape index: {}]
  %s1 = inlined_call_operand.vmem [shape: bf16[72,16], index: 1, kind: input, shape index: {}]
  %s2 = inlined_call_operand.vmem [shape: f32[2048,16], index: 2, kind: output, shape index: {}]
  %s3 = sld [smem:[#allocation0]]
  $region41: #{generator_forward.17} parent=0
    _
  %s5 = ssub.s32 1, %s3
  %s6 = scalar_select 0, %s5, %s3
  loop: start=0, step=1, limit=6
  $region2: #{generator_forward.17} parent=0 // loop_pre_header
    _
  $region3: #{generator_forward.17} parent=0 // loop_header
    %s8 = sphi 0, %s12
    %p9 = scmp.ge.s32.totalorder %s8, 6
    %s18 = sphi 0, %s20
    %s21 = sphi 0, %s18
    %s22 = sphi 0, %s21
    %s38 = sphi 0, %s22
    %s42 = sphi 0, %s42
    %s44 = sphi 0, %s42
    %s45 = sphi 0, %s44
    %s59 = sphi 0, %s45
    %s65 = sphi 0, %s67
    %s68 = sphi 0, %s65
    %s69 = sphi 0, %s68
    %s85 = sphi 0, %s69
  $region4: #{generator_forward.17} parent=0 // loop_header_branch
    %11 = sbr.rel (%p9) target = $region8
  $region5: #{generator_forward.17} parent=0 // loop_body
    %s13 = ssub.s32 %s8, 1
    %s14 = ssub.s32 %s8, 2
    %s15 = sadd.s32 %s8, 1
    %s16 = ssub.s32 %s8, %s15
    %p17 = scmp.eq.s32.totalorder %s16, 0
    %s19 = sadd.s32 %s18, 1
    %s20 = scalar_select %p17, %s18, %s19
    %p23 = pneg %p17
    %p24 = scmp.eq.s32.totalorder %s8, 3
    %p25 = por %p23, %p24
    %p26 = scmp.ne.s32.totalorder %s18, %s21
    %p27 = scmp.eq.s32.totalorder %s8, 0
    %p28 = por %p26, %p27
    %p29 = scmp.ne.s32.totalorder %s18, %s21
    %p30 = scmp.eq.s32.totalorder %s13, 3
    %p31 = por %p29, %p30
    %p32 = scmp.ne.s32.totalorder %s21, %s22
    %p33 = scmp.eq.s32.totalorder %s13, 0
    %p34 = por %p32, %p33
    %p35 = scmp.ne.s32.totalorder %s21, %s22
    %p36 = scmp.eq.s32.totalorder %s14, 3
    %p37 = por %p35, %p36
    %p39 = scmp.ne.s32.totalorder %s22, %s38
    %p40 = scmp.eq.s32.totalorder %s14, 0
    %p41 = por %p39, %p40
    %s43 = sadd.s32 %s42, 1
    %p46 = scmp.eq.s32.totalorder %s8, 3
    %p47 = scmp.ne.s32.totalorder %s42, %s44
    %p48 = scmp.eq.s32.totalorder %s8, 0
    %p49 = por %p47, %p48
    %p50 = scmp.ne.s32.totalorder %s42, %s44
    %p51 = scmp.eq.s32.totalorder %s13, 3
    %p52 = por %p50, %p51
    %p53 = scmp.ne.s32.totalorder %s44, %s45
    %p54 = scmp.eq.s32.totalorder %s13, 0
    %p55 = por %p53, %p54
    %p56 = scmp.ne.s32.totalorder %s44, %s45
    %p57 = scmp.eq.s32.totalorder %s14, 3
    %p58 = por %p56, %p57
    %p60 = scmp.ne.s32.totalorder %s45, %s59
    %p61 = scmp.eq.s32.totalorder %s14, 0
    %p62 = por %p60, %p61
    %s63 = ssub.s32 %s8, %s15
    %p64 = scmp.eq.s32.totalorder %s63, 0
    %s66 = sadd.s32 %s65, 1
    %s67 = scalar_select %p64, %s65, %s66
    %p70 = pneg %p64
    %p71 = scmp.eq.s32.totalorder %s8, 3
    %p72 = por %p70, %p71
    %p73 = scmp.ne.s32.totalorder %s65, %s68
    %p74 = scmp.eq.s32.totalorder %s8, 0
    %p75 = por %p73, %p74
    %p76 = scmp.ne.s32.totalorder %s65, %s68
    %p77 = scmp.eq.s32.totalorder %s13, 3
    %p78 = por %p76, %p77
    %p79 = scmp.ne.s32.totalorder %s68, %s69
    %p80 = scmp.eq.s32.totalorder %s13, 0
    %p81 = por %p79, %p80
    %p82 = scmp.ne.s32.totalorder %s68, %s69
    %p83 = scmp.eq.s32.totalorder %s14, 3
    %p84 = por %p82, %p83
    %p86 = scmp.ne.s32.totalorder %s69, %s85
    %p87 = scmp.eq.s32.totalorder %s14, 0
    %p88 = por %p86, %p87
    %p89 = scmp.le.s32.totalorder 1, %s8
    %p90 = scmp.lt.s32.totalorder %s8, 5
    %p91 = pnand %p89, %p90
    %p92 = pneg %p91
    // Predicated region
    $region9: #{generator_forward.17} parent=5 // pred_check
      _
    $region10: #{generator_forward.17} parent=5 // pred_check_branch
      %94 = sbr.rel (%p91) target = $region12
    $region11: #{generator_forward.17} parent=5 // pred_region
      %s95 = ssub.s32 %s8, 1
      // Predicated region
      $region13: #{generator_forward.17} parent=11 // pred_check
        %p96 = pneg %p55
      $region14: #{generator_forward.17} parent=11 // pred_check_branch
        %98 = sbr.rel (%p96) target = $region16
      $region15: #{generator_forward.17} parent=11 // pred_region
        _
      $region16: #{generator_forward.17} parent=11 // pred_fallthru
        _
    $region12: #{generator_forward.17} parent=5 // pred_fallthru
      _
    %p99 = scmp.lt.s32.totalorder %s8, 4
    // Predicated region
    $region17: #{generator_forward.17} parent=5 // pred_check
      %p100 = pneg %p99
    $region18: #{generator_forward.17} parent=5 // pred_check_branch
      %102 = sbr.rel (%p100) target = $region20
    $region19: #{generator_forward.17} parent=5 // pred_region
      // Predicated region
      $region21: #{generator_forward.17} parent=19 // pred_check
        %p103 = pneg %p28
      $region22: #{generator_forward.17} parent=19 // pred_check_branch
        %105 = sbr.rel (%p103) target = $region24
      $region23: #{generator_forward.17} parent=19 // pred_region
        %s106 = smul.u32 64, %s8
        %p107 = scmp.lt.s32.totalorder %s106, 255
        %s108 = scalar_select %p107, %s106, 255
        %s109 = smul.addr %s108, 4
        %s110 = scalar_lea.vmem %s0, %s109
        %s111 = smul.u32 64, %s8
      $region24: #{generator_forward.17} parent=19 // pred_fallthru
        _
    $region20: #{generator_forward.17} parent=5 // pred_fallthru
      _
    %p112 = scmp.le.s32.totalorder 1, %s8
    %p113 = scmp.lt.s32.totalorder %s8, 5
    %p114 = pnand %p112, %p113
    %p115 = pneg %p114
    // Predicated region
    $region25: #{generator_forward.17} parent=5 // pred_check
      _
    $region26: #{generator_forward.17} parent=5 // pred_check_branch
      %117 = sbr.rel (%p114) target = $region28
    $region27: #{generator_forward.17} parent=5 // pred_region
      %s118 = ssub.s32 %s8, 1
      %s119 = smul.u32 64, %s13
      %p120 = scmp.lt.s32.totalorder %s119, 255
      %s121 = scalar_select %p120, %s119, 255
      %s122 = smul.addr %s121, 4
      %s123 = scalar_lea.vmem %s0, %s122
      %p124 = pneg %p34
      %p125 = pneg %p31
      %p126 = pneg %p55
      %p127 = pneg %p52
      %p128 = pneg %p81
      %p129 = pneg %p78
      %s130 = smul.u32 64, %s13
      %p131 = scmp.lt.s32.totalorder %s130, 255
      %s132 = scalar_select %p131, %s130, 255
      %s133 = smul.addr %s132, 8
      %s134 = scalar_lea.vmem %s2, %s133
      %s135 = smul.u32 64, %s13
      %p136 = scmp.lt.s32.totalorder %s135, 255
      %s137 = scalar_select %p136, %s135, 255
      %s138 = smul.addr %s137, 4
      %s139 = scalar_lea.vmem %s0, %s138
      %s140 = smul.u32 64, %s13
      %s141 = smul.u32 64, %s13
      %p142 = scmp.lt.s32.totalorder %s141, 255
      %s143 = scalar_select %p142, %s141, 255
      %s144 = smul.addr %s143, 8
      %s145 = scalar_lea.vmem %s2, %s144
      %s146 = smul.u32 64, %s13
      %v148 = vld [vmem:[%s139] sm:$0xf]
      %v149 = vld [vmem:[%s139 + $0x4] sm:$0xf]
      %v150 = vld [vmem:[%s139 + $0x8] sm:$0xf]
      %v151 = vld [vmem:[%s139 + $0xc] sm:$0xf]
      %v152 = vld [vmem:[%s139 + $0x10] sm:$0xf]
      %v153 = vld [vmem:[%s139 + $0x14] sm:$0xf]
      %v154 = vld [vmem:[%s139 + $0x18] sm:$0xf]
      %v155 = vld [vmem:[%s139 + $0x1c] sm:$0xf]
      %v156 = vld [vmem:[%s139 + $0x20] sm:$0xf]
      %v157 = vld [vmem:[%s139 + $0x24] sm:$0xf]
      %v158 = vld [vmem:[%s139 + $0x28] sm:$0xf]
      %v159 = vld [vmem:[%s139 + $0x2c] sm:$0xf]
      %v160 = vld [vmem:[%s139 + $0x30] sm:$0xf]
      %v161 = vld [vmem:[%s139 + $0x34] sm:$0xf]
      %v162 = vld [vmem:[%s139 + $0x38] sm:$0xf]
      %v163 = vld [vmem:[%s139 + $0x3c] sm:$0xf]
      %v164 = vld [vmem:[%s139 + $0x40] sm:$0xf]
      %v165 = vld [vmem:[%s139 + $0x44] sm:$0xf]
      %v166 = vld [vmem:[%s139 + $0x48] sm:$0xf]
      %v167 = vld [vmem:[%s139 + $0x4c] sm:$0xf]
      %v168 = vld [vmem:[%s139 + $0x50] sm:$0xf]
      %v169 = vld [vmem:[%s139 + $0x54] sm:$0xf]
      %v170 = vld [vmem:[%s139 + $0x58] sm:$0xf]
      %v171 = vld [vmem:[%s139 + $0x5c] sm:$0xf]
      %v172 = vld [vmem:[%s139 + $0x60] sm:$0xf]
      %v173 = vld [vmem:[%s139 + $0x64] sm:$0xf]
      %v174 = vld [vmem:[%s139 + $0x68] sm:$0xf]
      %v175 = vld [vmem:[%s139 + $0x6c] sm:$0xf]
      %v176 = vld [vmem:[%s139 + $0x70] sm:$0xf]
      %v177 = vld [vmem:[%s139 + $0x74] sm:$0xf]
      %v178 = vld [vmem:[%s139 + $0x78] sm:$0xf]
      %v179 = vld [vmem:[%s139 + $0x7c] sm:$0xf]
      %v180 = vld [vmem:[%s139 + $0x80] sm:$0xf]
      %v181 = vld [vmem:[%s139 + $0x84] sm:$0xf]
      %v182 = vld [vmem:[%s139 + $0x88] sm:$0xf]
      %v183 = vld [vmem:[%s139 + $0x8c] sm:$0xf]
      %v184 = vld [vmem:[%s139 + $0x90] sm:$0xf]
      %v185 = vld [vmem:[%s139 + $0x94] sm:$0xf]
      %v186 = vld [vmem:[%s139 + $0x98] sm:$0xf]
      %v187 = vld [vmem:[%s139 + $0x9c] sm:$0xf]
      %v188 = vld [vmem:[%s139 + $0xa0] sm:$0xf]
      %v189 = vld [vmem:[%s139 + $0xa4] sm:$0xf]
      %v190 = vld [vmem:[%s139 + $0xa8] sm:$0xf]
      %v191 = vld [vmem:[%s139 + $0xac] sm:$0xf]
      %v192 = vld [vmem:[%s139 + $0xb0] sm:$0xf]
      %v193 = vld [vmem:[%s139 + $0xb4] sm:$0xf]
      %v194 = vld [vmem:[%s139 + $0xb8] sm:$0xf]
      %v195 = vld [vmem:[%s139 + $0xbc] sm:$0xf]
      %v196 = vld [vmem:[%s139 + $0xc0] sm:$0xf]
      %v197 = vld [vmem:[%s139 + $0xc4] sm:$0xf]
      %v198 = vld [vmem:[%s139 + $0xc8] sm:$0xf]
      %v199 = vld [vmem:[%s139 + $0xcc] sm:$0xf]
      %v200 = vld [vmem:[%s139 + $0xd0] sm:$0xf]
      %v201 = vld [vmem:[%s139 + $0xd4] sm:$0xf]
      %v202 = vld [vmem:[%s139 + $0xd8] sm:$0xf]
      %v203 = vld [vmem:[%s139 + $0xdc] sm:$0xf]
      %v204 = vld [vmem:[%s139 + $0xe0] sm:$0xf]
      %v205 = vld [vmem:[%s139 + $0xe4] sm:$0xf]
      %v206 = vld [vmem:[%s139 + $0xe8] sm:$0xf]
      %v207 = vld [vmem:[%s139 + $0xec] sm:$0xf]
      %v208 = vld [vmem:[%s139 + $0xf0] sm:$0xf]
      %v209 = vld [vmem:[%s139 + $0xf4] sm:$0xf]
      %v210 = vld [vmem:[%s139 + $0xf8] sm:$0xf]
      %v211 = vld [vmem:[%s139 + $0xfc] sm:$0xf]
      %v212 = vld [vmem:[%s1] sm:$0xf]
      %v213 = vld [vmem:[%s1 + $0x4] sm:$0xf]
      %v214 = vld [vmem:[%s1 + $0x8] sm:$0xf]
      %v215 = vld [vmem:[%s1 + $0xc] sm:$0xf]
      %v216 = vld [vmem:[%s1 + $0x10] sm:$0xf]
      %v217 = vld [vmem:[%s1 + $0x14] sm:$0xf]
      %v218 = vld [vmem:[%s1 + $0x18] sm:$0xf]
      %v219 = vld [vmem:[%s1 + $0x1c] sm:$0xf]
      %v220 = vld [vmem:[%s1 + $0x20] sm:$0xf]
      %v285 = vunpack.c.l.b16 %v148
      %v286 = vunpack.c.l.b16 %v149
      %v287 = vunpack.c.l.b16 %v150
      %v288 = vunpack.c.l.b16 %v151
      %v289 = vunpack.c.l.b16 %v152
      %v290 = vunpack.c.l.b16 %v153
      %v291 = vunpack.c.l.b16 %v154
      %v292 = vunpack.c.l.b16 %v155
      %v293 = vunpack.c.l.b16 %v156
      %v294 = vunpack.c.l.b16 %v157
      %v295 = vunpack.c.l.b16 %v158
      %v296 = vunpack.c.l.b16 %v159
      %v297 = vunpack.c.l.b16 %v160
      %v298 = vunpack.c.l.b16 %v161
      %v299 = vunpack.c.l.b16 %v162
      %v300 = vunpack.c.l.b16 %v163
      %v301 = vunpack.c.l.b16 %v164
      %v302 = vunpack.c.l.b16 %v165
      %v303 = vunpack.c.l.b16 %v166
      %v304 = vunpack.c.l.b16 %v167
      %v305 = vunpack.c.l.b16 %v168
      %v306 = vunpack.c.l.b16 %v169
      %v307 = vunpack.c.l.b16 %v170
      %v308 = vunpack.c.l.b16 %v171
      %v309 = vunpack.c.l.b16 %v172
      %v310 = vunpack.c.l.b16 %v173
      %v311 = vunpack.c.l.b16 %v174
      %v312 = vunpack.c.l.b16 %v175
      %v313 = vunpack.c.l.b16 %v176
      %v314 = vunpack.c.l.b16 %v177
      %v315 = vunpack.c.l.b16 %v178
      %v316 = vunpack.c.l.b16 %v179
      %v317 = vunpack.c.l.b16 %v180
      %v318 = vunpack.c.l.b16 %v181
      %v319 = vunpack.c.l.b16 %v182
      %v320 = vunpack.c.l.b16 %v183
      %v321 = vunpack.c.l.b16 %v184
      %v322 = vunpack.c.l.b16 %v185
      %v323 = vunpack.c.l.b16 %v186
      %v324 = vunpack.c.l.b16 %v187
      %v325 = vunpack.c.l.b16 %v188
      %v326 = vunpack.c.l.b16 %v189
      %v327 = vunpack.c.l.b16 %v190
      %v328 = vunpack.c.l.b16 %v191
      %v329 = vunpack.c.l.b16 %v192
      %v330 = vunpack.c.l.b16 %v193
      %v331 = vunpack.c.l.b16 %v194
      %v332 = vunpack.c.l.b16 %v195
      %v333 = vunpack.c.l.b16 %v196
      %v334 = vunpack.c.l.b16 %v197
      %v335 = vunpack.c.l.b16 %v198
      %v336 = vunpack.c.l.b16 %v199
      %v337 = vunpack.c.l.b16 %v200
      %v338 = vunpack.c.l.b16 %v201
      %v339 = vunpack.c.l.b16 %v202
      %v340 = vunpack.c.l.b16 %v203
      %v341 = vunpack.c.l.b16 %v204
      %v342 = vunpack.c.l.b16 %v205
      %v343 = vunpack.c.l.b16 %v206
      %v344 = vunpack.c.l.b16 %v207
      %v345 = vunpack.c.l.b16 %v208
      %v346 = vunpack.c.l.b16 %v209
      %v347 = vunpack.c.l.b16 %v210
      %v348 = vunpack.c.l.b16 %v211
      %v349 = vpack.c.b16 %v286, %v285
      %v350 = vpack.c.b16 %v288, %v287
      %v351 = vpack.c.b16 %v290, %v289
      %v352 = vpack.c.b16 %v292, %v291
      %v353 = vpack.c.b16 %v294, %v293
      %v354 = vpack.c.b16 %v296, %v295
      %v355 = vpack.c.b16 %v298, %v297
      %v356 = vpack.c.b16 %v300, %v299
      %v357 = vpack.c.b16 %v302, %v301
      %v358 = vpack.c.b16 %v304, %v303
      %v359 = vpack.c.b16 %v306, %v305
      %v360 = vpack.c.b16 %v308, %v307
      %v361 = vpack.c.b16 %v310, %v309
      %v362 = vpack.c.b16 %v312, %v311
      %v363 = vpack.c.b16 %v314, %v313
      %v364 = vpack.c.b16 %v316, %v315
      %v365 = vpack.c.b16 %v318, %v317
      %v366 = vpack.c.b16 %v320, %v319
      %v367 = vpack.c.b16 %v322, %v321
      %v368 = vpack.c.b16 %v324, %v323
      %v369 = vpack.c.b16 %v326, %v325
      %v370 = vpack.c.b16 %v328, %v327
      %v371 = vpack.c.b16 %v330, %v329
      %v372 = vpack.c.b16 %v332, %v331
      %v373 = vpack.c.b16 %v334, %v333
      %v374 = vpack.c.b16 %v336, %v335
      %v375 = vpack.c.b16 %v338, %v337
      %v376 = vpack.c.b16 %v340, %v339
      %v377 = vpack.c.b16 %v342, %v341
      %v378 = vpack.c.b16 %v344, %v343
      %v379 = vpack.c.b16 %v346, %v345
      %v380 = vpack.c.b16 %v348, %v347
      %v390 = vunpack.c.l.b16 %v212
      %v391 = vunpack.c.l.b16 %v213
      %v392 = vunpack.c.l.b16 %v214
      %v393 = vunpack.c.l.b16 %v215
      %v394 = vunpack.c.l.b16 %v216
      %v395 = vunpack.c.l.b16 %v217
      %v396 = vunpack.c.l.b16 %v218
      %v397 = vunpack.c.l.b16 %v219
      %v398 = vunpack.c.l.b16 %v220
      %v399 = vpack.c.b16 %v391, %v390
      %v400 = vpack.c.b16 %v393, %v392
      %v401 = vpack.c.b16 %v395, %v394
      %v402 = vpack.c.b16 %v397, %v396
      %v403 = vpack.c.b16 %v398, %v398
      %vm408 = vcmask 588800
      %v410 = vsel %vm408, %v349, 0
      %v413 = vsel %vm408, %v350, 0
      %v416 = vsel %vm408, %v351, 0
      %v419 = vsel %vm408, %v352, 0
      %v422 = vsel %vm408, %v353, 0
      %v425 = vsel %vm408, %v354, 0
      %v428 = vsel %vm408, %v355, 0
      %v431 = vsel %vm408, %v356, 0
      %v434 = vsel %vm408, %v357, 0
      %v437 = vsel %vm408, %v358, 0
      %v440 = vsel %vm408, %v359, 0
      %v443 = vsel %vm408, %v360, 0
      %v446 = vsel %vm408, %v361, 0
      %v449 = vsel %vm408, %v362, 0
      %v452 = vsel %vm408, %v363, 0
      %v455 = vsel %vm408, %v364, 0
      %v458 = vsel %vm408, %v365, 0
      %v461 = vsel %vm408, %v366, 0
      %v464 = vsel %vm408, %v367, 0
      %v467 = vsel %vm408, %v368, 0
      %v470 = vsel %vm408, %v369, 0
      %v473 = vsel %vm408, %v370, 0
      %v476 = vsel %vm408, %v371, 0
      %v479 = vsel %vm408, %v372, 0
      %v482 = vsel %vm408, %v373, 0
      %v485 = vsel %vm408, %v374, 0
      %v488 = vsel %vm408, %v375, 0
      %v491 = vsel %vm408, %v376, 0
      %v494 = vsel %vm408, %v377, 0
      %v497 = vsel %vm408, %v378, 0
      %v500 = vsel %vm408, %v379, 0
      %v503 = vsel %vm408, %v380, 0
      %vm505 = vcmask 1043456
      %v507 = vsel %vm505, %v403, 0
      %509 = vmatprep.subr.bf16.mxu0 0
      %510 = vmatpush1.bf16.msra.mxu0 %v399
      %511 = vmatprep.subr.bf16.mxu0 0
      %512 = vmatpush1.bf16.msra.mxu0 %v400
      %513 = vmatprep.subr.bf16.mxu0 0
      %514 = vmatpush1.bf16.msra.mxu0 %v401
      %515 = vmatprep.subr.bf16.mxu0 0
      %516 = vmatpush1.bf16.msra.mxu0 %v402
      %517 = vmatprep.subr.bf16.mxu0 0
      %518 = vmatpush1.bf16.msra.mxu0 %v507
      %519 = vmatprep.subr.bf16.mxu0 0
      %520 = vmatpush1.bf16.msra.mxu0 0
      %521 = vmatprep.subr.bf16.mxu0 0
      %522 = vmatpush1.bf16.msra.mxu0 0
      %523 = vmatprep.subr.bf16.mxu0 0
      %524 = vmatpush1.bf16.msra.mxu0 0
      %525 = vmatprep.subr.bf16.mxu0 0
      %526 = vmatpush1.bf16.msra.mxu0 0
      %527 = vmatprep.subr.bf16.mxu0 0
      %528 = vmatpush1.bf16.msra.mxu0 0
      %529 = vmatprep.subr.bf16.mxu0 0
      %530 = vmatpush1.bf16.msra.mxu0 0
      %531 = vmatprep.subr.bf16.mxu0 0
      %532 = vmatpush1.bf16.msra.mxu0 0
      %533 = vmatprep.subr.bf16.mxu0 0
      %534 = vmatpush1.bf16.msra.mxu0 0
      %535 = vmatprep.subr.bf16.mxu0 0
      %536 = vmatpush1.bf16.msra.mxu0 0
      %537 = vmatprep.subr.bf16.mxu0 0
      %538 = vmatpush1.bf16.msra.mxu0 0
      %539 = vmatprep.subr.bf16.mxu0 0
      %540 = vmatpush1.bf16.msra.mxu0 0
      %541 = vmatprep.mubr.bf16.mxu0 0
      %542 = vmatmul.mubr.bf16.gmra.mrb[0].mxu0 %v410
      %v543 = vpop.f32.mrb[0].mxu0
      %v544 = vadd.f32 0.0, %v543
      %v545 = vpop.f32.mrb[0].mxu0
      %v546 = vpop.f32.mrb[0].mxu0
      %v547 = vadd.f32 0.0, %v546
      %v548 = vpop.f32.mrb[0].mxu0
      %549 = vmatprep.mubr.bf16.mxu0 0
      %550 = vmatmul.mubr.bf16.gmra.mrb[0].mxu0 %v413
      %v551 = vpop.f32.mrb[0].mxu0
      %v552 = vadd.f32 0.0, %v551
      %v553 = vpop.f32.mrb[0].mxu0
      %v554 = vpop.f32.mrb[0].mxu0
      %v555 = vadd.f32 0.0, %v554
      %v556 = vpop.f32.mrb[0].mxu0
      %557 = vmatprep.mubr.bf16.mxu0 0
      %558 = vmatmul.mubr.bf16.gmra.mrb[0].mxu0 %v416
      %v559 = vpop.f32.mrb[0].mxu0
      %v560 = vadd.f32 0.0, %v559
      %v561 = vpop.f32.mrb[0].mxu0
      %v562 = vpop.f32.mrb[0].mxu0
      %v563 = vadd.f32 0.0, %v562
      %v564 = vpop.f32.mrb[0].mxu0
      %565 = vmatprep.mubr.bf16.mxu0 0
      %566 = vmatmul.mubr.bf16.gmra.mrb[0].mxu0 %v419
      %v567 = vpop.f32.mrb[0].mxu0
      %v568 = vadd.f32 0.0, %v567
      %v569 = vpop.f32.mrb[0].mxu0
      %v570 = vpop.f32.mrb[0].mxu0
      %v571 = vadd.f32 0.0, %v570
      %v572 = vpop.f32.mrb[0].mxu0
      %573 = vmatprep.mubr.bf16.mxu0 0
      %574 = vmatmul.mubr.bf16.gmra.mrb[0].mxu0 %v422
      %v575 = vpop.f32.mrb[0].mxu0
      %v576 = vadd.f32 0.0, %v575
      %v577 = vpop.f32.mrb[0].mxu0
      %v578 = vpop.f32.mrb[0].mxu0
      %v579 = vadd.f32 0.0, %v578
      %v580 = vpop.f32.mrb[0].mxu0
      %581 = vmatprep.mubr.bf16.mxu0 0
      %582 = vmatmul.mubr.bf16.gmra.mrb[0].mxu0 %v425
      %v583 = vpop.f32.mrb[0].mxu0
      %v584 = vadd.f32 0.0, %v583
      %v585 = vpop.f32.mrb[0].mxu0
      %v586 = vpop.f32.mrb[0].mxu0
      %v587 = vadd.f32 0.0, %v586
      %v588 = vpop.f32.mrb[0].mxu0
      %589 = vmatprep.mubr.bf16.mxu0 0
      %590 = vmatmul.mubr.bf16.gmra.mrb[0].mxu0 %v428
      %v591 = vpop.f32.mrb[0].mxu0
      %v592 = vadd.f32 0.0, %v591
      %v593 = vpop.f32.mrb[0].mxu0
      %v594 = vpop.f32.mrb[0].mxu0
      %v595 = vadd.f32 0.0, %v594
      %v596 = vpop.f32.mrb[0].mxu0
      %597 = vmatprep.mubr.bf16.mxu0 0
      %598 = vmatmul.mubr.bf16.gmra.mrb[0].mxu0 %v431
      %v599 = vpop.f32.mrb[0].mxu0
      %v600 = vadd.f32 0.0, %v599
      %v601 = vpop.f32.mrb[0].mxu0
      %v602 = vpop.f32.mrb[0].mxu0
      %v603 = vadd.f32 0.0, %v602
      %v604 = vpop.f32.mrb[0].mxu0
      %605 = vmatprep.mubr.bf16.mxu0 0
      %606 = vmatmul.mubr.bf16.gmra.mrb[0].mxu0 %v434
      %v607 = vpop.f32.mrb[0].mxu0
      %v608 = vadd.f32 0.0, %v607
      %v609 = vpop.f32.mrb[0].mxu0
      %v610 = vpop.f32.mrb[0].mxu0
      %v611 = vadd.f32 0.0, %v610
      %v612 = vpop.f32.mrb[0].mxu0
      %613 = vmatprep.mubr.bf16.mxu0 0
      %614 = vmatmul.mubr.bf16.gmra.mrb[0].mxu0 %v437
      %v615 = vpop.f32.mrb[0].mxu0
      %v616 = vadd.f32 0.0, %v615
      %v617 = vpop.f32.mrb[0].mxu0
      %v618 = vpop.f32.mrb[0].mxu0
      %v619 = vadd.f32 0.0, %v618
      %v620 = vpop.f32.mrb[0].mxu0
      %621 = vmatprep.mubr.bf16.mxu0 0
      %622 = vmatmul.mubr.bf16.gmra.mrb[0].mxu0 %v440
      %v623 = vpop.f32.mrb[0].mxu0
      %v624 = vadd.f32 0.0, %v623
      %v625 = vpop.f32.mrb[0].mxu0
      %v626 = vpop.f32.mrb[0].mxu0
      %v627 = vadd.f32 0.0, %v626
      %v628 = vpop.f32.mrb[0].mxu0
      %629 = vmatprep.mubr.bf16.mxu0 0
      %630 = vmatmul.mubr.bf16.gmra.mrb[0].mxu0 %v443
      %v631 = vpop.f32.mrb[0].mxu0
      %v632 = vadd.f32 0.0, %v631
      %v633 = vpop.f32.mrb[0].mxu0
      %v634 = vpop.f32.mrb[0].mxu0
      %v635 = vadd.f32 0.0, %v634
      %v636 = vpop.f32.mrb[0].mxu0
      %637 = vmatprep.mubr.bf16.mxu0 0
      %638 = vmatmul.mubr.bf16.gmra.mrb[0].mxu0 %v446
      %v639 = vpop.f32.mrb[0].mxu0
      %v640 = vadd.f32 0.0, %v639
      %v641 = vpop.f32.mrb[0].mxu0
      %v642 = vpop.f32.mrb[0].mxu0
      %v643 = vadd.f32 0.0, %v642
      %v644 = vpop.f32.mrb[0].mxu0
      %645 = vmatprep.mubr.bf16.mxu0 0
      %646 = vmatmul.mubr.bf16.gmra.mrb[0].mxu0 %v449
      %v647 = vpop.f32.mrb[0].mxu0
      %v648 = vadd.f32 0.0, %v647
      %v649 = vpop.f32.mrb[0].mxu0
      %v650 = vpop.f32.mrb[0].mxu0
      %v651 = vadd.f32 0.0, %v650
      %v652 = vpop.f32.mrb[0].mxu0
      %653 = vmatprep.mubr.bf16.mxu0 0
      %654 = vmatmul.mubr.bf16.gmra.mrb[0].mxu0 %v452
      %v655 = vpop.f32.mrb[0].mxu0
      %v656 = vadd.f32 0.0, %v655
      %v657 = vpop.f32.mrb[0].mxu0
      %v658 = vpop.f32.mrb[0].mxu0
      %v659 = vadd.f32 0.0, %v658
      %v660 = vpop.f32.mrb[0].mxu0
      %661 = vmatprep.mubr.bf16.mxu0 0
      %662 = vmatmul.mubr.bf16.gmra.mrb[0].mxu0 %v455
      %v663 = vpop.f32.mrb[0].mxu0
      %v664 = vadd.f32 0.0, %v663
      %v665 = vpop.f32.mrb[0].mxu0
      %v666 = vpop.f32.mrb[0].mxu0
      %v667 = vadd.f32 0.0, %v666
      %v668 = vpop.f32.mrb[0].mxu0
      %669 = vmatprep.mubr.bf16.mxu0 0
      %670 = vmatmul.mubr.bf16.gmra.mrb[0].mxu0 %v458
      %v671 = vpop.f32.mrb[0].mxu0
      %v672 = vadd.f32 0.0, %v671
      %v673 = vpop.f32.mrb[0].mxu0
      %v674 = vpop.f32.mrb[0].mxu0
      %v675 = vadd.f32 0.0, %v674
      %v676 = vpop.f32.mrb[0].mxu0
      %677 = vmatprep.mubr.bf16.mxu0 0
      %678 = vmatmul.mubr.bf16.gmra.mrb[0].mxu0 %v461
      %v679 = vpop.f32.mrb[0].mxu0
      %v680 = vadd.f32 0.0, %v679
      %v681 = vpop.f32.mrb[0].mxu0
      %v682 = vpop.f32.mrb[0].mxu0
      %v683 = vadd.f32 0.0, %v682
      %v684 = vpop.f32.mrb[0].mxu0
      %685 = vmatprep.mubr.bf16.mxu0 0
      %686 = vmatmul.mubr.bf16.gmra.mrb[0].mxu0 %v464
      %v687 = vpop.f32.mrb[0].mxu0
      %v688 = vadd.f32 0.0, %v687
      %v689 = vpop.f32.mrb[0].mxu0
      %v690 = vpop.f32.mrb[0].mxu0
      %v691 = vadd.f32 0.0, %v690
      %v692 = vpop.f32.mrb[0].mxu0
      %693 = vmatprep.mubr.bf16.mxu0 0
      %694 = vmatmul.mubr.bf16.gmra.mrb[0].mxu0 %v467
      %v695 = vpop.f32.mrb[0].mxu0
      %v696 = vadd.f32 0.0, %v695
      %v697 = vpop.f32.mrb[0].mxu0
      %v698 = vpop.f32.mrb[0].mxu0
      %v699 = vadd.f32 0.0, %v698
      %v700 = vpop.f32.mrb[0].mxu0
      %701 = vmatprep.mubr.bf16.mxu0 0
      %702 = vmatmul.mubr.bf16.gmra.mrb[0].mxu0 %v470
      %v703 = vpop.f32.mrb[0].mxu0
      %v704 = vadd.f32 0.0, %v703
      %v705 = vpop.f32.mrb[0].mxu0
      %v706 = vpop.f32.mrb[0].mxu0
      %v707 = vadd.f32 0.0, %v706
      %v708 = vpop.f32.mrb[0].mxu0
      %709 = vmatprep.mubr.bf16.mxu0 0
      %710 = vmatmul.mubr.bf16.gmra.mrb[0].mxu0 %v473
      %v711 = vpop.f32.mrb[0].mxu0
      %v712 = vadd.f32 0.0, %v711
      %v713 = vpop.f32.mrb[0].mxu0
      %v714 = vpop.f32.mrb[0].mxu0
      %v715 = vadd.f32 0.0, %v714
      %v716 = vpop.f32.mrb[0].mxu0
      %717 = vmatprep.mubr.bf16.mxu0 0
      %718 = vmatmul.mubr.bf16.gmra.mrb[0].mxu0 %v476
      %v719 = vpop.f32.mrb[0].mxu0
      %v720 = vadd.f32 0.0, %v719
      %v721 = vpop.f32.mrb[0].mxu0
      %v722 = vpop.f32.mrb[0].mxu0
      %v723 = vadd.f32 0.0, %v722
      %v724 = vpop.f32.mrb[0].mxu0
      %725 = vmatprep.mubr.bf16.mxu0 0
      %726 = vmatmul.mubr.bf16.gmra.mrb[0].mxu0 %v479
      %v727 = vpop.f32.mrb[0].mxu0
      %v728 = vadd.f32 0.0, %v727
      %v729 = vpop.f32.mrb[0].mxu0
      %v730 = vpop.f32.mrb[0].mxu0
      %v731 = vadd.f32 0.0, %v730
      %v732 = vpop.f32.mrb[0].mxu0
      %733 = vmatprep.mubr.bf16.mxu0 0
      %734 = vmatmul.mubr.bf16.gmra.mrb[0].mxu0 %v482
      %v735 = vpop.f32.mrb[0].mxu0
      %v736 = vadd.f32 0.0, %v735
      %v737 = vpop.f32.mrb[0].mxu0
      %v738 = vpop.f32.mrb[0].mxu0
      %v739 = vadd.f32 0.0, %v738
      %v740 = vpop.f32.mrb[0].mxu0
      %741 = vmatprep.mubr.bf16.mxu0 0
      %742 = vmatmul.mubr.bf16.gmra.mrb[0].mxu0 %v485
      %v743 = vpop.f32.mrb[0].mxu0
      %v744 = vadd.f32 0.0, %v743
      %v745 = vpop.f32.mrb[0].mxu0
      %v746 = vpop.f32.mrb[0].mxu0
      %v747 = vadd.f32 0.0, %v746
      %v748 = vpop.f32.mrb[0].mxu0
      %749 = vmatprep.mubr.bf16.mxu0 0
      %750 = vmatmul.mubr.bf16.gmra.mrb[0].mxu0 %v488
      %v751 = vpop.f32.mrb[0].mxu0
      %v752 = vadd.f32 0.0, %v751
      %v753 = vpop.f32.mrb[0].mxu0
      %v754 = vpop.f32.mrb[0].mxu0
      %v755 = vadd.f32 0.0, %v754
      %v756 = vpop.f32.mrb[0].mxu0
      %757 = vmatprep.mubr.bf16.mxu0 0
      %758 = vmatmul.mubr.bf16.gmra.mrb[0].mxu0 %v491
      %v759 = vpop.f32.mrb[0].mxu0
      %v760 = vadd.f32 0.0, %v759
      %v761 = vpop.f32.mrb[0].mxu0
      %v762 = vpop.f32.mrb[0].mxu0
      %v763 = vadd.f32 0.0, %v762
      %v764 = vpop.f32.mrb[0].mxu0
      %765 = vmatprep.mubr.bf16.mxu0 0
      %766 = vmatmul.mubr.bf16.gmra.mrb[0].mxu0 %v494
      %v767 = vpop.f32.mrb[0].mxu0
      %v768 = vadd.f32 0.0, %v767
      %v769 = vpop.f32.mrb[0].mxu0
      %v770 = vpop.f32.mrb[0].mxu0
      %v771 = vadd.f32 0.0, %v770
      %v772 = vpop.f32.mrb[0].mxu0
      %773 = vmatprep.mubr.bf16.mxu0 0
      %774 = vmatmul.mubr.bf16.gmra.mrb[0].mxu0 %v497
      %v775 = vpop.f32.mrb[0].mxu0
      %v776 = vadd.f32 0.0, %v775
      %v777 = vpop.f32.mrb[0].mxu0
      %v778 = vpop.f32.mrb[0].mxu0
      %v779 = vadd.f32 0.0, %v778
      %v780 = vpop.f32.mrb[0].mxu0
      %781 = vmatprep.mubr.bf16.mxu0 0
      %782 = vmatmul.mubr.bf16.gmra.mrb[0].mxu0 %v500
      %v783 = vpop.f32.mrb[0].mxu0
      %v784 = vadd.f32 0.0, %v783
      %v785 = vpop.f32.mrb[0].mxu0
      %v786 = vpop.f32.mrb[0].mxu0
      %v787 = vadd.f32 0.0, %v786
      %v788 = vpop.f32.mrb[0].mxu0
      %789 = vmatprep.mubr.bf16.mxu0 0
      %790 = vmatmul.mubr.bf16.gmra.mrb[0].mxu0 %v503
      %v791 = vpop.f32.mrb[0].mxu0
      %v792 = vadd.f32 0.0, %v791
      %v793 = vpop.f32.mrb[0].mxu0
      %v794 = vpop.f32.mrb[0].mxu0
      %v795 = vadd.f32 0.0, %v794
      %v796 = vpop.f32.mrb[0].mxu0
      %797 = vdwg.mxu0
      %v798 = vtanh.pop %v544
      %v799 = vtanh.pop %v547
      %v800 = vtanh.pop %v552
      %v801 = vtanh.pop %v555
      %v802 = vtanh.pop %v560
      %v803 = vtanh.pop %v563
      %v804 = vtanh.pop %v568
      %v805 = vtanh.pop %v571
      %v806 = vtanh.pop %v576
      %v807 = vtanh.pop %v579
      %v808 = vtanh.pop %v584
      %v809 = vtanh.pop %v587
      %v810 = vtanh.pop %v592
      %v811 = vtanh.pop %v595
      %v812 = vtanh.pop %v600
      %v813 = vtanh.pop %v603
      %v814 = vtanh.pop %v608
      %v815 = vtanh.pop %v611
      %v816 = vtanh.pop %v616
      %v817 = vtanh.pop %v619
      %v818 = vtanh.pop %v624
      %v819 = vtanh.pop %v627
      %v820 = vtanh.pop %v632
      %v821 = vtanh.pop %v635
      %v822 = vtanh.pop %v640
      %v823 = vtanh.pop %v643
      %v824 = vtanh.pop %v648
      %v825 = vtanh.pop %v651
      %v826 = vtanh.pop %v656
      %v827 = vtanh.pop %v659
      %v828 = vtanh.pop %v664
      %v829 = vtanh.pop %v667
      %v830 = vtanh.pop %v672
      %v831 = vtanh.pop %v675
      %v832 = vtanh.pop %v680
      %v833 = vtanh.pop %v683
      %v834 = vtanh.pop %v688
      %v835 = vtanh.pop %v691
      %v836 = vtanh.pop %v696
      %v837 = vtanh.pop %v699
      %v838 = vtanh.pop %v704
      %v839 = vtanh.pop %v707
      %v840 = vtanh.pop %v712
      %v841 = vtanh.pop %v715
      %v842 = vtanh.pop %v720
      %v843 = vtanh.pop %v723
      %v844 = vtanh.pop %v728
      %v845 = vtanh.pop %v731
      %v846 = vtanh.pop %v736
      %v847 = vtanh.pop %v739
      %v848 = vtanh.pop %v744
      %v849 = vtanh.pop %v747
      %v850 = vtanh.pop %v752
      %v851 = vtanh.pop %v755
      %v852 = vtanh.pop %v760
      %v853 = vtanh.pop %v763
      %v854 = vtanh.pop %v768
      %v855 = vtanh.pop %v771
      %v856 = vtanh.pop %v776
      %v857 = vtanh.pop %v779
      %v858 = vtanh.pop %v784
      %v859 = vtanh.pop %v787
      %v860 = vtanh.pop %v792
      %v861 = vtanh.pop %v795
      %vm862 = vcmask 130048
      %863 = vst.msk [vmem:[%s145] sm:$0xff] %vm862, %v798
      %864 = vst.msk [vmem:[%s145 + $0x8] sm:$0xff] %vm862, %v799
      %865 = vst.msk [vmem:[%s145 + $0x10] sm:$0xff] %vm862, %v800
      %866 = vst.msk [vmem:[%s145 + $0x18] sm:$0xff] %vm862, %v801
      %867 = vst.msk [vmem:[%s145 + $0x20] sm:$0xff] %vm862, %v802
      %868 = vst.msk [vmem:[%s145 + $0x28] sm:$0xff] %vm862, %v803
      %869 = vst.msk [vmem:[%s145 + $0x30] sm:$0xff] %vm862, %v804
      %870 = vst.msk [vmem:[%s145 + $0x38] sm:$0xff] %vm862, %v805
      %871 = vst.msk [vmem:[%s145 + $0x40] sm:$0xff] %vm862, %v806
      %872 = vst.msk [vmem:[%s145 + $0x48] sm:$0xff] %vm862, %v807
      %873 = vst.msk [vmem:[%s145 + $0x50] sm:$0xff] %vm862, %v808
      %874 = vst.msk [vmem:[%s145 + $0x58] sm:$0xff] %vm862, %v809
      %875 = vst.msk [vmem:[%s145 + $0x60] sm:$0xff] %vm862, %v810
      %876 = vst.msk [vmem:[%s145 + $0x68] sm:$0xff] %vm862, %v811
      %877 = vst.msk [vmem:[%s145 + $0x70] sm:$0xff] %vm862, %v812
      %878 = vst.msk [vmem:[%s145 + $0x78] sm:$0xff] %vm862, %v813
      %879 = vst.msk [vmem:[%s145 + $0x80] sm:$0xff] %vm862, %v814
      %880 = vst.msk [vmem:[%s145 + $0x88] sm:$0xff] %vm862, %v815
      %881 = vst.msk [vmem:[%s145 + $0x90] sm:$0xff] %vm862, %v816
      %882 = vst.msk [vmem:[%s145 + $0x98] sm:$0xff] %vm862, %v817
      %883 = vst.msk [vmem:[%s145 + $0xa0] sm:$0xff] %vm862, %v818
      %884 = vst.msk [vmem:[%s145 + $0xa8] sm:$0xff] %vm862, %v819
      %885 = vst.msk [vmem:[%s145 + $0xb0] sm:$0xff] %vm862, %v820
      %886 = vst.msk [vmem:[%s145 + $0xb8] sm:$0xff] %vm862, %v821
      %887 = vst.msk [vmem:[%s145 + $0xc0] sm:$0xff] %vm862, %v822
      %888 = vst.msk [vmem:[%s145 + $0xc8] sm:$0xff] %vm862, %v823
      %889 = vst.msk [vmem:[%s145 + $0xd0] sm:$0xff] %vm862, %v824
      %890 = vst.msk [vmem:[%s145 + $0xd8] sm:$0xff] %vm862, %v825
      %891 = vst.msk [vmem:[%s145 + $0xe0] sm:$0xff] %vm862, %v826
      %892 = vst.msk [vmem:[%s145 + $0xe8] sm:$0xff] %vm862, %v827
      %893 = vst.msk [vmem:[%s145 + $0xf0] sm:$0xff] %vm862, %v828
      %894 = vst.msk [vmem:[%s145 + $0xf8] sm:$0xff] %vm862, %v829
      %895 = vst.msk [vmem:[%s145 + $0x100] sm:$0xff] %vm862, %v830
      %896 = vst.msk [vmem:[%s145 + $0x108] sm:$0xff] %vm862, %v831
      %897 = vst.msk [vmem:[%s145 + $0x110] sm:$0xff] %vm862, %v832
      %898 = vst.msk [vmem:[%s145 + $0x118] sm:$0xff] %vm862, %v833
      %899 = vst.msk [vmem:[%s145 + $0x120] sm:$0xff] %vm862, %v834
      %900 = vst.msk [vmem:[%s145 + $0x128] sm:$0xff] %vm862, %v835
      %901 = vst.msk [vmem:[%s145 + $0x130] sm:$0xff] %vm862, %v836
      %902 = vst.msk [vmem:[%s145 + $0x138] sm:$0xff] %vm862, %v837
      %903 = vst.msk [vmem:[%s145 + $0x140] sm:$0xff] %vm862, %v838
      %904 = vst.msk [vmem:[%s145 + $0x148] sm:$0xff] %vm862, %v839
      %905 = vst.msk [vmem:[%s145 + $0x150] sm:$0xff] %vm862, %v840
      %906 = vst.msk [vmem:[%s145 + $0x158] sm:$0xff] %vm862, %v841
      %907 = vst.msk [vmem:[%s145 + $0x160] sm:$0xff] %vm862, %v842
      %908 = vst.msk [vmem:[%s145 + $0x168] sm:$0xff] %vm862, %v843
      %909 = vst.msk [vmem:[%s145 + $0x170] sm:$0xff] %vm862, %v844
      %910 = vst.msk [vmem:[%s145 + $0x178] sm:$0xff] %vm862, %v845
      %911 = vst.msk [vmem:[%s145 + $0x180] sm:$0xff] %vm862, %v846
      %912 = vst.msk [vmem:[%s145 + $0x188] sm:$0xff] %vm862, %v847
      %913 = vst.msk [vmem:[%s145 + $0x190] sm:$0xff] %vm862, %v848
      %914 = vst.msk [vmem:[%s145 + $0x198] sm:$0xff] %vm862, %v849
      %915 = vst.msk [vmem:[%s145 + $0x1a0] sm:$0xff] %vm862, %v850
      %916 = vst.msk [vmem:[%s145 + $0x1a8] sm:$0xff] %vm862, %v851
      %917 = vst.msk [vmem:[%s145 + $0x1b0] sm:$0xff] %vm862, %v852
      %918 = vst.msk [vmem:[%s145 + $0x1b8] sm:$0xff] %vm862, %v853
      %919 = vst.msk [vmem:[%s145 + $0x1c0] sm:$0xff] %vm862, %v854
      %920 = vst.msk [vmem:[%s145 + $0x1c8] sm:$0xff] %vm862, %v855
      %921 = vst.msk [vmem:[%s145 + $0x1d0] sm:$0xff] %vm862, %v856
      %922 = vst.msk [vmem:[%s145 + $0x1d8] sm:$0xff] %vm862, %v857
      %923 = vst.msk [vmem:[%s145 + $0x1e0] sm:$0xff] %vm862, %v858
      %924 = vst.msk [vmem:[%s145 + $0x1e8] sm:$0xff] %vm862, %v859
      %925 = vst.msk [vmem:[%s145 + $0x1f0] sm:$0xff] %vm862, %v860
      %926 = vst.msk [vmem:[%s145 + $0x1f8] sm:$0xff] %vm862, %v861
      %s927 = smul.u32 64, %s13
      %p928 = scmp.lt.s32.totalorder %s927, 255
      %s929 = scalar_select %p928, %s927, 255
      %s930 = smul.addr %s929, 8
      %s931 = scalar_lea.vmem %s2, %s930
      // Predicated region
      $region29: #{generator_forward.17} parent=27 // pred_check
        %p932 = pneg %p78
      $region30: #{generator_forward.17} parent=27 // pred_check_branch
        %934 = sbr.rel (%p932) target = $region32
      $region31: #{generator_forward.17} parent=27 // pred_region
        %s935 = smul.u32 64, %s13
      $region32: #{generator_forward.17} parent=27 // pred_fallthru
        _
    $region28: #{generator_forward.17} parent=5 // pred_fallthru
      _
    %p936 = scmp.le.s32.totalorder 2, %s8
    // Predicated region
    $region33: #{generator_forward.17} parent=5 // pred_check
      %p937 = pneg %p936
    $region34: #{generator_forward.17} parent=5 // pred_check_branch
      %939 = sbr.rel (%p937) target = $region36
    $region35: #{generator_forward.17} parent=5 // pred_region
      %s940 = ssub.s32 %s8, 2
      // Predicated region
      $region37: #{generator_forward.17} parent=35 // pred_check
        %p941 = pneg %p84
      $region38: #{generator_forward.17} parent=35 // pred_check_branch
        %943 = sbr.rel (%p941) target = $region40
      $region39: #{generator_forward.17} parent=35 // pred_region
        %s944 = smul.u32 64, %s14
        %p945 = scmp.lt.s32.totalorder %s944, 255
        %s946 = scalar_select %p945, %s944, 255
        %s947 = smul.addr %s946, 8
        %s948 = scalar_lea.vmem %s2, %s947
      $region40: #{generator_forward.17} parent=35 // pred_fallthru
        _
    $region36: #{generator_forward.17} parent=5 // pred_fallthru
      _
  $region6: #{generator_forward.17} parent=0 // loop_footer
    %s12 = sadd.s32 1, %s8
  $region7: #{generator_forward.17} parent=0 // loop_footer_branch
    %7 = sbr.rel target = $region3
  $region8: #{generator_forward.17} parent=0 // loop_exit
    _

</llo_original>
